<compile_context>
chip_gen: v7x
topology: tpu7x:2x2x1
jax: 0.10.0
libtpu: 0.0.40
codegen_flags: <defaults>
</compile_context>

<pallas_src>
import jax
import jax.numpy as jnp
from jax import lax
from jax.experimental import pallas as pl
from jax.experimental.pallas import tpu as pltpu

BN_EPS = 1e-5

# Shapes implied by the module: Linear(576, 256) with 64 channels after the
# conv stack and a 2x2 pool => pooled spatial 3x3 => input spatial 8x8.
H = W = 8
C_IN, C1, C2 = 7, 32, 64
HP, WP = (H - 2) // 2, (W - 2) // 2            # 3, 3
FEAT = C2 * HP * WP                            # 576
OUT = 256

_TAP_OFFS = (0, 1, W, W + 1)                   # 2x2 taps, (dh, dw) row-major
S1 = H * W - (W + 1)                           # 55 spatial rows kept after conv1
S2 = S1 - (W + 1)                              # 46 spatial rows kept after conv2
_POOL_OFFS = tuple(2 * ph * W + 2 * pw for ph in range(HP) for pw in range(WP))


def _round_up(n, m):
    return ((n + m - 1) // m) * m


# ----------------------------------------------------------------------------
# Fused Pallas kernel: whole forward for one batch block per grid step.
# Block layout: row = spatial * BB + image  (channels on lanes), so every
# shifted conv tap / pool corner is a sublane-aligned leading-dim slice.
# Rows whose spatial position is outside a stage's valid window hold finite
# garbage that is never read downstream.
# ----------------------------------------------------------------------------
def _encoding_kernel(x_ref, w1_ref, b1_ref, w2_ref, b2_ref, wl_ref, bl_ref,
                     o_ref):
    bb = o_ref.shape[0]
    x = x_ref[...]                                            # (64*bb, 7) bf16

    # Conv2d(7,32,k=2) + ReLU: fuse the 4 taps along K -> one K=28 matmul.
    x_cat = jnp.concatenate(
        [x[t * bb:(t + S1) * bb, :] for t in _TAP_OFFS], axis=1)   # (55*bb, 28)
    a1 = jnp.dot(x_cat, w1_ref[...], preferred_element_type=jnp.float32)
    y1 = jnp.maximum(a1 + b1_ref[...], 0.0).astype(jnp.bfloat16)   # (55*bb, 32)

    # Conv2d(32,64,k=2) + folded BatchNorm2d(eval) + ReLU: one K=128 matmul.
    y1_cat = jnp.concatenate(
        [y1[t * bb:(t + S2) * bb, :] for t in _TAP_OFFS], axis=1)  # (46*bb, 128)
    a2 = jnp.dot(y1_cat, w2_ref[...], preferred_element_type=jnp.float32)
    y2 = jnp.maximum(a2 + b2_ref[...], 0.0).astype(jnp.bfloat16)   # (46*bb, 64)

    # MaxPool2d(2,2) + flatten + Linear(576,256): for each of the 9 pooled
    # positions, max of four dense (bb,64) slabs, then matmul-accumulate
    # against the pre-permuted (64,256) weight slice.
    acc = jnp.zeros((bb, OUT), jnp.float32)
    for k, base in enumerate(_POOL_OFFS):
        c00 = y2[base * bb:(base + 1) * bb, :]
        c01 = y2[(base + 1) * bb:(base + 2) * bb, :]
        c10 = y2[(base + W) * bb:(base + W + 1) * bb, :]
        c11 = y2[(base + W + 1) * bb:(base + W + 2) * bb, :]
        m = jnp.maximum(jnp.maximum(c00, c01), jnp.maximum(c10, c11))
        acc = acc + jnp.dot(m, wl_ref[k], preferred_element_type=jnp.float32)

    o_ref[...] = jnp.maximum(acc + bl_ref[...], 0.0)          # (bb, 256) f32


# ----------------------------------------------------------------------------
# Forward wrapper (jit-able). Only layout plumbing lives outside the kernel.
# ----------------------------------------------------------------------------
def encoding_forward(x_nchw, prep, *, block_b=64):
    """Encoding_Network.forward: (B, 7, 8, 8) f32 -> (B, 256) f32."""
    B = x_nchw.shape[0]
    # Batch block: multiple of 16 (bf16 sublane tiles); default 64 is safe on
    # v5e (16 MiB scoped VMEM) and v7x (64 MiB physical); raise on v6e.
    bb = max(16, min(_round_up(block_b, 16), _round_up(B, 16)))
    bp = _round_up(B, bb)
    g = bp // bb

    # NCHW -> (spatial, batch, cin) bf16, pad batch, pre-block to
    # (g, H*W*bb, cin) with in-block row = spatial*bb + image.
    x = jnp.transpose(x_nchw.astype(jnp.bfloat16), (2, 3, 0, 1))
    x = x.reshape(H * W, B, C_IN)
    if bp != B:
        x = jnp.pad(x, ((0, 0), (0, bp - B), (0, 0)))
    x = x.reshape(H * W, g, bb, C_IN).transpose(1, 0, 2, 3)
    x = x.reshape(g, H * W * bb, C_IN)

    out = pl.pallas_call(
        _encoding_kernel,
        out_shape=jax.ShapeDtypeStruct((bp, OUT), jnp.float32),
        grid=(g,),
        in_specs=[
            pl.BlockSpec((None, H * W * bb, C_IN), lambda i: (i, 0, 0)),
            # Weights/biases: full-array resident blocks, constant index maps.
            pl.BlockSpec((4 * C_IN, C1), lambda i: (0, 0)),
            pl.BlockSpec((1, C1), lambda i: (0, 0)),
            pl.BlockSpec((4 * C1, C2), lambda i: (0, 0)),
            pl.BlockSpec((1, C2), lambda i: (0, 0)),
            pl.BlockSpec((HP * WP, C2, OUT), lambda i: (0, 0, 0)),
            pl.BlockSpec((1, OUT), lambda i: (0, 0)),
        ],
        out_specs=pl.BlockSpec((bb, OUT), lambda i: (i, 0)),
        compiler_params=pltpu.CompilerParams(
            dimension_semantics=("parallel",),
            vmem_limit_bytes=32 * 1024 * 1024,
        ),
    )(x, prep["w1"], prep["b1"], prep["w2"], prep["b2"],
      prep["wl"], prep["bl"])
    return out[:B]


# ----------------------------------------------------------------------------
# One-time parameter preparation (outside jit): fused-K layouts, BN fold, bf16.
# ----------------------------------------------------------------------------
def prepare_params(p):
    # conv1: (32,7,2,2) -> (kh,kw,cin,cout) -> (28, 32)  [tap-major rows]
    w1 = jnp.transpose(p["conv1_w"], (2, 3, 1, 0)).reshape(4 * C_IN, C1)
    b1 = p["conv1_b"].reshape(1, C1)
    # conv2 with BatchNorm2d(eval) folded: (64,32,2,2) -> (128, 64) * scale
    s = p["bn2d_g"] / jnp.sqrt(p["bn2d_rv"] + BN_EPS)
    sh = p["bn2d_b"] - p["bn2d_rm"] * s
    w2 = jnp.transpose(p["conv2_w"], (2, 3, 1, 0)).reshape(4 * C1, C2) * s[None, :]
    b2 = (p["conv2_b"] * s + sh).reshape(1, C2)
    # linear: torch flatten index f = c*9 + (ph*3+pw) -> wl[k, c, o]
    wl = jnp.transpose(p["lin_w"].reshape(OUT, C2, HP * WP), (2, 1, 0))
    bl = p["lin_b"].reshape(1, OUT)
    return dict(w1=w1.astype(jnp.bfloat16), b1=b1.astype(jnp.float32),
                w2=w2.astype(jnp.bfloat16), b2=b2.astype(jnp.float32),
                wl=wl.astype(jnp.bfloat16), bl=bl.astype(jnp.float32))


# ----------------------------------------------------------------------------
# Deterministic synthetic parameters (torch layout) + pure-XLA f32 reference.
# ----------------------------------------------------------------------------
def init_params(key):
    keys = iter(jax.random.split(key, 16))

    def nrm(shape, s=0.05):
        return jax.random.normal(next(keys), shape, jnp.float32) * s

    return dict(
        conv1_w=nrm((C1, C_IN, 2, 2)), conv1_b=nrm((C1,)),
        conv2_w=nrm((C2, C1, 2, 2)), conv2_b=nrm((C2,)),
        bn2d_g=1.0 + nrm((C2,)), bn2d_b=nrm((C2,)),
        bn2d_rm=nrm((C2,)), bn2d_rv=1.0 + jnp.abs(nrm((C2,))),
        lin_w=nrm((OUT, FEAT)), lin_b=nrm((OUT,)),
    )


def reference_forward(x_nchw, p):
    """Pure-XLA float32 reference of the PyTorch module (eval-mode BN)."""
    y = lax.conv_general_dilated(x_nchw, p["conv1_w"], (1, 1), "VALID",
                                 dimension_numbers=("NCHW", "OIHW", "NCHW"))
    y = jnp.maximum(y + p["conv1_b"][None, :, None, None], 0.0)
    y = lax.conv_general_dilated(y, p["conv2_w"], (1, 1), "VALID",
                                 dimension_numbers=("NCHW", "OIHW", "NCHW"))
    y = y + p["conv2_b"][None, :, None, None]
    s = p["bn2d_g"] / jnp.sqrt(p["bn2d_rv"] + BN_EPS)
    y = (y - p["bn2d_rm"][None, :, None, None]) * s[None, :, None, None] \
        + p["bn2d_b"][None, :, None, None]
    y = jnp.maximum(y, 0.0)                                        # (B,64,6,6)
    B = y.shape[0]
    y = jnp.max(y.reshape(B, C2, HP, 2, WP, 2), axis=(3, 5))       # (B,64,3,3)
    feats = y.reshape(B, FEAT)                                     # torch flatten (c,h,w)
    return jnp.maximum(feats @ p["lin_w"].T + p["lin_b"], 0.0)


# ----------------------------------------------------------------------------
# Driver
# ----------------------------------------------------------------------------
if __name__ == "__main__":
    key = jax.random.PRNGKey(0)
    pkey, xkey = jax.random.split(key)
    params = init_params(pkey)
    prep = prepare_params(params)     # one-time parameter prep, outside jit

    B = 4
    x = jax.random.normal(xkey, (B, C_IN, H, W), jnp.float32)

    fwd = jax.jit(encoding_forward)
    out = jax.block_until_ready(fwd(x, prep))
    assert out.shape == (B, OUT) and out.dtype == jnp.float32

    # Sanity check against the f32 XLA reference (bf16 weights => loose tol).
    ref = reference_forward(x, params)
    err = float(jnp.max(jnp.abs(out - ref)))
    assert err < 3e-2, f"kernel/reference mismatch: max abs err = {err}"
    print("KERNEL_OK")
</pallas_src>

<mosaic_0001>
module attributes {stable_mosaic.version = 11 : i64} {
  func.func @_encoding_kernel(%arg0: i32, %arg1: memref<1x1024x7xbf16, #tpu.memory_space<vmem>>, %arg2: memref<28x32xbf16, #tpu.memory_space<vmem>>, %arg3: memref<1x32xf32, #tpu.memory_space<vmem>>, %arg4: memref<128x64xbf16, #tpu.memory_space<vmem>>, %arg5: memref<1x64xf32, #tpu.memory_space<vmem>>, %arg6: memref<9x64x256xbf16, #tpu.memory_space<vmem>>, %arg7: memref<1x256xf32, #tpu.memory_space<vmem>>, %arg8: memref<16x256xf32, #tpu.memory_space<vmem>>) attributes {dimension_semantics = [#tpu.dimension_semantics<parallel>], iteration_bounds = array<i64: 1>, scalar_prefetch = 0 : i64, scratch_operands = 0 : i64, tpu.core_type = #tpu.core_type<tc>, window_params = [{transform_indices = @transform_0, window_bounds = array<i64: 1, 1024, 7>}, {pipeline_mode = #tpu.pipeline_mode<synchronous>, transform_indices = @transform_1, window_bounds = array<i64: 28, 32>}, {pipeline_mode = #tpu.pipeline_mode<synchronous>, transform_indices = @transform_2, window_bounds = array<i64: 1, 32>}, {pipeline_mode = #tpu.pipeline_mode<synchronous>, transform_indices = @transform_3, window_bounds = array<i64: 128, 64>}, {pipeline_mode = #tpu.pipeline_mode<synchronous>, transform_indices = @transform_4, window_bounds = array<i64: 1, 64>}, {pipeline_mode = #tpu.pipeline_mode<synchronous>, transform_indices = @transform_5, window_bounds = array<i64: 9, 64, 256>}, {pipeline_mode = #tpu.pipeline_mode<synchronous>, transform_indices = @transform_6, window_bounds = array<i64: 1, 256>}, {transform_indices = @transform_7, window_bounds = array<i64: 16, 256>}]} {
    %c0 = arith.constant 0 : index
    %c0_0 = arith.constant 0 : index
    %c0_1 = arith.constant 0 : index
    %0 = vector.load %arg1[%c0, %c0_0, %c0_1] : memref<1x1024x7xbf16, #tpu.memory_space<vmem>>, vector<1x1024x7xbf16>
    %1 = vector.shape_cast %0 : vector<1x1024x7xbf16> to vector<1024x7xbf16>
    %2 = vector.extract_strided_slice %1 {offsets = [0, 0], sizes = [880, 7], strides = [1, 1]} : vector<1024x7xbf16> to vector<880x7xbf16>
    %3 = vector.extract_strided_slice %1 {offsets = [16, 0], sizes = [880, 7], strides = [1, 1]} : vector<1024x7xbf16> to vector<880x7xbf16>
    %4 = vector.extract_strided_slice %1 {offsets = [128, 0], sizes = [880, 7], strides = [1, 1]} : vector<1024x7xbf16> to vector<880x7xbf16>
    %5 = vector.extract_strided_slice %1 {offsets = [144, 0], sizes = [880, 7], strides = [1, 1]} : vector<1024x7xbf16> to vector<880x7xbf16>
    %6 = tpu.concatenate %2, %3, %4, %5 in 1 : vector<880x7xbf16>, vector<880x7xbf16>, vector<880x7xbf16>, vector<880x7xbf16> -> vector<880x28xbf16>
    %c0_2 = arith.constant 0 : index
    %c0_3 = arith.constant 0 : index
    %7 = vector.load %arg2[%c0_2, %c0_3] : memref<28x32xbf16, #tpu.memory_space<vmem>>, vector<28x32xbf16>
    %cst = arith.constant dense<0.000000e+00> : vector<880x32xf32>
    %8 = tpu.matmul %6, %7, %cst {dimension_numbers = #tpu.dot_dimension_numbers<[1], [0], [0], [1], [0, 0, 1, 1], [], []>} : vector<880x28xbf16>, vector<28x32xbf16>, vector<880x32xf32> -> vector<880x32xf32>
    %c0_4 = arith.constant 0 : index
    %c0_5 = arith.constant 0 : index
    %9 = vector.load %arg3[%c0_4, %c0_5] : memref<1x32xf32, #tpu.memory_space<vmem>>, vector<1x32xf32>
    %10 = vector.broadcast %9 : vector<1x32xf32> to vector<880x32xf32>
    %11 = arith.addf %8, %10 : vector<880x32xf32>
    %cst_6 = arith.constant 0.000000e+00 : f32
    %12 = vector.broadcast %cst_6 : f32 to vector<880x32xf32>
    %13 = arith.maximumf %11, %12 : vector<880x32xf32>
    %14 = arith.truncf %13 : vector<880x32xf32> to vector<880x32xbf16>
    %15 = vector.extract_strided_slice %14 {offsets = [0, 0], sizes = [736, 32], strides = [1, 1]} : vector<880x32xbf16> to vector<736x32xbf16>
    %16 = vector.extract_strided_slice %14 {offsets = [16, 0], sizes = [736, 32], strides = [1, 1]} : vector<880x32xbf16> to vector<736x32xbf16>
    %17 = vector.extract_strided_slice %14 {offsets = [128, 0], sizes = [736, 32], strides = [1, 1]} : vector<880x32xbf16> to vector<736x32xbf16>
    %18 = vector.extract_strided_slice %14 {offsets = [144, 0], sizes = [736, 32], strides = [1, 1]} : vector<880x32xbf16> to vector<736x32xbf16>
    %19 = tpu.concatenate %15, %16, %17, %18 in 1 : vector<736x32xbf16>, vector<736x32xbf16>, vector<736x32xbf16>, vector<736x32xbf16> -> vector<736x128xbf16>
    %c0_7 = arith.constant 0 : index
    %c0_8 = arith.constant 0 : index
    %20 = vector.load %arg4[%c0_7, %c0_8] : memref<128x64xbf16, #tpu.memory_space<vmem>>, vector<128x64xbf16>
    %cst_9 = arith.constant dense<0.000000e+00> : vector<736x64xf32>
    %21 = tpu.matmul %19, %20, %cst_9 {dimension_numbers = #tpu.dot_dimension_numbers<[1], [0], [0], [1], [0, 0, 1, 1], [], []>} : vector<736x128xbf16>, vector<128x64xbf16>, vector<736x64xf32> -> vector<736x64xf32>
    %c0_10 = arith.constant 0 : index
    %c0_11 = arith.constant 0 : index
    %22 = vector.load %arg5[%c0_10, %c0_11] : memref<1x64xf32, #tpu.memory_space<vmem>>, vector<1x64xf32>
    %23 = vector.broadcast %22 : vector<1x64xf32> to vector<736x64xf32>
    %24 = arith.addf %21, %23 : vector<736x64xf32>
    %cst_12 = arith.constant 0.000000e+00 : f32
    %25 = vector.broadcast %cst_12 : f32 to vector<736x64xf32>
    %26 = arith.maximumf %24, %25 : vector<736x64xf32>
    %27 = arith.truncf %26 : vector<736x64xf32> to vector<736x64xbf16>
    %cst_13 = arith.constant 0.000000e+00 : f32
    %28 = vector.broadcast %cst_13 : f32 to vector<16x256xf32>
    %29 = vector.extract_strided_slice %27 {offsets = [0, 0], sizes = [16, 64], strides = [1, 1]} : vector<736x64xbf16> to vector<16x64xbf16>
    %30 = vector.extract_strided_slice %27 {offsets = [16, 0], sizes = [16, 64], strides = [1, 1]} : vector<736x64xbf16> to vector<16x64xbf16>
    %31 = vector.extract_strided_slice %27 {offsets = [128, 0], sizes = [16, 64], strides = [1, 1]} : vector<736x64xbf16> to vector<16x64xbf16>
    %32 = vector.extract_strided_slice %27 {offsets = [144, 0], sizes = [16, 64], strides = [1, 1]} : vector<736x64xbf16> to vector<16x64xbf16>
    %33 = arith.maximumf %29, %30 : vector<16x64xbf16>
    %34 = arith.maximumf %31, %32 : vector<16x64xbf16>
    %35 = arith.maximumf %33, %34 : vector<16x64xbf16>
    %c0_14 = arith.constant 0 : index
    %c0_15 = arith.constant 0 : index
    %c0_16 = arith.constant 0 : index
    %36 = vector.load %arg6[%c0_14, %c0_15, %c0_16] : memref<9x64x256xbf16, #tpu.memory_space<vmem>>, vector<1x64x256xbf16>
    %37 = vector.shape_cast %36 : vector<1x64x256xbf16> to vector<64x256xbf16>
    %cst_17 = arith.constant dense<0.000000e+00> : vector<16x256xf32>
    %38 = tpu.matmul %35, %37, %cst_17 {dimension_numbers = #tpu.dot_dimension_numbers<[1], [0], [0], [1], [0, 0, 1, 1], [], []>} : vector<16x64xbf16>, vector<64x256xbf16>, vector<16x256xf32> -> vector<16x256xf32>
    %39 = arith.addf %28, %38 : vector<16x256xf32>
    %40 = vector.extract_strided_slice %27 {offsets = [32, 0], sizes = [16, 64], strides = [1, 1]} : vector<736x64xbf16> to vector<16x64xbf16>
    %41 = vector.extract_strided_slice %27 {offsets = [48, 0], sizes = [16, 64], strides = [1, 1]} : vector<736x64xbf16> to vector<16x64xbf16>
    %42 = vector.extract_strided_slice %27 {offsets = [160, 0], sizes = [16, 64], strides = [1, 1]} : vector<736x64xbf16> to vector<16x64xbf16>
    %43 = vector.extract_strided_slice %27 {offsets = [176, 0], sizes = [16, 64], strides = [1, 1]} : vector<736x64xbf16> to vector<16x64xbf16>
    %44 = arith.maximumf %40, %41 : vector<16x64xbf16>
    %45 = arith.maximumf %42, %43 : vector<16x64xbf16>
    %46 = arith.maximumf %44, %45 : vector<16x64xbf16>
    %c1 = arith.constant 1 : index
    %c0_18 = arith.constant 0 : index
    %c0_19 = arith.constant 0 : index
    %47 = vector.load %arg6[%c1, %c0_18, %c0_19] : memref<9x64x256xbf16, #tpu.memory_space<vmem>>, vector<1x64x256xbf16>
    %48 = vector.shape_cast %47 : vector<1x64x256xbf16> to vector<64x256xbf16>
    %cst_20 = arith.constant dense<0.000000e+00> : vector<16x256xf32>
    %49 = tpu.matmul %46, %48, %cst_20 {dimension_numbers = #tpu.dot_dimension_numbers<[1], [0], [0], [1], [0, 0, 1, 1], [], []>} : vector<16x64xbf16>, vector<64x256xbf16>, vector<16x256xf32> -> vector<16x256xf32>
    %50 = arith.addf %39, %49 : vector<16x256xf32>
    %51 = vector.extract_strided_slice %27 {offsets = [64, 0], sizes = [16, 64], strides = [1, 1]} : vector<736x64xbf16> to vector<16x64xbf16>
    %52 = vector.extract_strided_slice %27 {offsets = [80, 0], sizes = [16, 64], strides = [1, 1]} : vector<736x64xbf16> to vector<16x64xbf16>
    %53 = vector.extract_strided_slice %27 {offsets = [192, 0], sizes = [16, 64], strides = [1, 1]} : vector<736x64xbf16> to vector<16x64xbf16>
    %54 = vector.extract_strided_slice %27 {offsets = [208, 0], sizes = [16, 64], strides = [1, 1]} : vector<736x64xbf16> to vector<16x64xbf16>
    %55 = arith.maximumf %51, %52 : vector<16x64xbf16>
    %56 = arith.maximumf %53, %54 : vector<16x64xbf16>
    %57 = arith.maximumf %55, %56 : vector<16x64xbf16>
    %c2 = arith.constant 2 : index
    %c0_21 = arith.constant 0 : index
    %c0_22 = arith.constant 0 : index
    %58 = vector.load %arg6[%c2, %c0_21, %c0_22] : memref<9x64x256xbf16, #tpu.memory_space<vmem>>, vector<1x64x256xbf16>
    %59 = vector.shape_cast %58 : vector<1x64x256xbf16> to vector<64x256xbf16>
    %cst_23 = arith.constant dense<0.000000e+00> : vector<16x256xf32>
    %60 = tpu.matmul %57, %59, %cst_23 {dimension_numbers = #tpu.dot_dimension_numbers<[1], [0], [0], [1], [0, 0, 1, 1], [], []>} : vector<16x64xbf16>, vector<64x256xbf16>, vector<16x256xf32> -> vector<16x256xf32>
    %61 = arith.addf %50, %60 : vector<16x256xf32>
    %62 = vector.extract_strided_slice %27 {offsets = [256, 0], sizes = [16, 64], strides = [1, 1]} : vector<736x64xbf16> to vector<16x64xbf16>
    %63 = vector.extract_strided_slice %27 {offsets = [272, 0], sizes = [16, 64], strides = [1, 1]} : vector<736x64xbf16> to vector<16x64xbf16>
    %64 = vector.extract_strided_slice %27 {offsets = [384, 0], sizes = [16, 64], strides = [1, 1]} : vector<736x64xbf16> to vector<16x64xbf16>
    %65 = vector.extract_strided_slice %27 {offsets = [400, 0], sizes = [16, 64], strides = [1, 1]} : vector<736x64xbf16> to vector<16x64xbf16>
    %66 = arith.maximumf %62, %63 : vector<16x64xbf16>
    %67 = arith.maximumf %64, %65 : vector<16x64xbf16>
    %68 = arith.maximumf %66, %67 : vector<16x64xbf16>
    %c3 = arith.constant 3 : index
    %c0_24 = arith.constant 0 : index
    %c0_25 = arith.constant 0 : index
    %69 = vector.load %arg6[%c3, %c0_24, %c0_25] : memref<9x64x256xbf16, #tpu.memory_space<vmem>>, vector<1x64x256xbf16>
    %70 = vector.shape_cast %69 : vector<1x64x256xbf16> to vector<64x256xbf16>
    %cst_26 = arith.constant dense<0.000000e+00> : vector<16x256xf32>
    %71 = tpu.matmul %68, %70, %cst_26 {dimension_numbers = #tpu.dot_dimension_numbers<[1], [0], [0], [1], [0, 0, 1, 1], [], []>} : vector<16x64xbf16>, vector<64x256xbf16>, vector<16x256xf32> -> vector<16x256xf32>
    %72 = arith.addf %61, %71 : vector<16x256xf32>
    %73 = vector.extract_strided_slice %27 {offsets = [288, 0], sizes = [16, 64], strides = [1, 1]} : vector<736x64xbf16> to vector<16x64xbf16>
    %74 = vector.extract_strided_slice %27 {offsets = [304, 0], sizes = [16, 64], strides = [1, 1]} : vector<736x64xbf16> to vector<16x64xbf16>
    %75 = vector.extract_strided_slice %27 {offsets = [416, 0], sizes = [16, 64], strides = [1, 1]} : vector<736x64xbf16> to vector<16x64xbf16>
    %76 = vector.extract_strided_slice %27 {offsets = [432, 0], sizes = [16, 64], strides = [1, 1]} : vector<736x64xbf16> to vector<16x64xbf16>
    %77 = arith.maximumf %73, %74 : vector<16x64xbf16>
    %78 = arith.maximumf %75, %76 : vector<16x64xbf16>
    %79 = arith.maximumf %77, %78 : vector<16x64xbf16>
    %c4 = arith.constant 4 : index
    %c0_27 = arith.constant 0 : index
    %c0_28 = arith.constant 0 : index
    %80 = vector.load %arg6[%c4, %c0_27, %c0_28] : memref<9x64x256xbf16, #tpu.memory_space<vmem>>, vector<1x64x256xbf16>
    %81 = vector.shape_cast %80 : vector<1x64x256xbf16> to vector<64x256xbf16>
    %cst_29 = arith.constant dense<0.000000e+00> : vector<16x256xf32>
    %82 = tpu.matmul %79, %81, %cst_29 {dimension_numbers = #tpu.dot_dimension_numbers<[1], [0], [0], [1], [0, 0, 1, 1], [], []>} : vector<16x64xbf16>, vector<64x256xbf16>, vector<16x256xf32> -> vector<16x256xf32>
    %83 = arith.addf %72, %82 : vector<16x256xf32>
    %84 = vector.extract_strided_slice %27 {offsets = [320, 0], sizes = [16, 64], strides = [1, 1]} : vector<736x64xbf16> to vector<16x64xbf16>
    %85 = vector.extract_strided_slice %27 {offsets = [336, 0], sizes = [16, 64], strides = [1, 1]} : vector<736x64xbf16> to vector<16x64xbf16>
    %86 = vector.extract_strided_slice %27 {offsets = [448, 0], sizes = [16, 64], strides = [1, 1]} : vector<736x64xbf16> to vector<16x64xbf16>
    %87 = vector.extract_strided_slice %27 {offsets = [464, 0], sizes = [16, 64], strides = [1, 1]} : vector<736x64xbf16> to vector<16x64xbf16>
    %88 = arith.maximumf %84, %85 : vector<16x64xbf16>
    %89 = arith.maximumf %86, %87 : vector<16x64xbf16>
    %90 = arith.maximumf %88, %89 : vector<16x64xbf16>
    %c5 = arith.constant 5 : index
    %c0_30 = arith.constant 0 : index
    %c0_31 = arith.constant 0 : index
    %91 = vector.load %arg6[%c5, %c0_30, %c0_31] : memref<9x64x256xbf16, #tpu.memory_space<vmem>>, vector<1x64x256xbf16>
    %92 = vector.shape_cast %91 : vector<1x64x256xbf16> to vector<64x256xbf16>
    %cst_32 = arith.constant dense<0.000000e+00> : vector<16x256xf32>
    %93 = tpu.matmul %90, %92, %cst_32 {dimension_numbers = #tpu.dot_dimension_numbers<[1], [0], [0], [1], [0, 0, 1, 1], [], []>} : vector<16x64xbf16>, vector<64x256xbf16>, vector<16x256xf32> -> vector<16x256xf32>
    %94 = arith.addf %83, %93 : vector<16x256xf32>
    %95 = vector.extract_strided_slice %27 {offsets = [512, 0], sizes = [16, 64], strides = [1, 1]} : vector<736x64xbf16> to vector<16x64xbf16>
    %96 = vector.extract_strided_slice %27 {offsets = [528, 0], sizes = [16, 64], strides = [1, 1]} : vector<736x64xbf16> to vector<16x64xbf16>
    %97 = vector.extract_strided_slice %27 {offsets = [640, 0], sizes = [16, 64], strides = [1, 1]} : vector<736x64xbf16> to vector<16x64xbf16>
    %98 = vector.extract_strided_slice %27 {offsets = [656, 0], sizes = [16, 64], strides = [1, 1]} : vector<736x64xbf16> to vector<16x64xbf16>
    %99 = arith.maximumf %95, %96 : vector<16x64xbf16>
    %100 = arith.maximumf %97, %98 : vector<16x64xbf16>
    %101 = arith.maximumf %99, %100 : vector<16x64xbf16>
    %c6 = arith.constant 6 : index
    %c0_33 = arith.constant 0 : index
    %c0_34 = arith.constant 0 : index
    %102 = vector.load %arg6[%c6, %c0_33, %c0_34] : memref<9x64x256xbf16, #tpu.memory_space<vmem>>, vector<1x64x256xbf16>
    %103 = vector.shape_cast %102 : vector<1x64x256xbf16> to vector<64x256xbf16>
    %cst_35 = arith.constant dense<0.000000e+00> : vector<16x256xf32>
    %104 = tpu.matmul %101, %103, %cst_35 {dimension_numbers = #tpu.dot_dimension_numbers<[1], [0], [0], [1], [0, 0, 1, 1], [], []>} : vector<16x64xbf16>, vector<64x256xbf16>, vector<16x256xf32> -> vector<16x256xf32>
    %105 = arith.addf %94, %104 : vector<16x256xf32>
    %106 = vector.extract_strided_slice %27 {offsets = [544, 0], sizes = [16, 64], strides = [1, 1]} : vector<736x64xbf16> to vector<16x64xbf16>
    %107 = vector.extract_strided_slice %27 {offsets = [560, 0], sizes = [16, 64], strides = [1, 1]} : vector<736x64xbf16> to vector<16x64xbf16>
    %108 = vector.extract_strided_slice %27 {offsets = [672, 0], sizes = [16, 64], strides = [1, 1]} : vector<736x64xbf16> to vector<16x64xbf16>
    %109 = vector.extract_strided_slice %27 {offsets = [688, 0], sizes = [16, 64], strides = [1, 1]} : vector<736x64xbf16> to vector<16x64xbf16>
    %110 = arith.maximumf %106, %107 : vector<16x64xbf16>
    %111 = arith.maximumf %108, %109 : vector<16x64xbf16>
    %112 = arith.maximumf %110, %111 : vector<16x64xbf16>
    %c7 = arith.constant 7 : index
    %c0_36 = arith.constant 0 : index
    %c0_37 = arith.constant 0 : index
    %113 = vector.load %arg6[%c7, %c0_36, %c0_37] : memref<9x64x256xbf16, #tpu.memory_space<vmem>>, vector<1x64x256xbf16>
    %114 = vector.shape_cast %113 : vector<1x64x256xbf16> to vector<64x256xbf16>
    %cst_38 = arith.constant dense<0.000000e+00> : vector<16x256xf32>
    %115 = tpu.matmul %112, %114, %cst_38 {dimension_numbers = #tpu.dot_dimension_numbers<[1], [0], [0], [1], [0, 0, 1, 1], [], []>} : vector<16x64xbf16>, vector<64x256xbf16>, vector<16x256xf32> -> vector<16x256xf32>
    %116 = arith.addf %105, %115 : vector<16x256xf32>
    %117 = vector.extract_strided_slice %27 {offsets = [576, 0], sizes = [16, 64], strides = [1, 1]} : vector<736x64xbf16> to vector<16x64xbf16>
    %118 = vector.extract_strided_slice %27 {offsets = [592, 0], sizes = [16, 64], strides = [1, 1]} : vector<736x64xbf16> to vector<16x64xbf16>
    %119 = vector.extract_strided_slice %27 {offsets = [704, 0], sizes = [16, 64], strides = [1, 1]} : vector<736x64xbf16> to vector<16x64xbf16>
    %120 = vector.extract_strided_slice %27 {offsets = [720, 0], sizes = [16, 64], strides = [1, 1]} : vector<736x64xbf16> to vector<16x64xbf16>
    %121 = arith.maximumf %117, %118 : vector<16x64xbf16>
    %122 = arith.maximumf %119, %120 : vector<16x64xbf16>
    %123 = arith.maximumf %121, %122 : vector<16x64xbf16>
    %c8 = arith.constant 8 : index
    %c0_39 = arith.constant 0 : index
    %c0_40 = arith.constant 0 : index
    %124 = vector.load %arg6[%c8, %c0_39, %c0_40] : memref<9x64x256xbf16, #tpu.memory_space<vmem>>, vector<1x64x256xbf16>
    %125 = vector.shape_cast %124 : vector<1x64x256xbf16> to vector<64x256xbf16>
    %cst_41 = arith.constant dense<0.000000e+00> : vector<16x256xf32>
    %126 = tpu.matmul %123, %125, %cst_41 {dimension_numbers = #tpu.dot_dimension_numbers<[1], [0], [0], [1], [0, 0, 1, 1], [], []>} : vector<16x64xbf16>, vector<64x256xbf16>, vector<16x256xf32> -> vector<16x256xf32>
    %127 = arith.addf %116, %126 : vector<16x256xf32>
    %c0_42 = arith.constant 0 : index
    %c0_43 = arith.constant 0 : index
    %128 = vector.load %arg7[%c0_42, %c0_43] : memref<1x256xf32, #tpu.memory_space<vmem>>, vector<1x256xf32>
    %129 = vector.broadcast %128 : vector<1x256xf32> to vector<16x256xf32>
    %130 = arith.addf %127, %129 : vector<16x256xf32>
    %cst_44 = arith.constant 0.000000e+00 : f32
    %131 = vector.broadcast %cst_44 : f32 to vector<16x256xf32>
    %132 = arith.maximumf %130, %131 : vector<16x256xf32>
    %c0_45 = arith.constant 0 : index
    %c0_46 = arith.constant 0 : index
    %133 = vector.load %arg8[%c0_45, %c0_46] : memref<16x256xf32, #tpu.memory_space<vmem>>, vector<16x256xf32>
    tpu.vector_store %arg8[%c0_45, %c0_46], %132 {strides = array<i32>} : memref<16x256xf32, #tpu.memory_space<vmem>>, vector<16x256xf32>,
    return
  }
  func.func @transform_0(%arg0: i32) -> (i32, i32, i32) {
    %c0_i32 = arith.constant 0 : i32
    %c0_i32_0 = arith.constant 0 : i32
    %c0_i32_1 = arith.constant 0 : i32
    return %arg0, %c0_i32, %c0_i32_0 : i32, i32, i32
  }
  func.func @transform_1(%arg0: i32) -> (i32, i32) {
    %c0_i32 = arith.constant 0 : i32
    %c0_i32_0 = arith.constant 0 : i32
    %c0_i32_1 = arith.constant 0 : i32
    return %c0_i32, %c0_i32_0 : i32, i32
  }
  func.func @transform_2(%arg0: i32) -> (i32, i32) {
    %c0_i32 = arith.constant 0 : i32
    %c0_i32_0 = arith.constant 0 : i32
    %c0_i32_1 = arith.constant 0 : i32
    return %c0_i32, %c0_i32_0 : i32, i32
  }
  func.func @transform_3(%arg0: i32) -> (i32, i32) {
    %c0_i32 = arith.constant 0 : i32
    %c0_i32_0 = arith.constant 0 : i32
    %c0_i32_1 = arith.constant 0 : i32
    return %c0_i32, %c0_i32_0 : i32, i32
  }
  func.func @transform_4(%arg0: i32) -> (i32, i32) {
    %c0_i32 = arith.constant 0 : i32
    %c0_i32_0 = arith.constant 0 : i32
    %c0_i32_1 = arith.constant 0 : i32
    return %c0_i32, %c0_i32_0 : i32, i32
  }
  func.func @transform_5(%arg0: i32) -> (i32, i32, i32) {
    %c0_i32 = arith.constant 0 : i32
    %c0_i32_0 = arith.constant 0 : i32
    %c0_i32_1 = arith.constant 0 : i32
    %c0_i32_2 = arith.constant 0 : i32
    return %c0_i32, %c0_i32_0, %c0_i32_1 : i32, i32, i32
  }
  func.func @transform_6(%arg0: i32) -> (i32, i32) {
    %c0_i32 = arith.constant 0 : i32
    %c0_i32_0 = arith.constant 0 : i32
    %c0_i32_1 = arith.constant 0 : i32
    return %c0_i32, %c0_i32_0 : i32, i32
  }
  func.func @transform_7(%arg0: i32) -> (i32, i32) {
    %c0_i32 = arith.constant 0 : i32
    %c0_i32_0 = arith.constant 0 : i32
    return %arg0, %c0_i32 : i32, i32
  }
}

</mosaic_0001>

<llo_original>
// kernel: encoding_forward.1
$region0: #{encoding_forward.1}
  #allocation0 [shape = 'u32[]', space=smem, size = 0x4, offset = 0x4, fixed_abs, tag = 'smem constant byte address 0x4 - core index']
  #allocation1 [shape = 'u32[144,128]{1,0:T(1,128)}', space=vmem, size = 0x12000, scoped, tag = 'internal scratch']
  %s0 = inlined_call_operand.vmem [shape: bf16[1,1024,7], index: 0, kind: input, shape index: {}]
  %s1 = inlined_call_operand.vmem [shape: bf16[28,32], index: 1, kind: input, shape index: {}]
  %s2 = inlined_call_operand.vmem [shape: f32[1,32], index: 2, kind: input, shape index: {}]
  %s3 = inlined_call_operand.vmem [shape: bf16[128,64], index: 3, kind: input, shape index: {}]
  %s4 = inlined_call_operand.vmem [shape: f32[1,64], index: 4, kind: input, shape index: {}]
  %s5 = inlined_call_operand.vmem [shape: bf16[9,64,256], index: 5, kind: input, shape index: {}]
  %s6 = inlined_call_operand.vmem [shape: f32[1,256], index: 6, kind: input, shape index: {}]
  %s7 = inlined_call_operand.vmem [shape: f32[16,256], index: 7, kind: output, shape index: {}]
  %s8 = sld [smem:[#allocation0]]
  $region38: #{encoding_forward.1} parent=0
    _
  %s10 = ssub.s32 1, %s8
  %s11 = scalar_select 0, %s10, %s8
  // Predicated region
  $region2: #{encoding_forward.1} parent=0 // pred_check
    _
  $region3: #{encoding_forward.1} parent=0 // pred_check_branch
    %13 = sbr.rel (0) target = $region5
  $region4: #{encoding_forward.1} parent=0 // pred_region
    _
  $region5: #{encoding_forward.1} parent=0 // pred_fallthru
    _
  // Predicated region
  $region6: #{encoding_forward.1} parent=0 // pred_check
    _
  $region7: #{encoding_forward.1} parent=0 // pred_check_branch
    %15 = sbr.rel (0) target = $region9
  $region8: #{encoding_forward.1} parent=0 // pred_region
    _
  $region9: #{encoding_forward.1} parent=0 // pred_fallthru
    _
  // Predicated region
  $region10: #{encoding_forward.1} parent=0 // pred_check
    _
  $region11: #{encoding_forward.1} parent=0 // pred_check_branch
    %17 = sbr.rel (0) target = $region13
  $region12: #{encoding_forward.1} parent=0 // pred_region
    _
  $region13: #{encoding_forward.1} parent=0 // pred_fallthru
    _
  // Predicated region
  $region14: #{encoding_forward.1} parent=0 // pred_check
    _
  $region15: #{encoding_forward.1} parent=0 // pred_check_branch
    %19 = sbr.rel (0) target = $region17
  $region16: #{encoding_forward.1} parent=0 // pred_region
    _
  $region17: #{encoding_forward.1} parent=0 // pred_fallthru
    _
  // Predicated region
  $region18: #{encoding_forward.1} parent=0 // pred_check
    _
  $region19: #{encoding_forward.1} parent=0 // pred_check_branch
    %21 = sbr.rel (0) target = $region21
  $region20: #{encoding_forward.1} parent=0 // pred_region
    _
  $region21: #{encoding_forward.1} parent=0 // pred_fallthru
    _
  // Predicated region
  $region22: #{encoding_forward.1} parent=0 // pred_check
    _
  $region23: #{encoding_forward.1} parent=0 // pred_check_branch
    %23 = sbr.rel (0) target = $region25
  $region24: #{encoding_forward.1} parent=0 // pred_region
    _
  $region25: #{encoding_forward.1} parent=0 // pred_fallthru
    _
  // Predicated region
  $region26: #{encoding_forward.1} parent=0 // pred_check
    _
  $region27: #{encoding_forward.1} parent=0 // pred_check_branch
    %25 = sbr.rel (0) target = $region29
  $region28: #{encoding_forward.1} parent=0 // pred_region
    _
  $region29: #{encoding_forward.1} parent=0 // pred_fallthru
    _
  %v27 = vld [vmem:[%s0] sm:$0xf]
  %v28 = vld [vmem:[%s0 + $0x4] sm:$0xf]
  %v29 = vld [vmem:[%s0 + $0x8] sm:$0xf]
  %v30 = vld [vmem:[%s0 + $0xc] sm:$0xf]
  %v31 = vld [vmem:[%s0 + $0x10] sm:$0xf]
  %v32 = vld [vmem:[%s0 + $0x14] sm:$0xf]
  %v33 = vld [vmem:[%s0 + $0x18] sm:$0xf]
  %v34 = vld [vmem:[%s0 + $0x1c] sm:$0xf]
  %v35 = vld [vmem:[%s0 + $0x20] sm:$0xf]
  %v36 = vld [vmem:[%s0 + $0x24] sm:$0xf]
  %v37 = vld [vmem:[%s0 + $0x28] sm:$0xf]
  %v38 = vld [vmem:[%s0 + $0x2c] sm:$0xf]
  %v39 = vld [vmem:[%s0 + $0x30] sm:$0xf]
  %v40 = vld [vmem:[%s0 + $0x34] sm:$0xf]
  %v41 = vld [vmem:[%s0 + $0x38] sm:$0xf]
  %v42 = vld [vmem:[%s0 + $0x3c] sm:$0xf]
  %v43 = vld [vmem:[%s0 + $0x40] sm:$0xf]
  %v44 = vld [vmem:[%s0 + $0x44] sm:$0xf]
  %v45 = vld [vmem:[%s0 + $0x48] sm:$0xf]
  %v46 = vld [vmem:[%s0 + $0x4c] sm:$0xf]
  %v47 = vld [vmem:[%s0 + $0x50] sm:$0xf]
  %v48 = vld [vmem:[%s0 + $0x54] sm:$0xf]
  %v49 = vld [vmem:[%s0 + $0x58] sm:$0xf]
  %v50 = vld [vmem:[%s0 + $0x5c] sm:$0xf]
  %v51 = vld [vmem:[%s0 + $0x60] sm:$0xf]
  %v52 = vld [vmem:[%s0 + $0x64] sm:$0xf]
  %v53 = vld [vmem:[%s0 + $0x68] sm:$0xf]
  %v54 = vld [vmem:[%s0 + $0x6c] sm:$0xf]
  %v55 = vld [vmem:[%s0 + $0x70] sm:$0xf]
  %v56 = vld [vmem:[%s0 + $0x74] sm:$0xf]
  %v57 = vld [vmem:[%s0 + $0x78] sm:$0xf]
  %v58 = vld [vmem:[%s0 + $0x7c] sm:$0xf]
  %v59 = vld [vmem:[%s0 + $0x80] sm:$0xf]
  %v60 = vld [vmem:[%s0 + $0x84] sm:$0xf]
  %v61 = vld [vmem:[%s0 + $0x88] sm:$0xf]
  %v62 = vld [vmem:[%s0 + $0x8c] sm:$0xf]
  %v63 = vld [vmem:[%s0 + $0x90] sm:$0xf]
  %v64 = vld [vmem:[%s0 + $0x94] sm:$0xf]
  %v65 = vld [vmem:[%s0 + $0x98] sm:$0xf]
  %v66 = vld [vmem:[%s0 + $0x9c] sm:$0xf]
  %v67 = vld [vmem:[%s0 + $0xa0] sm:$0xf]
  %v68 = vld [vmem:[%s0 + $0xa4] sm:$0xf]
  %v69 = vld [vmem:[%s0 + $0xa8] sm:$0xf]
  %v70 = vld [vmem:[%s0 + $0xac] sm:$0xf]
  %v71 = vld [vmem:[%s0 + $0xb0] sm:$0xf]
  %v72 = vld [vmem:[%s0 + $0xb4] sm:$0xf]
  %v73 = vld [vmem:[%s0 + $0xb8] sm:$0xf]
  %v74 = vld [vmem:[%s0 + $0xbc] sm:$0xf]
  %v75 = vld [vmem:[%s0 + $0xc0] sm:$0xf]
  %v76 = vld [vmem:[%s0 + $0xc4] sm:$0xf]
  %v77 = vld [vmem:[%s0 + $0xc8] sm:$0xf]
  %v78 = vld [vmem:[%s0 + $0xcc] sm:$0xf]
  %v79 = vld [vmem:[%s0 + $0xd0] sm:$0xf]
  %v80 = vld [vmem:[%s0 + $0xd4] sm:$0xf]
  %v81 = vld [vmem:[%s0 + $0xd8] sm:$0xf]
  %v82 = vld [vmem:[%s0 + $0xdc] sm:$0xf]
  %v83 = vld [vmem:[%s0 + $0xe0] sm:$0xf]
  %v84 = vld [vmem:[%s0 + $0xe4] sm:$0xf]
  %v85 = vld [vmem:[%s0 + $0xe8] sm:$0xf]
  %v86 = vld [vmem:[%s0 + $0xec] sm:$0xf]
  %v87 = vld [vmem:[%s0 + $0xf0] sm:$0xf]
  %v88 = vld [vmem:[%s0 + $0xf4] sm:$0xf]
  %v89 = vld [vmem:[%s0 + $0xf8] sm:$0xf]
  %v90 = vld [vmem:[%s0 + $0xfc] sm:$0xf]
  %v91 = vld [vmem:[%s0 + $0x100] sm:$0xf]
  %v92 = vld [vmem:[%s0 + $0x104] sm:$0xf]
  %v93 = vld [vmem:[%s0 + $0x108] sm:$0xf]
  %v94 = vld [vmem:[%s0 + $0x10c] sm:$0xf]
  %v95 = vld [vmem:[%s0 + $0x110] sm:$0xf]
  %v96 = vld [vmem:[%s0 + $0x114] sm:$0xf]
  %v97 = vld [vmem:[%s0 + $0x118] sm:$0xf]
  %v98 = vld [vmem:[%s0 + $0x11c] sm:$0xf]
  %v99 = vld [vmem:[%s0 + $0x120] sm:$0xf]
  %v100 = vld [vmem:[%s0 + $0x124] sm:$0xf]
  %v101 = vld [vmem:[%s0 + $0x128] sm:$0xf]
  %v102 = vld [vmem:[%s0 + $0x12c] sm:$0xf]
  %v103 = vld [vmem:[%s0 + $0x130] sm:$0xf]
  %v104 = vld [vmem:[%s0 + $0x134] sm:$0xf]
  %v105 = vld [vmem:[%s0 + $0x138] sm:$0xf]
  %v106 = vld [vmem:[%s0 + $0x13c] sm:$0xf]
  %v107 = vld [vmem:[%s0 + $0x140] sm:$0xf]
  %v108 = vld [vmem:[%s0 + $0x144] sm:$0xf]
  %v109 = vld [vmem:[%s0 + $0x148] sm:$0xf]
  %v110 = vld [vmem:[%s0 + $0x14c] sm:$0xf]
  %v111 = vld [vmem:[%s0 + $0x150] sm:$0xf]
  %v112 = vld [vmem:[%s0 + $0x154] sm:$0xf]
  %v113 = vld [vmem:[%s0 + $0x158] sm:$0xf]
  %v114 = vld [vmem:[%s0 + $0x15c] sm:$0xf]
  %v115 = vld [vmem:[%s0 + $0x160] sm:$0xf]
  %v116 = vld [vmem:[%s0 + $0x164] sm:$0xf]
  %v117 = vld [vmem:[%s0 + $0x168] sm:$0xf]
  %v118 = vld [vmem:[%s0 + $0x16c] sm:$0xf]
  %v119 = vld [vmem:[%s0 + $0x170] sm:$0xf]
  %v120 = vld [vmem:[%s0 + $0x174] sm:$0xf]
  %v121 = vld [vmem:[%s0 + $0x178] sm:$0xf]
  %v122 = vld [vmem:[%s0 + $0x17c] sm:$0xf]
  %v123 = vld [vmem:[%s0 + $0x180] sm:$0xf]
  %v124 = vld [vmem:[%s0 + $0x184] sm:$0xf]
  %v125 = vld [vmem:[%s0 + $0x188] sm:$0xf]
  %v126 = vld [vmem:[%s0 + $0x18c] sm:$0xf]
  %v127 = vld [vmem:[%s0 + $0x190] sm:$0xf]
  %v128 = vld [vmem:[%s0 + $0x194] sm:$0xf]
  %v129 = vld [vmem:[%s0 + $0x198] sm:$0xf]
  %v130 = vld [vmem:[%s0 + $0x19c] sm:$0xf]
  %v131 = vld [vmem:[%s0 + $0x1a0] sm:$0xf]
  %v132 = vld [vmem:[%s0 + $0x1a4] sm:$0xf]
  %v133 = vld [vmem:[%s0 + $0x1a8] sm:$0xf]
  %v134 = vld [vmem:[%s0 + $0x1ac] sm:$0xf]
  %v135 = vld [vmem:[%s0 + $0x1b0] sm:$0xf]
  %v136 = vld [vmem:[%s0 + $0x1b4] sm:$0xf]
  %v137 = vld [vmem:[%s0 + $0x1b8] sm:$0xf]
  %v138 = vld [vmem:[%s0 + $0x1bc] sm:$0xf]
  %v139 = vld [vmem:[%s0 + $0x1c0] sm:$0xf]
  %v140 = vld [vmem:[%s0 + $0x1c4] sm:$0xf]
  %v141 = vld [vmem:[%s0 + $0x1c8] sm:$0xf]
  %v142 = vld [vmem:[%s0 + $0x1cc] sm:$0xf]
  %v143 = vld [vmem:[%s0 + $0x1d0] sm:$0xf]
  %v144 = vld [vmem:[%s0 + $0x1d4] sm:$0xf]
  %v145 = vld [vmem:[%s0 + $0x1d8] sm:$0xf]
  %v146 = vld [vmem:[%s0 + $0x1dc] sm:$0xf]
  %v147 = vld [vmem:[%s0 + $0x1e0] sm:$0xf]
  %v148 = vld [vmem:[%s0 + $0x1e4] sm:$0xf]
  %v149 = vld [vmem:[%s0 + $0x1e8] sm:$0xf]
  %v150 = vld [vmem:[%s0 + $0x1ec] sm:$0xf]
  %v151 = vld [vmem:[%s0 + $0x1f0] sm:$0xf]
  %v152 = vld [vmem:[%s0 + $0x1f4] sm:$0xf]
  %v153 = vld [vmem:[%s0 + $0x1f8] sm:$0xf]
  %v154 = vld [vmem:[%s0 + $0x1fc] sm:$0xf]
  %v265 = vunpack.c.l.b16 %v27
  %v266 = vunpack.c.l.b16 %v28
  %v267 = vunpack.c.l.b16 %v29
  %v268 = vunpack.c.l.b16 %v30
  %v269 = vunpack.c.l.b16 %v31
  %v270 = vunpack.c.l.b16 %v32
  %v271 = vunpack.c.l.b16 %v33
  %v272 = vunpack.c.l.b16 %v34
  %v273 = vunpack.c.l.b16 %v35
  %v274 = vunpack.c.l.b16 %v36
  %v275 = vunpack.c.l.b16 %v37
  %v276 = vunpack.c.l.b16 %v38
  %v277 = vunpack.c.l.b16 %v39
  %v278 = vunpack.c.l.b16 %v40
  %v279 = vunpack.c.l.b16 %v41
  %v280 = vunpack.c.l.b16 %v42
  %v281 = vunpack.c.l.b16 %v43
  %v282 = vunpack.c.l.b16 %v44
  %v283 = vunpack.c.l.b16 %v45
  %v284 = vunpack.c.l.b16 %v46
  %v285 = vunpack.c.l.b16 %v47
  %v286 = vunpack.c.l.b16 %v48
  %v287 = vunpack.c.l.b16 %v49
  %v288 = vunpack.c.l.b16 %v50
  %v289 = vunpack.c.l.b16 %v51
  %v290 = vunpack.c.l.b16 %v52
  %v291 = vunpack.c.l.b16 %v53
  %v292 = vunpack.c.l.b16 %v54
  %v293 = vunpack.c.l.b16 %v55
  %v294 = vunpack.c.l.b16 %v56
  %v295 = vunpack.c.l.b16 %v57
  %v296 = vunpack.c.l.b16 %v58
  %v297 = vunpack.c.l.b16 %v59
  %v298 = vunpack.c.l.b16 %v60
  %v299 = vunpack.c.l.b16 %v61
  %v300 = vunpack.c.l.b16 %v62
  %v301 = vunpack.c.l.b16 %v63
  %v302 = vunpack.c.l.b16 %v64
  %v303 = vunpack.c.l.b16 %v65
  %v304 = vunpack.c.l.b16 %v66
  %v305 = vunpack.c.l.b16 %v67
  %v306 = vunpack.c.l.b16 %v68
  %v307 = vunpack.c.l.b16 %v69
  %v308 = vunpack.c.l.b16 %v70
  %v309 = vunpack.c.l.b16 %v71
  %v310 = vunpack.c.l.b16 %v72
  %v311 = vunpack.c.l.b16 %v73
  %v312 = vunpack.c.l.b16 %v74
  %v313 = vunpack.c.l.b16 %v75
  %v314 = vunpack.c.l.b16 %v76
  %v315 = vunpack.c.l.b16 %v77
  %v316 = vunpack.c.l.b16 %v78
  %v317 = vunpack.c.l.b16 %v79
  %v318 = vunpack.c.l.b16 %v80
  %v319 = vunpack.c.l.b16 %v81
  %v320 = vunpack.c.l.b16 %v82
  %v321 = vunpack.c.l.b16 %v83
  %v322 = vunpack.c.l.b16 %v84
  %v323 = vunpack.c.l.b16 %v85
  %v324 = vunpack.c.l.b16 %v86
  %v325 = vunpack.c.l.b16 %v87
  %v326 = vunpack.c.l.b16 %v88
  %v327 = vunpack.c.l.b16 %v89
  %v328 = vunpack.c.l.b16 %v90
  %v329 = vunpack.c.l.b16 %v91
  %v330 = vunpack.c.l.b16 %v92
  %v331 = vunpack.c.l.b16 %v93
  %v332 = vunpack.c.l.b16 %v94
  %v333 = vunpack.c.l.b16 %v95
  %v334 = vunpack.c.l.b16 %v96
  %v335 = vunpack.c.l.b16 %v97
  %v336 = vunpack.c.l.b16 %v98
  %v337 = vunpack.c.l.b16 %v99
  %v338 = vunpack.c.l.b16 %v100
  %v339 = vunpack.c.l.b16 %v101
  %v340 = vunpack.c.l.b16 %v102
  %v341 = vunpack.c.l.b16 %v103
  %v342 = vunpack.c.l.b16 %v104
  %v343 = vunpack.c.l.b16 %v105
  %v344 = vunpack.c.l.b16 %v106
  %v345 = vunpack.c.l.b16 %v107
  %v346 = vunpack.c.l.b16 %v108
  %v347 = vunpack.c.l.b16 %v109
  %v348 = vunpack.c.l.b16 %v110
  %v349 = vunpack.c.l.b16 %v111
  %v350 = vunpack.c.l.b16 %v112
  %v351 = vunpack.c.l.b16 %v113
  %v352 = vunpack.c.l.b16 %v114
  %v353 = vunpack.c.l.b16 %v115
  %v354 = vunpack.c.l.b16 %v116
  %v355 = vunpack.c.l.b16 %v117
  %v356 = vunpack.c.l.b16 %v118
  %v357 = vunpack.c.l.b16 %v119
  %v358 = vunpack.c.l.b16 %v120
  %v359 = vunpack.c.l.b16 %v121
  %v360 = vunpack.c.l.b16 %v122
  %v361 = vunpack.c.l.b16 %v123
  %v362 = vunpack.c.l.b16 %v124
  %v363 = vunpack.c.l.b16 %v125
  %v364 = vunpack.c.l.b16 %v126
  %v365 = vunpack.c.l.b16 %v127
  %v366 = vunpack.c.l.b16 %v128
  %v367 = vunpack.c.l.b16 %v129
  %v368 = vunpack.c.l.b16 %v130
  %v369 = vunpack.c.l.b16 %v131
  %v370 = vunpack.c.l.b16 %v132
  %v371 = vunpack.c.l.b16 %v133
  %v372 = vunpack.c.l.b16 %v134
  %v373 = vunpack.c.l.b16 %v135
  %v374 = vunpack.c.l.b16 %v136
  %v375 = vpack.c.b16 %v266, %v265
  %v376 = vpack.c.b16 %v268, %v267
  %v377 = vpack.c.b16 %v270, %v269
  %v378 = vpack.c.b16 %v272, %v271
  %v379 = vpack.c.b16 %v274, %v273
  %v380 = vpack.c.b16 %v276, %v275
  %v381 = vpack.c.b16 %v278, %v277
  %v382 = vpack.c.b16 %v280, %v279
  %v383 = vpack.c.b16 %v282, %v281
  %v384 = vpack.c.b16 %v284, %v283
  %v385 = vpack.c.b16 %v286, %v285
  %v386 = vpack.c.b16 %v288, %v287
  %v387 = vpack.c.b16 %v290, %v289
  %v388 = vpack.c.b16 %v292, %v291
  %v389 = vpack.c.b16 %v294, %v293
  %v390 = vpack.c.b16 %v296, %v295
  %v391 = vpack.c.b16 %v298, %v297
  %v392 = vpack.c.b16 %v300, %v299
  %v393 = vpack.c.b16 %v302, %v301
  %v394 = vpack.c.b16 %v304, %v303
  %v395 = vpack.c.b16 %v306, %v305
  %v396 = vpack.c.b16 %v308, %v307
  %v397 = vpack.c.b16 %v310, %v309
  %v398 = vpack.c.b16 %v312, %v311
  %v399 = vpack.c.b16 %v314, %v313
  %v400 = vpack.c.b16 %v316, %v315
  %v401 = vpack.c.b16 %v318, %v317
  %v402 = vpack.c.b16 %v320, %v319
  %v403 = vpack.c.b16 %v322, %v321
  %v404 = vpack.c.b16 %v324, %v323
  %v405 = vpack.c.b16 %v326, %v325
  %v406 = vpack.c.b16 %v328, %v327
  %v407 = vpack.c.b16 %v330, %v329
  %v408 = vpack.c.b16 %v332, %v331
  %v409 = vpack.c.b16 %v334, %v333
  %v410 = vpack.c.b16 %v336, %v335
  %v411 = vpack.c.b16 %v338, %v337
  %v412 = vpack.c.b16 %v340, %v339
  %v413 = vpack.c.b16 %v342, %v341
  %v414 = vpack.c.b16 %v344, %v343
  %v415 = vpack.c.b16 %v346, %v345
  %v416 = vpack.c.b16 %v348, %v347
  %v417 = vpack.c.b16 %v350, %v349
  %v418 = vpack.c.b16 %v352, %v351
  %v419 = vpack.c.b16 %v354, %v353
  %v420 = vpack.c.b16 %v356, %v355
  %v421 = vpack.c.b16 %v358, %v357
  %v422 = vpack.c.b16 %v360, %v359
  %v423 = vpack.c.b16 %v362, %v361
  %v424 = vpack.c.b16 %v364, %v363
  %v425 = vpack.c.b16 %v366, %v365
  %v426 = vpack.c.b16 %v368, %v367
  %v427 = vpack.c.b16 %v370, %v369
  %v428 = vpack.c.b16 %v372, %v371
  %v429 = vpack.c.b16 %v374, %v373
  %v432 = vunpack.c.l.b16 %v137
  %v433 = vunpack.c.l.b16 %v138
  %v434 = vpack.c.b16 %v433, %v432
  %435 = vrot.lane.b32.xlu0 %v376, 7
  %v436 = vpop.permute.xlu0 %435
  %437 = vrot.lane.b32.xlu0 %v377, 7
  %v438 = vpop.permute.xlu0 %437
  %439 = vrot.lane.b32.xlu0 %v378, 7
  %v440 = vpop.permute.xlu0 %439
  %441 = vrot.lane.b32.xlu0 %v379, 7
  %v442 = vpop.permute.xlu0 %441
  %443 = vrot.lane.b32.xlu0 %v380, 7
  %v444 = vpop.permute.xlu0 %443
  %445 = vrot.lane.b32.xlu0 %v381, 7
  %v446 = vpop.permute.xlu0 %445
  %447 = vrot.lane.b32.xlu0 %v382, 7
  %v448 = vpop.permute.xlu0 %447
  %449 = vrot.lane.b32.xlu0 %v383, 7
  %v450 = vpop.permute.xlu0 %449
  %451 = vrot.lane.b32.xlu0 %v384, 7
  %v452 = vpop.permute.xlu0 %451
  %453 = vrot.lane.b32.xlu0 %v385, 7
  %v454 = vpop.permute.xlu0 %453
  %455 = vrot.lane.b32.xlu0 %v386, 7
  %v456 = vpop.permute.xlu0 %455
  %457 = vrot.lane.b32.xlu0 %v387, 7
  %v458 = vpop.permute.xlu0 %457
  %459 = vrot.lane.b32.xlu0 %v388, 7
  %v460 = vpop.permute.xlu0 %459
  %461 = vrot.lane.b32.xlu0 %v389, 7
  %v462 = vpop.permute.xlu0 %461
  %463 = vrot.lane.b32.xlu0 %v390, 7
  %v464 = vpop.permute.xlu0 %463
  %465 = vrot.lane.b32.xlu0 %v391, 7
  %v466 = vpop.permute.xlu0 %465
  %467 = vrot.lane.b32.xlu0 %v392, 7
  %v468 = vpop.permute.xlu0 %467
  %469 = vrot.lane.b32.xlu0 %v393, 7
  %v470 = vpop.permute.xlu0 %469
  %471 = vrot.lane.b32.xlu0 %v394, 7
  %v472 = vpop.permute.xlu0 %471
  %473 = vrot.lane.b32.xlu0 %v395, 7
  %v474 = vpop.permute.xlu0 %473
  %475 = vrot.lane.b32.xlu0 %v396, 7
  %v476 = vpop.permute.xlu0 %475
  %477 = vrot.lane.b32.xlu0 %v397, 7
  %v478 = vpop.permute.xlu0 %477
  %479 = vrot.lane.b32.xlu0 %v398, 7
  %v480 = vpop.permute.xlu0 %479
  %481 = vrot.lane.b32.xlu0 %v399, 7
  %v482 = vpop.permute.xlu0 %481
  %483 = vrot.lane.b32.xlu0 %v400, 7
  %v484 = vpop.permute.xlu0 %483
  %485 = vrot.lane.b32.xlu0 %v401, 7
  %v486 = vpop.permute.xlu0 %485
  %487 = vrot.lane.b32.xlu0 %v402, 7
  %v488 = vpop.permute.xlu0 %487
  %489 = vrot.lane.b32.xlu0 %v403, 7
  %v490 = vpop.permute.xlu0 %489
  %491 = vrot.lane.b32.xlu0 %v404, 7
  %v492 = vpop.permute.xlu0 %491
  %493 = vrot.lane.b32.xlu0 %v405, 7
  %v494 = vpop.permute.xlu0 %493
  %495 = vrot.lane.b32.xlu0 %v406, 7
  %v496 = vpop.permute.xlu0 %495
  %497 = vrot.lane.b32.xlu0 %v407, 7
  %v498 = vpop.permute.xlu0 %497
  %499 = vrot.lane.b32.xlu0 %v408, 7
  %v500 = vpop.permute.xlu0 %499
  %501 = vrot.lane.b32.xlu0 %v409, 7
  %v502 = vpop.permute.xlu0 %501
  %503 = vrot.lane.b32.xlu0 %v410, 7
  %v504 = vpop.permute.xlu0 %503
  %505 = vrot.lane.b32.xlu0 %v411, 7
  %v506 = vpop.permute.xlu0 %505
  %507 = vrot.lane.b32.xlu0 %v412, 7
  %v508 = vpop.permute.xlu0 %507
  %509 = vrot.lane.b32.xlu0 %v413, 7
  %v510 = vpop.permute.xlu0 %509
  %511 = vrot.lane.b32.xlu0 %v414, 7
  %v512 = vpop.permute.xlu0 %511
  %513 = vrot.lane.b32.xlu0 %v415, 7
  %v514 = vpop.permute.xlu0 %513
  %515 = vrot.lane.b32.xlu0 %v416, 7
  %v516 = vpop.permute.xlu0 %515
  %517 = vrot.lane.b32.xlu0 %v417, 7
  %v518 = vpop.permute.xlu0 %517
  %519 = vrot.lane.b32.xlu0 %v418, 7
  %v520 = vpop.permute.xlu0 %519
  %521 = vrot.lane.b32.xlu0 %v419, 7
  %v522 = vpop.permute.xlu0 %521
  %523 = vrot.lane.b32.xlu0 %v420, 7
  %v524 = vpop.permute.xlu0 %523
  %525 = vrot.lane.b32.xlu0 %v421, 7
  %v526 = vpop.permute.xlu0 %525
  %527 = vrot.lane.b32.xlu0 %v422, 7
  %v528 = vpop.permute.xlu0 %527
  %529 = vrot.lane.b32.xlu0 %v423, 7
  %v530 = vpop.permute.xlu0 %529
  %531 = vrot.lane.b32.xlu0 %v424, 7
  %v532 = vpop.permute.xlu0 %531
  %533 = vrot.lane.b32.xlu0 %v425, 7
  %v534 = vpop.permute.xlu0 %533
  %535 = vrot.lane.b32.xlu0 %v426, 7
  %v536 = vpop.permute.xlu0 %535
  %537 = vrot.lane.b32.xlu0 %v427, 7
  %v538 = vpop.permute.xlu0 %537
  %539 = vrot.lane.b32.xlu0 %v428, 7
  %v540 = vpop.permute.xlu0 %539
  %541 = vrot.lane.b32.xlu0 %v429, 7
  %v542 = vpop.permute.xlu0 %541
  %543 = vrot.lane.b32.xlu0 %v434, 7
  %v544 = vpop.permute.xlu0 %543
  %v559 = vunpack.c.l.b16 %v139
  %v560 = vunpack.c.l.b16 %v140
  %v561 = vunpack.c.l.b16 %v141
  %v562 = vunpack.c.l.b16 %v142
  %v563 = vunpack.c.l.b16 %v143
  %v564 = vunpack.c.l.b16 %v144
  %v565 = vunpack.c.l.b16 %v145
  %v566 = vunpack.c.l.b16 %v146
  %v567 = vunpack.c.l.b16 %v147
  %v568 = vunpack.c.l.b16 %v148
  %v569 = vunpack.c.l.b16 %v149
  %v570 = vunpack.c.l.b16 %v150
  %v571 = vunpack.c.l.b16 %v151
  %v572 = vunpack.c.l.b16 %v152
  %v573 = vpack.c.b16 %v560, %v559
  %v574 = vpack.c.b16 %v562, %v561
  %v575 = vpack.c.b16 %v564, %v563
  %v576 = vpack.c.b16 %v566, %v565
  %v577 = vpack.c.b16 %v568, %v567
  %v578 = vpack.c.b16 %v570, %v569
  %v579 = vpack.c.b16 %v572, %v571
  %580 = vrot.lane.b32.xlu0 %v383, 14
  %v581 = vpop.permute.xlu0 %580
  %582 = vrot.lane.b32.xlu0 %v384, 14
  %v583 = vpop.permute.xlu0 %582
  %584 = vrot.lane.b32.xlu0 %v385, 14
  %v585 = vpop.permute.xlu0 %584
  %586 = vrot.lane.b32.xlu0 %v386, 14
  %v587 = vpop.permute.xlu0 %586
  %588 = vrot.lane.b32.xlu0 %v387, 14
  %v589 = vpop.permute.xlu0 %588
  %590 = vrot.lane.b32.xlu0 %v388, 14
  %v591 = vpop.permute.xlu0 %590
  %592 = vrot.lane.b32.xlu0 %v389, 14
  %v593 = vpop.permute.xlu0 %592
  %594 = vrot.lane.b32.xlu0 %v390, 14
  %v595 = vpop.permute.xlu0 %594
  %596 = vrot.lane.b32.xlu0 %v391, 14
  %v597 = vpop.permute.xlu0 %596
  %598 = vrot.lane.b32.xlu0 %v392, 14
  %v599 = vpop.permute.xlu0 %598
  %600 = vrot.lane.b32.xlu0 %v393, 14
  %v601 = vpop.permute.xlu0 %600
  %602 = vrot.lane.b32.xlu0 %v394, 14
  %v603 = vpop.permute.xlu0 %602
  %604 = vrot.lane.b32.xlu0 %v395, 14
  %v605 = vpop.permute.xlu0 %604
  %606 = vrot.lane.b32.xlu0 %v396, 14
  %v607 = vpop.permute.xlu0 %606
  %608 = vrot.lane.b32.xlu0 %v397, 14
  %v609 = vpop.permute.xlu0 %608
  %610 = vrot.lane.b32.xlu0 %v398, 14
  %v611 = vpop.permute.xlu0 %610
  %612 = vrot.lane.b32.xlu0 %v399, 14
  %v613 = vpop.permute.xlu0 %612
  %614 = vrot.lane.b32.xlu0 %v400, 14
  %v615 = vpop.permute.xlu0 %614
  %616 = vrot.lane.b32.xlu0 %v401, 14
  %v617 = vpop.permute.xlu0 %616
  %618 = vrot.lane.b32.xlu0 %v402, 14
  %v619 = vpop.permute.xlu0 %618
  %620 = vrot.lane.b32.xlu0 %v403, 14
  %v621 = vpop.permute.xlu0 %620
  %622 = vrot.lane.b32.xlu0 %v404, 14
  %v623 = vpop.permute.xlu0 %622
  %624 = vrot.lane.b32.xlu0 %v405, 14
  %v625 = vpop.permute.xlu0 %624
  %626 = vrot.lane.b32.xlu0 %v406, 14
  %v627 = vpop.permute.xlu0 %626
  %628 = vrot.lane.b32.xlu0 %v407, 14
  %v629 = vpop.permute.xlu0 %628
  %630 = vrot.lane.b32.xlu0 %v408, 14
  %v631 = vpop.permute.xlu0 %630
  %632 = vrot.lane.b32.xlu0 %v409, 14
  %v633 = vpop.permute.xlu0 %632
  %634 = vrot.lane.b32.xlu0 %v410, 14
  %v635 = vpop.permute.xlu0 %634
  %636 = vrot.lane.b32.xlu0 %v411, 14
  %v637 = vpop.permute.xlu0 %636
  %638 = vrot.lane.b32.xlu0 %v412, 14
  %v639 = vpop.permute.xlu0 %638
  %640 = vrot.lane.b32.xlu0 %v413, 14
  %v641 = vpop.permute.xlu0 %640
  %642 = vrot.lane.b32.xlu0 %v414, 14
  %v643 = vpop.permute.xlu0 %642
  %644 = vrot.lane.b32.xlu0 %v415, 14
  %v645 = vpop.permute.xlu0 %644
  %646 = vrot.lane.b32.xlu0 %v416, 14
  %v647 = vpop.permute.xlu0 %646
  %648 = vrot.lane.b32.xlu0 %v417, 14
  %v649 = vpop.permute.xlu0 %648
  %650 = vrot.lane.b32.xlu0 %v418, 14
  %v651 = vpop.permute.xlu0 %650
  %652 = vrot.lane.b32.xlu0 %v419, 14
  %v653 = vpop.permute.xlu0 %652
  %654 = vrot.lane.b32.xlu0 %v420, 14
  %v655 = vpop.permute.xlu0 %654
  %656 = vrot.lane.b32.xlu0 %v421, 14
  %v657 = vpop.permute.xlu0 %656
  %658 = vrot.lane.b32.xlu0 %v422, 14
  %v659 = vpop.permute.xlu0 %658
  %660 = vrot.lane.b32.xlu0 %v423, 14
  %v661 = vpop.permute.xlu0 %660
  %662 = vrot.lane.b32.xlu0 %v424, 14
  %v663 = vpop.permute.xlu0 %662
  %664 = vrot.lane.b32.xlu0 %v425, 14
  %v665 = vpop.permute.xlu0 %664
  %666 = vrot.lane.b32.xlu0 %v426, 14
  %v667 = vpop.permute.xlu0 %666
  %668 = vrot.lane.b32.xlu0 %v427, 14
  %v669 = vpop.permute.xlu0 %668
  %670 = vrot.lane.b32.xlu0 %v428, 14
  %v671 = vpop.permute.xlu0 %670
  %672 = vrot.lane.b32.xlu0 %v429, 14
  %v673 = vpop.permute.xlu0 %672
  %674 = vrot.lane.b32.xlu0 %v434, 14
  %v675 = vpop.permute.xlu0 %674
  %676 = vrot.lane.b32.xlu0 %v573, 14
  %v677 = vpop.permute.xlu0 %676
  %678 = vrot.lane.b32.xlu0 %v574, 14
  %v679 = vpop.permute.xlu0 %678
  %680 = vrot.lane.b32.xlu0 %v575, 14
  %v681 = vpop.permute.xlu0 %680
  %682 = vrot.lane.b32.xlu0 %v576, 14
  %v683 = vpop.permute.xlu0 %682
  %684 = vrot.lane.b32.xlu0 %v577, 14
  %v685 = vpop.permute.xlu0 %684
  %686 = vrot.lane.b32.xlu0 %v578, 14
  %v687 = vpop.permute.xlu0 %686
  %688 = vrot.lane.b32.xlu0 %v579, 14
  %v689 = vpop.permute.xlu0 %688
  %v692 = vunpack.c.l.b16 %v153
  %v693 = vunpack.c.l.b16 %v154
  %v694 = vpack.c.b16 %v693, %v692
  %695 = vrot.lane.b32.xlu0 %v384, 21
  %v696 = vpop.permute.xlu0 %695
  %697 = vrot.lane.b32.xlu0 %v385, 21
  %v698 = vpop.permute.xlu0 %697
  %699 = vrot.lane.b32.xlu0 %v386, 21
  %v700 = vpop.permute.xlu0 %699
  %701 = vrot.lane.b32.xlu0 %v387, 21
  %v702 = vpop.permute.xlu0 %701
  %703 = vrot.lane.b32.xlu0 %v388, 21
  %v704 = vpop.permute.xlu0 %703
  %705 = vrot.lane.b32.xlu0 %v389, 21
  %v706 = vpop.permute.xlu0 %705
  %707 = vrot.lane.b32.xlu0 %v390, 21
  %v708 = vpop.permute.xlu0 %707
  %709 = vrot.lane.b32.xlu0 %v391, 21
  %v710 = vpop.permute.xlu0 %709
  %711 = vrot.lane.b32.xlu0 %v392, 21
  %v712 = vpop.permute.xlu0 %711
  %713 = vrot.lane.b32.xlu0 %v393, 21
  %v714 = vpop.permute.xlu0 %713
  %715 = vrot.lane.b32.xlu0 %v394, 21
  %v716 = vpop.permute.xlu0 %715
  %717 = vrot.lane.b32.xlu0 %v395, 21
  %v718 = vpop.permute.xlu0 %717
  %719 = vrot.lane.b32.xlu0 %v396, 21
  %v720 = vpop.permute.xlu0 %719
  %721 = vrot.lane.b32.xlu0 %v397, 21
  %v722 = vpop.permute.xlu0 %721
  %723 = vrot.lane.b32.xlu0 %v398, 21
  %v724 = vpop.permute.xlu0 %723
  %725 = vrot.lane.b32.xlu0 %v399, 21
  %v726 = vpop.permute.xlu0 %725
  %727 = vrot.lane.b32.xlu0 %v400, 21
  %v728 = vpop.permute.xlu0 %727
  %729 = vrot.lane.b32.xlu0 %v401, 21
  %v730 = vpop.permute.xlu0 %729
  %731 = vrot.lane.b32.xlu0 %v402, 21
  %v732 = vpop.permute.xlu0 %731
  %733 = vrot.lane.b32.xlu0 %v403, 21
  %v734 = vpop.permute.xlu0 %733
  %735 = vrot.lane.b32.xlu0 %v404, 21
  %v736 = vpop.permute.xlu0 %735
  %737 = vrot.lane.b32.xlu0 %v405, 21
  %v738 = vpop.permute.xlu0 %737
  %739 = vrot.lane.b32.xlu0 %v406, 21
  %v740 = vpop.permute.xlu0 %739
  %741 = vrot.lane.b32.xlu0 %v407, 21
  %v742 = vpop.permute.xlu0 %741
  %743 = vrot.lane.b32.xlu0 %v408, 21
  %v744 = vpop.permute.xlu0 %743
  %745 = vrot.lane.b32.xlu0 %v409, 21
  %v746 = vpop.permute.xlu0 %745
  %747 = vrot.lane.b32.xlu0 %v410, 21
  %v748 = vpop.permute.xlu0 %747
  %749 = vrot.lane.b32.xlu0 %v411, 21
  %v750 = vpop.permute.xlu0 %749
  %751 = vrot.lane.b32.xlu0 %v412, 21
  %v752 = vpop.permute.xlu0 %751
  %753 = vrot.lane.b32.xlu0 %v413, 21
  %v754 = vpop.permute.xlu0 %753
  %755 = vrot.lane.b32.xlu0 %v414, 21
  %v756 = vpop.permute.xlu0 %755
  %757 = vrot.lane.b32.xlu0 %v415, 21
  %v758 = vpop.permute.xlu0 %757
  %759 = vrot.lane.b32.xlu0 %v416, 21
  %v760 = vpop.permute.xlu0 %759
  %761 = vrot.lane.b32.xlu0 %v417, 21
  %v762 = vpop.permute.xlu0 %761
  %763 = vrot.lane.b32.xlu0 %v418, 21
  %v764 = vpop.permute.xlu0 %763
  %765 = vrot.lane.b32.xlu0 %v419, 21
  %v766 = vpop.permute.xlu0 %765
  %767 = vrot.lane.b32.xlu0 %v420, 21
  %v768 = vpop.permute.xlu0 %767
  %769 = vrot.lane.b32.xlu0 %v421, 21
  %v770 = vpop.permute.xlu0 %769
  %771 = vrot.lane.b32.xlu0 %v422, 21
  %v772 = vpop.permute.xlu0 %771
  %773 = vrot.lane.b32.xlu0 %v423, 21
  %v774 = vpop.permute.xlu0 %773
  %775 = vrot.lane.b32.xlu0 %v424, 21
  %v776 = vpop.permute.xlu0 %775
  %777 = vrot.lane.b32.xlu0 %v425, 21
  %v778 = vpop.permute.xlu0 %777
  %779 = vrot.lane.b32.xlu0 %v426, 21
  %v780 = vpop.permute.xlu0 %779
  %781 = vrot.lane.b32.xlu0 %v427, 21
  %v782 = vpop.permute.xlu0 %781
  %783 = vrot.lane.b32.xlu0 %v428, 21
  %v784 = vpop.permute.xlu0 %783
  %785 = vrot.lane.b32.xlu0 %v429, 21
  %v786 = vpop.permute.xlu0 %785
  %787 = vrot.lane.b32.xlu0 %v434, 21
  %v788 = vpop.permute.xlu0 %787
  %789 = vrot.lane.b32.xlu0 %v573, 21
  %v790 = vpop.permute.xlu0 %789
  %791 = vrot.lane.b32.xlu0 %v574, 21
  %v792 = vpop.permute.xlu0 %791
  %793 = vrot.lane.b32.xlu0 %v575, 21
  %v794 = vpop.permute.xlu0 %793
  %795 = vrot.lane.b32.xlu0 %v576, 21
  %v796 = vpop.permute.xlu0 %795
  %797 = vrot.lane.b32.xlu0 %v577, 21
  %v798 = vpop.permute.xlu0 %797
  %799 = vrot.lane.b32.xlu0 %v578, 21
  %v800 = vpop.permute.xlu0 %799
  %801 = vrot.lane.b32.xlu0 %v579, 21
  %v802 = vpop.permute.xlu0 %801
  %803 = vrot.lane.b32.xlu0 %v694, 21
  %v804 = vpop.permute.xlu0 %803
  %vm805 = vcmask 56320
  %v808 = vsel %vm805, %v375, %v436
  %v811 = vsel %vm805, %v376, %v438
  %v814 = vsel %vm805, %v377, %v440
  %v817 = vsel %vm805, %v378, %v442
  %v820 = vsel %vm805, %v379, %v444
  %v823 = vsel %vm805, %v380, %v446
  %v826 = vsel %vm805, %v381, %v448
  %v829 = vsel %vm805, %v382, %v450
  %v832 = vsel %vm805, %v383, %v452
  %v835 = vsel %vm805, %v384, %v454
  %v838 = vsel %vm805, %v385, %v456
  %v841 = vsel %vm805, %v386, %v458
  %v844 = vsel %vm805, %v387, %v460
  %v847 = vsel %vm805, %v388, %v462
  %v850 = vsel %vm805, %v389, %v464
  %v853 = vsel %vm805, %v390, %v466
  %v856 = vsel %vm805, %v391, %v468
  %v859 = vsel %vm805, %v392, %v470
  %v862 = vsel %vm805, %v393, %v472
  %v865 = vsel %vm805, %v394, %v474
  %v868 = vsel %vm805, %v395, %v476
  %v871 = vsel %vm805, %v396, %v478
  %v874 = vsel %vm805, %v397, %v480
  %v877 = vsel %vm805, %v398, %v482
  %v880 = vsel %vm805, %v399, %v484
  %v883 = vsel %vm805, %v400, %v486
  %v886 = vsel %vm805, %v401, %v488
  %v889 = vsel %vm805, %v402, %v490
  %v892 = vsel %vm805, %v403, %v492
  %v895 = vsel %vm805, %v404, %v494
  %v898 = vsel %vm805, %v405, %v496
  %v901 = vsel %vm805, %v406, %v498
  %v904 = vsel %vm805, %v407, %v500
  %v907 = vsel %vm805, %v408, %v502
  %v910 = vsel %vm805, %v409, %v504
  %v913 = vsel %vm805, %v410, %v506
  %v916 = vsel %vm805, %v411, %v508
  %v919 = vsel %vm805, %v412, %v510
  %v922 = vsel %vm805, %v413, %v512
  %v925 = vsel %vm805, %v414, %v514
  %v928 = vsel %vm805, %v415, %v516
  %v931 = vsel %vm805, %v416, %v518
  %v934 = vsel %vm805, %v417, %v520
  %v937 = vsel %vm805, %v418, %v522
  %v940 = vsel %vm805, %v419, %v524
  %v943 = vsel %vm805, %v420, %v526
  %v946 = vsel %vm805, %v421, %v528
  %v949 = vsel %vm805, %v422, %v530
  %v952 = vsel %vm805, %v423, %v532
  %v955 = vsel %vm805, %v424, %v534
  %v958 = vsel %vm805, %v425, %v536
  %v961 = vsel %vm805, %v426, %v538
  %v964 = vsel %vm805, %v427, %v540
  %v967 = vsel %vm805, %v428, %v542
  %v970 = vsel %vm805, %v429, %v544
  %vm971 = vcmask 113664
  %v973 = vsel %vm971, %v808, %v581
  %v975 = vsel %vm971, %v811, %v583
  %v977 = vsel %vm971, %v814, %v585
  %v979 = vsel %vm971, %v817, %v587
  %v981 = vsel %vm971, %v820, %v589
  %v983 = vsel %vm971, %v823, %v591
  %v985 = vsel %vm971, %v826, %v593
  %v987 = vsel %vm971, %v829, %v595
  %v989 = vsel %vm971, %v832, %v597
  %v991 = vsel %vm971, %v835, %v599
  %v993 = vsel %vm971, %v838, %v601
  %v995 = vsel %vm971, %v841, %v603
  %v997 = vsel %vm971, %v844, %v605
  %v999 = vsel %vm971, %v847, %v607
  %v1001 = vsel %vm971, %v850, %v609
  %v1003 = vsel %vm971, %v853, %v611
  %v1005 = vsel %vm971, %v856, %v613
  %v1007 = vsel %vm971, %v859, %v615
  %v1009 = vsel %vm971, %v862, %v617
  %v1011 = vsel %vm971, %v865, %v619
  %v1013 = vsel %vm971, %v868, %v621
  %v1015 = vsel %vm971, %v871, %v623
  %v1017 = vsel %vm971, %v874, %v625
  %v1019 = vsel %vm971, %v877, %v627
  %v1021 = vsel %vm971, %v880, %v629
  %v1023 = vsel %vm971, %v883, %v631
  %v1025 = vsel %vm971, %v886, %v633
  %v1027 = vsel %vm971, %v889, %v635
  %v1029 = vsel %vm971, %v892, %v637
  %v1031 = vsel %vm971, %v895, %v639
  %v1033 = vsel %vm971, %v898, %v641
  %v1035 = vsel %vm971, %v901, %v643
  %v1037 = vsel %vm971, %v904, %v645
  %v1039 = vsel %vm971, %v907, %v647
  %v1041 = vsel %vm971, %v910, %v649
  %v1043 = vsel %vm971, %v913, %v651
  %v1045 = vsel %vm971, %v916, %v653
  %v1047 = vsel %vm971, %v919, %v655
  %v1049 = vsel %vm971, %v922, %v657
  %v1051 = vsel %vm971, %v925, %v659
  %v1053 = vsel %vm971, %v928, %v661
  %v1055 = vsel %vm971, %v931, %v663
  %v1057 = vsel %vm971, %v934, %v665
  %v1059 = vsel %vm971, %v937, %v667
  %v1061 = vsel %vm971, %v940, %v669
  %v1063 = vsel %vm971, %v943, %v671
  %v1065 = vsel %vm971, %v946, %v673
  %v1067 = vsel %vm971, %v949, %v675
  %v1069 = vsel %vm971, %v952, %v677
  %v1071 = vsel %vm971, %v955, %v679
  %v1073 = vsel %vm971, %v958, %v681
  %v1075 = vsel %vm971, %v961, %v683
  %v1077 = vsel %vm971, %v964, %v685
  %v1079 = vsel %vm971, %v967, %v687
  %v1081 = vsel %vm971, %v970, %v689
  %vm1082 = vcmask 171008
  %v1084 = vsel %vm1082, %v973, %v696
  %v1086 = vsel %vm1082, %v975, %v698
  %v1088 = vsel %vm1082, %v977, %v700
  %v1090 = vsel %vm1082, %v979, %v702
  %v1092 = vsel %vm1082, %v981, %v704
  %v1094 = vsel %vm1082, %v983, %v706
  %v1096 = vsel %vm1082, %v985, %v708
  %v1098 = vsel %vm1082, %v987, %v710
  %v1100 = vsel %vm1082, %v989, %v712
  %v1102 = vsel %vm1082, %v991, %v714
  %v1104 = vsel %vm1082, %v993, %v716
  %v1106 = vsel %vm1082, %v995, %v718
  %v1108 = vsel %vm1082, %v997, %v720
  %v1110 = vsel %vm1082, %v999, %v722
  %v1112 = vsel %vm1082, %v1001, %v724
  %v1114 = vsel %vm1082, %v1003, %v726
  %v1116 = vsel %vm1082, %v1005, %v728
  %v1118 = vsel %vm1082, %v1007, %v730
  %v1120 = vsel %vm1082, %v1009, %v732
  %v1122 = vsel %vm1082, %v1011, %v734
  %v1124 = vsel %vm1082, %v1013, %v736
  %v1126 = vsel %vm1082, %v1015, %v738
  %v1128 = vsel %vm1082, %v1017, %v740
  %v1130 = vsel %vm1082, %v1019, %v742
  %v1132 = vsel %vm1082, %v1021, %v744
  %v1134 = vsel %vm1082, %v1023, %v746
  %v1136 = vsel %vm1082, %v1025, %v748
  %v1138 = vsel %vm1082, %v1027, %v750
  %v1140 = vsel %vm1082, %v1029, %v752
  %v1142 = vsel %vm1082, %v1031, %v754
  %v1144 = vsel %vm1082, %v1033, %v756
  %v1146 = vsel %vm1082, %v1035, %v758
  %v1148 = vsel %vm1082, %v1037, %v760
  %v1150 = vsel %vm1082, %v1039, %v762
  %v1152 = vsel %vm1082, %v1041, %v764
  %v1154 = vsel %vm1082, %v1043, %v766
  %v1156 = vsel %vm1082, %v1045, %v768
  %v1158 = vsel %vm1082, %v1047, %v770
  %v1160 = vsel %vm1082, %v1049, %v772
  %v1162 = vsel %vm1082, %v1051, %v774
  %v1164 = vsel %vm1082, %v1053, %v776
  %v1166 = vsel %vm1082, %v1055, %v778
  %v1168 = vsel %vm1082, %v1057, %v780
  %v1170 = vsel %vm1082, %v1059, %v782
  %v1172 = vsel %vm1082, %v1061, %v784
  %v1174 = vsel %vm1082, %v1063, %v786
  %v1176 = vsel %vm1082, %v1065, %v788
  %v1178 = vsel %vm1082, %v1067, %v790
  %v1180 = vsel %vm1082, %v1069, %v792
  %v1182 = vsel %vm1082, %v1071, %v794
  %v1184 = vsel %vm1082, %v1073, %v796
  %v1186 = vsel %vm1082, %v1075, %v798
  %v1188 = vsel %vm1082, %v1077, %v800
  %v1190 = vsel %vm1082, %v1079, %v802
  %v1192 = vsel %vm1082, %v1081, %v804
  %v1193 = vld [vmem:[%s1] sm:$0xf]
  %v1194 = vld [vmem:[%s1 + $0x4] sm:$0xf]
  %v1195 = vld [vmem:[%s1 + $0x8] sm:$0xf]
  %v1196 = vld [vmem:[%s1 + $0xc] sm:$0x3]
  %v1197 = vld [vmem:[%s2] sm:$0x1]
  %v1199 = vlaneseq
  %v1200 = vshrl.u32 %v1199, 7
  %v1201 = vsub.s32 0, %v1200
  %v1202 = vrot.slane %v1197, %v1201
  %v1208 = vunpack.c.l.b16 %v1193
  %v1209 = vunpack.c.l.b16 %v1194
  %v1210 = vunpack.c.l.b16 %v1195
  %v1211 = vunpack.c.l.b16 %v1196
  %v1212 = vpack.c.b16 %v1209, %v1208
  %v1213 = vpack.c.b16 %v1211, %v1210
  %vm1215 = vcmask 228352
  %v1216 = vsel %vm1215, %v1084, 0
  %v1218 = vsel %vm1215, %v1086, 0
  %v1220 = vsel %vm1215, %v1088, 0
  %v1222 = vsel %vm1215, %v1090, 0
  %v1224 = vsel %vm1215, %v1092, 0
  %v1226 = vsel %vm1215, %v1094, 0
  %v1228 = vsel %vm1215, %v1096, 0
  %v1230 = vsel %vm1215, %v1098, 0
  %v1232 = vsel %vm1215, %v1100, 0
  %v1234 = vsel %vm1215, %v1102, 0
  %v1236 = vsel %vm1215, %v1104, 0
  %v1238 = vsel %vm1215, %v1106, 0
  %v1240 = vsel %vm1215, %v1108, 0
  %v1242 = vsel %vm1215, %v1110, 0
  %v1244 = vsel %vm1215, %v1112, 0
  %v1246 = vsel %vm1215, %v1114, 0
  %v1248 = vsel %vm1215, %v1116, 0
  %v1250 = vsel %vm1215, %v1118, 0
  %v1252 = vsel %vm1215, %v1120, 0
  %v1254 = vsel %vm1215, %v1122, 0
  %v1256 = vsel %vm1215, %v1124, 0
  %v1258 = vsel %vm1215, %v1126, 0
  %v1260 = vsel %vm1215, %v1128, 0
  %v1262 = vsel %vm1215, %v1130, 0
  %v1264 = vsel %vm1215, %v1132, 0
  %v1266 = vsel %vm1215, %v1134, 0
  %v1268 = vsel %vm1215, %v1136, 0
  %v1270 = vsel %vm1215, %v1138, 0
  %v1272 = vsel %vm1215, %v1140, 0
  %v1274 = vsel %vm1215, %v1142, 0
  %v1276 = vsel %vm1215, %v1144, 0
  %v1278 = vsel %vm1215, %v1146, 0
  %v1280 = vsel %vm1215, %v1148, 0
  %v1282 = vsel %vm1215, %v1150, 0
  %v1284 = vsel %vm1215, %v1152, 0
  %v1286 = vsel %vm1215, %v1154, 0
  %v1288 = vsel %vm1215, %v1156, 0
  %v1290 = vsel %vm1215, %v1158, 0
  %v1292 = vsel %vm1215, %v1160, 0
  %v1294 = vsel %vm1215, %v1162, 0
  %v1296 = vsel %vm1215, %v1164, 0
  %v1298 = vsel %vm1215, %v1166, 0
  %v1300 = vsel %vm1215, %v1168, 0
  %v1302 = vsel %vm1215, %v1170, 0
  %v1304 = vsel %vm1215, %v1172, 0
  %v1306 = vsel %vm1215, %v1174, 0
  %v1308 = vsel %vm1215, %v1176, 0
  %v1310 = vsel %vm1215, %v1178, 0
  %v1312 = vsel %vm1215, %v1180, 0
  %v1314 = vsel %vm1215, %v1182, 0
  %v1316 = vsel %vm1215, %v1184, 0
  %v1318 = vsel %vm1215, %v1186, 0
  %v1320 = vsel %vm1215, %v1188, 0
  %v1322 = vsel %vm1215, %v1190, 0
  %v1324 = vsel %vm1215, %v1192, 0
  %vm1326 = vcmask 1045504
  %v1328 = vsel %vm1326, %v1213, 0
  %1330 = vmatprep.subr.bf16.mxu0 0
  %1331 = vmatpush1.bf16.msra.mxu0 %v1212
  %1332 = vmatprep.subr.bf16.mxu0 0
  %1333 = vmatpush1.bf16.msra.mxu0 %v1328
  %1334 = vmatprep.subr.bf16.mxu0 0
  %1335 = vmatpush1.bf16.msra.mxu0 0
  %1336 = vmatprep.subr.bf16.mxu0 0
  %1337 = vmatpush1.bf16.msra.mxu0 0
  %1338 = vmatprep.subr.bf16.mxu0 0
  %1339 = vmatpush1.bf16.msra.mxu0 0
  %1340 = vmatprep.subr.bf16.mxu0 0
  %1341 = vmatpush1.bf16.msra.mxu0 0
  %1342 = vmatprep.subr.bf16.mxu0 0
  %1343 = vmatpush1.bf16.msra.mxu0 0
  %1344 = vmatprep.subr.bf16.mxu0 0
  %1345 = vmatpush1.bf16.msra.mxu0 0
  %1346 = vmatprep.subr.bf16.mxu0 0
  %1347 = vmatpush1.bf16.msra.mxu0 0
  %1348 = vmatprep.subr.bf16.mxu0 0
  %1349 = vmatpush1.bf16.msra.mxu0 0
  %1350 = vmatprep.subr.bf16.mxu0 0
  %1351 = vmatpush1.bf16.msra.mxu0 0
  %1352 = vmatprep.subr.bf16.mxu0 0
  %1353 = vmatpush1.bf16.msra.mxu0 0
  %1354 = vmatprep.subr.bf16.mxu0 0
  %1355 = vmatpush1.bf16.msra.mxu0 0
  %1356 = vmatprep.subr.bf16.mxu0 0
  %1357 = vmatpush1.bf16.msra.mxu0 0
  %1358 = vmatprep.subr.bf16.mxu0 0
  %1359 = vmatpush1.bf16.msra.mxu0 0
  %1360 = vmatprep.subr.bf16.mxu0 0
  %1361 = vmatpush1.bf16.msra.mxu0 0
  %1362 = vmatprep.mubr.bf16.mxu0 0
  %1363 = vmatmul.mubr.bf16.gmra.mrb[0].mxu0 %v1216
  %v1364 = vpop.f32.mrb[0].mxu0
  %v1365 = vadd.f32 %v1202, %v1364
  %v1366 = vpop.f32.mrb[0].mxu0
  %v1367 = vpop.f32.mrb[0].mxu0
  %v1368 = vadd.f32 %v1202, %v1367
  %v1369 = vpop.f32.mrb[0].mxu0
  %1370 = vmatprep.mubr.bf16.mxu0 0
  %1371 = vmatmul.mubr.bf16.gmra.mrb[0].mxu0 %v1218
  %v1372 = vpop.f32.mrb[0].mxu0
  %v1373 = vadd.f32 %v1202, %v1372
  %v1374 = vpop.f32.mrb[0].mxu0
  %v1375 = vpop.f32.mrb[0].mxu0
  %v1376 = vadd.f32 %v1202, %v1375
  %v1377 = vpop.f32.mrb[0].mxu0
  %1378 = vmatprep.mubr.bf16.mxu0 0
  %1379 = vmatmul.mubr.bf16.gmra.mrb[0].mxu0 %v1220
  %v1380 = vpop.f32.mrb[0].mxu0
  %v1381 = vadd.f32 %v1202, %v1380
  %v1382 = vpop.f32.mrb[0].mxu0
  %v1383 = vpop.f32.mrb[0].mxu0
  %v1384 = vadd.f32 %v1202, %v1383
  %v1385 = vpop.f32.mrb[0].mxu0
  %1386 = vmatprep.mubr.bf16.mxu0 0
  %1387 = vmatmul.mubr.bf16.gmra.mrb[0].mxu0 %v1222
  %v1388 = vpop.f32.mrb[0].mxu0
  %v1389 = vadd.f32 %v1202, %v1388
  %v1390 = vpop.f32.mrb[0].mxu0
  %v1391 = vpop.f32.mrb[0].mxu0
  %v1392 = vadd.f32 %v1202, %v1391
  %v1393 = vpop.f32.mrb[0].mxu0
  %1394 = vmatprep.mubr.bf16.mxu0 0
  %1395 = vmatmul.mubr.bf16.gmra.mrb[0].mxu0 %v1224
  %v1396 = vpop.f32.mrb[0].mxu0
  %v1397 = vadd.f32 %v1202, %v1396
  %v1398 = vpop.f32.mrb[0].mxu0
  %v1399 = vpop.f32.mrb[0].mxu0
  %v1400 = vadd.f32 %v1202, %v1399
  %v1401 = vpop.f32.mrb[0].mxu0
  %1402 = vmatprep.mubr.bf16.mxu0 0
  %1403 = vmatmul.mubr.bf16.gmra.mrb[0].mxu0 %v1226
  %v1404 = vpop.f32.mrb[0].mxu0
  %v1405 = vadd.f32 %v1202, %v1404
  %v1406 = vpop.f32.mrb[0].mxu0
  %v1407 = vpop.f32.mrb[0].mxu0
  %v1408 = vadd.f32 %v1202, %v1407
  %v1409 = vpop.f32.mrb[0].mxu0
  %1410 = vmatprep.mubr.bf16.mxu0 0
  %1411 = vmatmul.mubr.bf16.gmra.mrb[0].mxu0 %v1228
  %v1412 = vpop.f32.mrb[0].mxu0
  %v1413 = vadd.f32 %v1202, %v1412
  %v1414 = vpop.f32.mrb[0].mxu0
  %v1415 = vpop.f32.mrb[0].mxu0
  %v1416 = vadd.f32 %v1202, %v1415
  %v1417 = vpop.f32.mrb[0].mxu0
  %1418 = vmatprep.mubr.bf16.mxu0 0
  %1419 = vmatmul.mubr.bf16.gmra.mrb[0].mxu0 %v1230
  %v1420 = vpop.f32.mrb[0].mxu0
  %v1421 = vadd.f32 %v1202, %v1420
  %v1422 = vpop.f32.mrb[0].mxu0
  %v1423 = vpop.f32.mrb[0].mxu0
  %v1424 = vadd.f32 %v1202, %v1423
  %v1425 = vpop.f32.mrb[0].mxu0
  %1426 = vmatprep.mubr.bf16.mxu0 0
  %1427 = vmatmul.mubr.bf16.gmra.mrb[0].mxu0 %v1232
  %v1428 = vpop.f32.mrb[0].mxu0
  %v1429 = vadd.f32 %v1202, %v1428
  %v1430 = vpop.f32.mrb[0].mxu0
  %v1431 = vpop.f32.mrb[0].mxu0
  %v1432 = vadd.f32 %v1202, %v1431
  %v1433 = vpop.f32.mrb[0].mxu0
  %1434 = vmatprep.mubr.bf16.mxu0 0
  %1435 = vmatmul.mubr.bf16.gmra.mrb[0].mxu0 %v1234
  %v1436 = vpop.f32.mrb[0].mxu0
  %v1437 = vadd.f32 %v1202, %v1436
  %v1438 = vpop.f32.mrb[0].mxu0
  %v1439 = vpop.f32.mrb[0].mxu0
  %v1440 = vadd.f32 %v1202, %v1439
  %v1441 = vpop.f32.mrb[0].mxu0
  %1442 = vmatprep.mubr.bf16.mxu0 0
  %1443 = vmatmul.mubr.bf16.gmra.mrb[0].mxu0 %v1236
  %v1444 = vpop.f32.mrb[0].mxu0
  %v1445 = vadd.f32 %v1202, %v1444
  %v1446 = vpop.f32.mrb[0].mxu0
  %v1447 = vpop.f32.mrb[0].mxu0
  %v1448 = vadd.f32 %v1202, %v1447
  %v1449 = vpop.f32.mrb[0].mxu0
  %1450 = vmatprep.mubr.bf16.mxu0 0
  %1451 = vmatmul.mubr.bf16.gmra.mrb[0].mxu0 %v1238
  %v1452 = vpop.f32.mrb[0].mxu0
  %v1453 = vadd.f32 %v1202, %v1452
  %v1454 = vpop.f32.mrb[0].mxu0
  %v1455 = vpop.f32.mrb[0].mxu0
  %v1456 = vadd.f32 %v1202, %v1455
  %v1457 = vpop.f32.mrb[0].mxu0
  %1458 = vmatprep.mubr.bf16.mxu0 0
  %1459 = vmatmul.mubr.bf16.gmra.mrb[0].mxu0 %v1240
  %v1460 = vpop.f32.mrb[0].mxu0
  %v1461 = vadd.f32 %v1202, %v1460
  %v1462 = vpop.f32.mrb[0].mxu0
  %v1463 = vpop.f32.mrb[0].mxu0
  %v1464 = vadd.f32 %v1202, %v1463
  %v1465 = vpop.f32.mrb[0].mxu0
  %1466 = vmatprep.mubr.bf16.mxu0 0
  %1467 = vmatmul.mubr.bf16.gmra.mrb[0].mxu0 %v1242
  %v1468 = vpop.f32.mrb[0].mxu0
  %v1469 = vadd.f32 %v1202, %v1468
  %v1470 = vpop.f32.mrb[0].mxu0
  %v1471 = vpop.f32.mrb[0].mxu0
  %v1472 = vadd.f32 %v1202, %v1471
  %v1473 = vpop.f32.mrb[0].mxu0
  %1474 = vmatprep.mubr.bf16.mxu0 0
  %1475 = vmatmul.mubr.bf16.gmra.mrb[0].mxu0 %v1244
  %v1476 = vpop.f32.mrb[0].mxu0
  %v1477 = vadd.f32 %v1202, %v1476
  %v1478 = vpop.f32.mrb[0].mxu0
  %v1479 = vpop.f32.mrb[0].mxu0
  %v1480 = vadd.f32 %v1202, %v1479
  %v1481 = vpop.f32.mrb[0].mxu0
  %1482 = vmatprep.mubr.bf16.mxu0 0
  %1483 = vmatmul.mubr.bf16.gmra.mrb[0].mxu0 %v1246
  %v1484 = vpop.f32.mrb[0].mxu0
  %v1485 = vadd.f32 %v1202, %v1484
  %v1486 = vpop.f32.mrb[0].mxu0
  %v1487 = vpop.f32.mrb[0].mxu0
  %v1488 = vadd.f32 %v1202, %v1487
  %v1489 = vpop.f32.mrb[0].mxu0
  %1490 = vmatprep.mubr.bf16.mxu0 0
  %1491 = vmatmul.mubr.bf16.gmra.mrb[0].mxu0 %v1248
  %v1492 = vpop.f32.mrb[0].mxu0
  %v1493 = vadd.f32 %v1202, %v1492
  %v1494 = vpop.f32.mrb[0].mxu0
  %v1495 = vpop.f32.mrb[0].mxu0
  %v1496 = vadd.f32 %v1202, %v1495
  %v1497 = vpop.f32.mrb[0].mxu0
  %1498 = vmatprep.mubr.bf16.mxu0 0
  %1499 = vmatmul.mubr.bf16.gmra.mrb[0].mxu0 %v1250
  %v1500 = vpop.f32.mrb[0].mxu0
  %v1501 = vadd.f32 %v1202, %v1500
  %v1502 = vpop.f32.mrb[0].mxu0
  %v1503 = vpop.f32.mrb[0].mxu0
  %v1504 = vadd.f32 %v1202, %v1503
  %v1505 = vpop.f32.mrb[0].mxu0
  %1506 = vmatprep.mubr.bf16.mxu0 0
  %1507 = vmatmul.mubr.bf16.gmra.mrb[0].mxu0 %v1252
  %v1508 = vpop.f32.mrb[0].mxu0
  %v1509 = vadd.f32 %v1202, %v1508
  %v1510 = vpop.f32.mrb[0].mxu0
  %v1511 = vpop.f32.mrb[0].mxu0
  %v1512 = vadd.f32 %v1202, %v1511
  %v1513 = vpop.f32.mrb[0].mxu0
  %1514 = vmatprep.mubr.bf16.mxu0 0
  %1515 = vmatmul.mubr.bf16.gmra.mrb[0].mxu0 %v1254
  %v1516 = vpop.f32.mrb[0].mxu0
  %v1517 = vadd.f32 %v1202, %v1516
  %v1518 = vpop.f32.mrb[0].mxu0
  %v1519 = vpop.f32.mrb[0].mxu0
  %v1520 = vadd.f32 %v1202, %v1519
  %v1521 = vpop.f32.mrb[0].mxu0
  %1522 = vmatprep.mubr.bf16.mxu0 0
  %1523 = vmatmul.mubr.bf16.gmra.mrb[0].mxu0 %v1256
  %v1524 = vpop.f32.mrb[0].mxu0
  %v1525 = vadd.f32 %v1202, %v1524
  %v1526 = vpop.f32.mrb[0].mxu0
  %v1527 = vpop.f32.mrb[0].mxu0
  %v1528 = vadd.f32 %v1202, %v1527
  %v1529 = vpop.f32.mrb[0].mxu0
  %1530 = vmatprep.mubr.bf16.mxu0 0
  %1531 = vmatmul.mubr.bf16.gmra.mrb[0].mxu0 %v1258
  %v1532 = vpop.f32.mrb[0].mxu0
  %v1533 = vadd.f32 %v1202, %v1532
  %v1534 = vpop.f32.mrb[0].mxu0
  %v1535 = vpop.f32.mrb[0].mxu0
  %v1536 = vadd.f32 %v1202, %v1535
  %v1537 = vpop.f32.mrb[0].mxu0
  %1538 = vmatprep.mubr.bf16.mxu0 0
  %1539 = vmatmul.mubr.bf16.gmra.mrb[0].mxu0 %v1260
  %v1540 = vpop.f32.mrb[0].mxu0
  %v1541 = vadd.f32 %v1202, %v1540
  %v1542 = vpop.f32.mrb[0].mxu0
  %v1543 = vpop.f32.mrb[0].mxu0
  %v1544 = vadd.f32 %v1202, %v1543
  %v1545 = vpop.f32.mrb[0].mxu0
  %1546 = vmatprep.mubr.bf16.mxu0 0
  %1547 = vmatmul.mubr.bf16.gmra.mrb[0].mxu0 %v1262
  %v1548 = vpop.f32.mrb[0].mxu0
  %v1549 = vadd.f32 %v1202, %v1548
  %v1550 = vpop.f32.mrb[0].mxu0
  %v1551 = vpop.f32.mrb[0].mxu0
  %v1552 = vadd.f32 %v1202, %v1551
  %v1553 = vpop.f32.mrb[0].mxu0
  %1554 = vmatprep.mubr.bf16.mxu0 0
  %1555 = vmatmul.mubr.bf16.gmra.mrb[0].mxu0 %v1264
  %v1556 = vpop.f32.mrb[0].mxu0
  %v1557 = vadd.f32 %v1202, %v1556
  %v1558 = vpop.f32.mrb[0].mxu0
  %v1559 = vpop.f32.mrb[0].mxu0
  %v1560 = vadd.f32 %v1202, %v1559
  %v1561 = vpop.f32.mrb[0].mxu0
  %1562 = vmatprep.mubr.bf16.mxu0 0
  %1563 = vmatmul.mubr.bf16.gmra.mrb[0].mxu0 %v1266
  %v1564 = vpop.f32.mrb[0].mxu0
  %v1565 = vadd.f32 %v1202, %v1564
  %v1566 = vpop.f32.mrb[0].mxu0
  %v1567 = vpop.f32.mrb[0].mxu0
  %v1568 = vadd.f32 %v1202, %v1567
  %v1569 = vpop.f32.mrb[0].mxu0
  %1570 = vmatprep.mubr.bf16.mxu0 0
  %1571 = vmatmul.mubr.bf16.gmra.mrb[0].mxu0 %v1268
  %v1572 = vpop.f32.mrb[0].mxu0
  %v1573 = vadd.f32 %v1202, %v1572
  %v1574 = vpop.f32.mrb[0].mxu0
  %v1575 = vpop.f32.mrb[0].mxu0
  %v1576 = vadd.f32 %v1202, %v1575
  %v1577 = vpop.f32.mrb[0].mxu0
  %1578 = vmatprep.mubr.bf16.mxu0 0
  %1579 = vmatmul.mubr.bf16.gmra.mrb[0].mxu0 %v1270
  %v1580 = vpop.f32.mrb[0].mxu0
  %v1581 = vadd.f32 %v1202, %v1580
  %v1582 = vpop.f32.mrb[0].mxu0
  %v1583 = vpop.f32.mrb[0].mxu0
  %v1584 = vadd.f32 %v1202, %v1583
  %v1585 = vpop.f32.mrb[0].mxu0
  %1586 = vmatprep.mubr.bf16.mxu0 0
  %1587 = vmatmul.mubr.bf16.gmra.mrb[0].mxu0 %v1272
  %v1588 = vpop.f32.mrb[0].mxu0
  %v1589 = vadd.f32 %v1202, %v1588
  %v1590 = vpop.f32.mrb[0].mxu0
  %v1591 = vpop.f32.mrb[0].mxu0
  %v1592 = vadd.f32 %v1202, %v1591
  %v1593 = vpop.f32.mrb[0].mxu0
  %1594 = vmatprep.mubr.bf16.mxu0 0
  %1595 = vmatmul.mubr.bf16.gmra.mrb[0].mxu0 %v1274
  %v1596 = vpop.f32.mrb[0].mxu0
  %v1597 = vadd.f32 %v1202, %v1596
  %v1598 = vpop.f32.mrb[0].mxu0
  %v1599 = vpop.f32.mrb[0].mxu0
  %v1600 = vadd.f32 %v1202, %v1599
  %v1601 = vpop.f32.mrb[0].mxu0
  %1602 = vmatprep.mubr.bf16.mxu0 0
  %1603 = vmatmul.mubr.bf16.gmra.mrb[0].mxu0 %v1276
  %v1604 = vpop.f32.mrb[0].mxu0
  %v1605 = vadd.f32 %v1202, %v1604
  %v1606 = vpop.f32.mrb[0].mxu0
  %v1607 = vpop.f32.mrb[0].mxu0
  %v1608 = vadd.f32 %v1202, %v1607
  %v1609 = vpop.f32.mrb[0].mxu0
  %1610 = vmatprep.mubr.bf16.mxu0 0
  %1611 = vmatmul.mubr.bf16.gmra.mrb[0].mxu0 %v1278
  %v1612 = vpop.f32.mrb[0].mxu0
  %v1613 = vadd.f32 %v1202, %v1612
  %v1614 = vpop.f32.mrb[0].mxu0
  %v1615 = vpop.f32.mrb[0].mxu0
  %v1616 = vadd.f32 %v1202, %v1615
  %v1617 = vpop.f32.mrb[0].mxu0
  %1618 = vmatprep.mubr.bf16.mxu0 0
  %1619 = vmatmul.mubr.bf16.gmra.mrb[0].mxu0 %v1280
  %v1620 = vpop.f32.mrb[0].mxu0
  %v1621 = vadd.f32 %v1202, %v1620
  %v1622 = vpop.f32.mrb[0].mxu0
  %v1623 = vpop.f32.mrb[0].mxu0
  %v1624 = vadd.f32 %v1202, %v1623
  %v1625 = vpop.f32.mrb[0].mxu0
  %1626 = vmatprep.mubr.bf16.mxu0 0
  %1627 = vmatmul.mubr.bf16.gmra.mrb[0].mxu0 %v1282
  %v1628 = vpop.f32.mrb[0].mxu0
  %v1629 = vadd.f32 %v1202, %v1628
  %v1630 = vpop.f32.mrb[0].mxu0
  %v1631 = vpop.f32.mrb[0].mxu0
  %v1632 = vadd.f32 %v1202, %v1631
  %v1633 = vpop.f32.mrb[0].mxu0
  %1634 = vmatprep.mubr.bf16.mxu0 0
  %1635 = vmatmul.mubr.bf16.gmra.mrb[0].mxu0 %v1284
  %v1636 = vpop.f32.mrb[0].mxu0
  %v1637 = vadd.f32 %v1202, %v1636
  %v1638 = vpop.f32.mrb[0].mxu0
  %v1639 = vpop.f32.mrb[0].mxu0
  %v1640 = vadd.f32 %v1202, %v1639
  %v1641 = vpop.f32.mrb[0].mxu0
  %1642 = vmatprep.mubr.bf16.mxu0 0
  %1643 = vmatmul.mubr.bf16.gmra.mrb[0].mxu0 %v1286
  %v1644 = vpop.f32.mrb[0].mxu0
  %v1645 = vadd.f32 %v1202, %v1644
  %v1646 = vpop.f32.mrb[0].mxu0
  %v1647 = vpop.f32.mrb[0].mxu0
  %v1648 = vadd.f32 %v1202, %v1647
  %v1649 = vpop.f32.mrb[0].mxu0
  %1650 = vmatprep.mubr.bf16.mxu0 0
  %1651 = vmatmul.mubr.bf16.gmra.mrb[0].mxu0 %v1288
  %v1652 = vpop.f32.mrb[0].mxu0
  %v1653 = vadd.f32 %v1202, %v1652
  %v1654 = vpop.f32.mrb[0].mxu0
  %v1655 = vpop.f32.mrb[0].mxu0
  %v1656 = vadd.f32 %v1202, %v1655
  %v1657 = vpop.f32.mrb[0].mxu0
  %1658 = vmatprep.mubr.bf16.mxu0 0
  %1659 = vmatmul.mubr.bf16.gmra.mrb[0].mxu0 %v1290
  %v1660 = vpop.f32.mrb[0].mxu0
  %v1661 = vadd.f32 %v1202, %v1660
  %v1662 = vpop.f32.mrb[0].mxu0
  %v1663 = vpop.f32.mrb[0].mxu0
  %v1664 = vadd.f32 %v1202, %v1663
  %v1665 = vpop.f32.mrb[0].mxu0
  %1666 = vmatprep.mubr.bf16.mxu0 0
  %1667 = vmatmul.mubr.bf16.gmra.mrb[0].mxu0 %v1292
  %v1668 = vpop.f32.mrb[0].mxu0
  %v1669 = vadd.f32 %v1202, %v1668
  %v1670 = vpop.f32.mrb[0].mxu0
  %v1671 = vpop.f32.mrb[0].mxu0
  %v1672 = vadd.f32 %v1202, %v1671
  %v1673 = vpop.f32.mrb[0].mxu0
  %1674 = vmatprep.mubr.bf16.mxu0 0
  %1675 = vmatmul.mubr.bf16.gmra.mrb[0].mxu0 %v1294
  %v1676 = vpop.f32.mrb[0].mxu0
  %v1677 = vadd.f32 %v1202, %v1676
  %v1678 = vpop.f32.mrb[0].mxu0
  %v1679 = vpop.f32.mrb[0].mxu0
  %v1680 = vadd.f32 %v1202, %v1679
  %v1681 = vpop.f32.mrb[0].mxu0
  %1682 = vmatprep.mubr.bf16.mxu0 0
  %1683 = vmatmul.mubr.bf16.gmra.mrb[0].mxu0 %v1296
  %v1684 = vpop.f32.mrb[0].mxu0
  %v1685 = vadd.f32 %v1202, %v1684
  %v1686 = vpop.f32.mrb[0].mxu0
  %v1687 = vpop.f32.mrb[0].mxu0
  %v1688 = vadd.f32 %v1202, %v1687
  %v1689 = vpop.f32.mrb[0].mxu0
  %1690 = vmatprep.mubr.bf16.mxu0 0
  %1691 = vmatmul.mubr.bf16.gmra.mrb[0].mxu0 %v1298
  %v1692 = vpop.f32.mrb[0].mxu0
  %v1693 = vadd.f32 %v1202, %v1692
  %v1694 = vpop.f32.mrb[0].mxu0
  %v1695 = vpop.f32.mrb[0].mxu0
  %v1696 = vadd.f32 %v1202, %v1695
  %v1697 = vpop.f32.mrb[0].mxu0
  %1698 = vmatprep.mubr.bf16.mxu0 0
  %1699 = vmatmul.mubr.bf16.gmra.mrb[0].mxu0 %v1300
  %v1700 = vpop.f32.mrb[0].mxu0
  %v1701 = vadd.f32 %v1202, %v1700
  %v1702 = vpop.f32.mrb[0].mxu0
  %v1703 = vpop.f32.mrb[0].mxu0
  %v1704 = vadd.f32 %v1202, %v1703
  %v1705 = vpop.f32.mrb[0].mxu0
  %1706 = vmatprep.mubr.bf16.mxu0 0
  %1707 = vmatmul.mubr.bf16.gmra.mrb[0].mxu0 %v1302
  %v1708 = vpop.f32.mrb[0].mxu0
  %v1709 = vadd.f32 %v1202, %v1708
  %v1710 = vpop.f32.mrb[0].mxu0
  %v1711 = vpop.f32.mrb[0].mxu0
  %v1712 = vadd.f32 %v1202, %v1711
  %v1713 = vpop.f32.mrb[0].mxu0
  %1714 = vmatprep.mubr.bf16.mxu0 0
  %1715 = vmatmul.mubr.bf16.gmra.mrb[0].mxu0 %v1304
  %v1716 = vpop.f32.mrb[0].mxu0
  %v1717 = vadd.f32 %v1202, %v1716
  %v1718 = vpop.f32.mrb[0].mxu0
  %v1719 = vpop.f32.mrb[0].mxu0
  %v1720 = vadd.f32 %v1202, %v1719
  %v1721 = vpop.f32.mrb[0].mxu0
  %1722 = vmatprep.mubr.bf16.mxu0 0
  %1723 = vmatmul.mubr.bf16.gmra.mrb[0].mxu0 %v1306
  %v1724 = vpop.f32.mrb[0].mxu0
  %v1725 = vadd.f32 %v1202, %v1724
  %v1726 = vpop.f32.mrb[0].mxu0
  %v1727 = vpop.f32.mrb[0].mxu0
  %v1728 = vadd.f32 %v1202, %v1727
  %v1729 = vpop.f32.mrb[0].mxu0
  %1730 = vmatprep.mubr.bf16.mxu0 0
  %1731 = vmatmul.mubr.bf16.gmra.mrb[0].mxu0 %v1308
  %v1732 = vpop.f32.mrb[0].mxu0
  %v1733 = vadd.f32 %v1202, %v1732
  %v1734 = vpop.f32.mrb[0].mxu0
  %v1735 = vpop.f32.mrb[0].mxu0
  %v1736 = vadd.f32 %v1202, %v1735
  %v1737 = vpop.f32.mrb[0].mxu0
  %1738 = vmatprep.mubr.bf16.mxu0 0
  %1739 = vmatmul.mubr.bf16.gmra.mrb[0].mxu0 %v1310
  %v1740 = vpop.f32.mrb[0].mxu0
  %v1741 = vadd.f32 %v1202, %v1740
  %v1742 = vpop.f32.mrb[0].mxu0
  %v1743 = vpop.f32.mrb[0].mxu0
  %v1744 = vadd.f32 %v1202, %v1743
  %v1745 = vpop.f32.mrb[0].mxu0
  %1746 = vmatprep.mubr.bf16.mxu0 0
  %1747 = vmatmul.mubr.bf16.gmra.mrb[0].mxu0 %v1312
  %v1748 = vpop.f32.mrb[0].mxu0
  %v1749 = vadd.f32 %v1202, %v1748
  %v1750 = vpop.f32.mrb[0].mxu0
  %v1751 = vpop.f32.mrb[0].mxu0
  %v1752 = vadd.f32 %v1202, %v1751
  %v1753 = vpop.f32.mrb[0].mxu0
  %1754 = vmatprep.mubr.bf16.mxu0 0
  %1755 = vmatmul.mubr.bf16.gmra.mrb[0].mxu0 %v1314
  %v1756 = vpop.f32.mrb[0].mxu0
  %v1757 = vadd.f32 %v1202, %v1756
  %v1758 = vpop.f32.mrb[0].mxu0
  %v1759 = vpop.f32.mrb[0].mxu0
  %v1760 = vadd.f32 %v1202, %v1759
  %v1761 = vpop.f32.mrb[0].mxu0
  %1762 = vmatprep.mubr.bf16.mxu0 0
  %1763 = vmatmul.mubr.bf16.gmra.mrb[0].mxu0 %v1316
  %v1764 = vpop.f32.mrb[0].mxu0
  %v1765 = vadd.f32 %v1202, %v1764
  %v1766 = vpop.f32.mrb[0].mxu0
  %v1767 = vpop.f32.mrb[0].mxu0
  %v1768 = vadd.f32 %v1202, %v1767
  %v1769 = vpop.f32.mrb[0].mxu0
  %1770 = vmatprep.mubr.bf16.mxu0 0
  %1771 = vmatmul.mubr.bf16.gmra.mrb[0].mxu0 %v1318
  %v1772 = vpop.f32.mrb[0].mxu0
  %v1773 = vadd.f32 %v1202, %v1772
  %v1774 = vpop.f32.mrb[0].mxu0
  %v1775 = vpop.f32.mrb[0].mxu0
  %v1776 = vadd.f32 %v1202, %v1775
  %v1777 = vpop.f32.mrb[0].mxu0
  %1778 = vmatprep.mubr.bf16.mxu0 0
  %1779 = vmatmul.mubr.bf16.gmra.mrb[0].mxu0 %v1320
  %v1780 = vpop.f32.mrb[0].mxu0
  %v1781 = vadd.f32 %v1202, %v1780
  %v1782 = vpop.f32.mrb[0].mxu0
  %v1783 = vpop.f32.mrb[0].mxu0
  %v1784 = vadd.f32 %v1202, %v1783
  %v1785 = vpop.f32.mrb[0].mxu0
  %1786 = vmatprep.mubr.bf16.mxu0 0
  %1787 = vmatmul.mubr.bf16.gmra.mrb[0].mxu0 %v1322
  %v1788 = vpop.f32.mrb[0].mxu0
  %v1789 = vadd.f32 %v1202, %v1788
  %v1790 = vpop.f32.mrb[0].mxu0
  %v1791 = vpop.f32.mrb[0].mxu0
  %v1792 = vadd.f32 %v1202, %v1791
  %v1793 = vpop.f32.mrb[0].mxu0
  %1794 = vmatprep.mubr.bf16.mxu0 0
  %1795 = vmatmul.mubr.bf16.gmra.mrb[0].mxu0 %v1324
  %v1796 = vpop.f32.mrb[0].mxu0
  %v1797 = vadd.f32 %v1202, %v1796
  %v1798 = vpop.f32.mrb[0].mxu0
  %v1799 = vpop.f32.mrb[0].mxu0
  %v1800 = vadd.f32 %v1202, %v1799
  %v1801 = vpop.f32.mrb[0].mxu0
  %1802 = vdwg.mxu0
  %v1803 = vmax.f32 %v1365, 0.0
  %v1804 = vmax.f32 %v1368, 0.0
  %v1805 = vmax.f32 %v1373, 0.0
  %v1806 = vmax.f32 %v1376, 0.0
  %v1807 = vmax.f32 %v1381, 0.0
  %v1808 = vmax.f32 %v1384, 0.0
  %v1809 = vmax.f32 %v1389, 0.0
  %v1810 = vmax.f32 %v1392, 0.0
  %v1811 = vmax.f32 %v1397, 0.0
  %v1812 = vmax.f32 %v1400, 0.0
  %v1813 = vmax.f32 %v1405, 0.0
  %v1814 = vmax.f32 %v1408, 0.0
  %v1815 = vmax.f32 %v1413, 0.0
  %v1816 = vmax.f32 %v1416, 0.0
  %v1817 = vmax.f32 %v1421, 0.0
  %v1818 = vmax.f32 %v1424, 0.0
  %v1819 = vmax.f32 %v1429, 0.0
  %v1820 = vmax.f32 %v1432, 0.0
  %v1821 = vmax.f32 %v1437, 0.0
  %v1822 = vmax.f32 %v1440, 0.0
  %v1823 = vmax.f32 %v1445, 0.0
  %v1824 = vmax.f32 %v1448, 0.0
  %v1825 = vmax.f32 %v1453, 0.0
  %v1826 = vmax.f32 %v1456, 0.0
  %v1827 = vmax.f32 %v1461, 0.0
  %v1828 = vmax.f32 %v1464, 0.0
  %v1829 = vmax.f32 %v1469, 0.0
  %v1830 = vmax.f32 %v1472, 0.0
  %v1831 = vmax.f32 %v1477, 0.0
  %v1832 = vmax.f32 %v1480, 0.0
  %v1833 = vmax.f32 %v1485, 0.0
  %v1834 = vmax.f32 %v1488, 0.0
  %v1835 = vmax.f32 %v1493, 0.0
  %v1836 = vmax.f32 %v1496, 0.0
  %v1837 = vmax.f32 %v1501, 0.0
  %v1838 = vmax.f32 %v1504, 0.0
  %v1839 = vmax.f32 %v1509, 0.0
  %v1840 = vmax.f32 %v1512, 0.0
  %v1841 = vmax.f32 %v1517, 0.0
  %v1842 = vmax.f32 %v1520, 0.0
  %v1843 = vmax.f32 %v1525, 0.0
  %v1844 = vmax.f32 %v1528, 0.0
  %v1845 = vmax.f32 %v1533, 0.0
  %v1846 = vmax.f32 %v1536, 0.0
  %v1847 = vmax.f32 %v1541, 0.0
  %v1848 = vmax.f32 %v1544, 0.0
  %v1849 = vmax.f32 %v1549, 0.0
  %v1850 = vmax.f32 %v1552, 0.0
  %v1851 = vmax.f32 %v1557, 0.0
  %v1852 = vmax.f32 %v1560, 0.0
  %v1853 = vmax.f32 %v1565, 0.0
  %v1854 = vmax.f32 %v1568, 0.0
  %v1855 = vmax.f32 %v1573, 0.0
  %v1856 = vmax.f32 %v1576, 0.0
  %v1857 = vmax.f32 %v1581, 0.0
  %v1858 = vmax.f32 %v1584, 0.0
  %v1859 = vmax.f32 %v1589, 0.0
  %v1860 = vmax.f32 %v1592, 0.0
  %v1861 = vmax.f32 %v1597, 0.0
  %v1862 = vmax.f32 %v1600, 0.0
  %v1863 = vmax.f32 %v1605, 0.0
  %v1864 = vmax.f32 %v1608, 0.0
  %v1865 = vmax.f32 %v1613, 0.0
  %v1866 = vmax.f32 %v1616, 0.0
  %v1867 = vmax.f32 %v1621, 0.0
  %v1868 = vmax.f32 %v1624, 0.0
  %v1869 = vmax.f32 %v1629, 0.0
  %v1870 = vmax.f32 %v1632, 0.0
  %v1871 = vmax.f32 %v1637, 0.0
  %v1872 = vmax.f32 %v1640, 0.0
  %v1873 = vmax.f32 %v1645, 0.0
  %v1874 = vmax.f32 %v1648, 0.0
  %v1875 = vmax.f32 %v1653, 0.0
  %v1876 = vmax.f32 %v1656, 0.0
  %v1877 = vmax.f32 %v1661, 0.0
  %v1878 = vmax.f32 %v1664, 0.0
  %v1879 = vmax.f32 %v1669, 0.0
  %v1880 = vmax.f32 %v1672, 0.0
  %v1881 = vmax.f32 %v1677, 0.0
  %v1882 = vmax.f32 %v1680, 0.0
  %v1883 = vmax.f32 %v1685, 0.0
  %v1884 = vmax.f32 %v1688, 0.0
  %v1885 = vmax.f32 %v1693, 0.0
  %v1886 = vmax.f32 %v1696, 0.0
  %v1887 = vmax.f32 %v1701, 0.0
  %v1888 = vmax.f32 %v1704, 0.0
  %v1889 = vmax.f32 %v1709, 0.0
  %v1890 = vmax.f32 %v1712, 0.0
  %v1891 = vmax.f32 %v1717, 0.0
  %v1892 = vmax.f32 %v1720, 0.0
  %v1893 = vmax.f32 %v1725, 0.0
  %v1894 = vmax.f32 %v1728, 0.0
  %v1895 = vmax.f32 %v1733, 0.0
  %v1896 = vmax.f32 %v1736, 0.0
  %v1897 = vmax.f32 %v1741, 0.0
  %v1898 = vmax.f32 %v1744, 0.0
  %v1899 = vmax.f32 %v1749, 0.0
  %v1900 = vmax.f32 %v1752, 0.0
  %v1901 = vmax.f32 %v1757, 0.0
  %v1902 = vmax.f32 %v1760, 0.0
  %v1903 = vmax.f32 %v1765, 0.0
  %v1904 = vmax.f32 %v1768, 0.0
  %v1905 = vmax.f32 %v1773, 0.0
  %v1906 = vmax.f32 %v1776, 0.0
  %v1907 = vmax.f32 %v1781, 0.0
  %v1908 = vmax.f32 %v1784, 0.0
  %v1909 = vmax.f32 %v1789, 0.0
  %v1910 = vmax.f32 %v1792, 0.0
  %v1911 = vmax.f32 %v1797, 0.0
  %v1912 = vmax.f32 %v1800, 0.0
  %v1913 = vpack.c.bf16 %v1804, %v1803
  %v1914 = vpack.c.bf16 %v1806, %v1805
  %v1915 = vpack.c.bf16 %v1808, %v1807
  %v1916 = vpack.c.bf16 %v1810, %v1809
  %v1917 = vpack.c.bf16 %v1812, %v1811
  %v1918 = vpack.c.bf16 %v1814, %v1813
  %v1919 = vpack.c.bf16 %v1816, %v1815
  %v1920 = vpack.c.bf16 %v1818, %v1817
  %v1921 = vpack.c.bf16 %v1820, %v1819
  %v1922 = vpack.c.bf16 %v1822, %v1821
  %v1923 = vpack.c.bf16 %v1824, %v1823
  %v1924 = vpack.c.bf16 %v1826, %v1825
  %v1925 = vpack.c.bf16 %v1828, %v1827
  %v1926 = vpack.c.bf16 %v1830, %v1829
  %v1927 = vpack.c.bf16 %v1832, %v1831
  %v1928 = vpack.c.bf16 %v1834, %v1833
  %v1929 = vpack.c.bf16 %v1836, %v1835
  %v1930 = vpack.c.bf16 %v1838, %v1837
  %v1931 = vpack.c.bf16 %v1840, %v1839
  %v1932 = vpack.c.bf16 %v1842, %v1841
  %v1933 = vpack.c.bf16 %v1844, %v1843
  %v1934 = vpack.c.bf16 %v1846, %v1845
  %v1935 = vpack.c.bf16 %v1848, %v1847
  %v1936 = vpack.c.bf16 %v1850, %v1849
  %v1937 = vpack.c.bf16 %v1852, %v1851
  %v1938 = vpack.c.bf16 %v1854, %v1853
  %v1939 = vpack.c.bf16 %v1856, %v1855
  %v1940 = vpack.c.bf16 %v1858, %v1857
  %v1941 = vpack.c.bf16 %v1860, %v1859
  %v1942 = vpack.c.bf16 %v1862, %v1861
  %v1943 = vpack.c.bf16 %v1864, %v1863
  %v1944 = vpack.c.bf16 %v1866, %v1865
  %v1945 = vpack.c.bf16 %v1868, %v1867
  %v1946 = vpack.c.bf16 %v1870, %v1869
  %v1947 = vpack.c.bf16 %v1872, %v1871
  %v1948 = vpack.c.bf16 %v1874, %v1873
  %v1949 = vpack.c.bf16 %v1876, %v1875
  %v1950 = vpack.c.bf16 %v1878, %v1877
  %v1951 = vpack.c.bf16 %v1880, %v1879
  %v1952 = vpack.c.bf16 %v1882, %v1881
  %v1953 = vpack.c.bf16 %v1884, %v1883
  %v1954 = vpack.c.bf16 %v1886, %v1885
  %v1955 = vpack.c.bf16 %v1888, %v1887
  %v1956 = vpack.c.bf16 %v1890, %v1889
  %v1957 = vpack.c.bf16 %v1892, %v1891
  %v1958 = vpack.c.bf16 %v1894, %v1893
  %v1959 = vpack.c.bf16 %v1896, %v1895
  %v1960 = vpack.c.bf16 %v1898, %v1897
  %v1961 = vpack.c.bf16 %v1900, %v1899
  %v1962 = vpack.c.bf16 %v1902, %v1901
  %v1963 = vpack.c.bf16 %v1904, %v1903
  %v1964 = vpack.c.bf16 %v1906, %v1905
  %v1965 = vpack.c.bf16 %v1908, %v1907
  %v1966 = vpack.c.bf16 %v1910, %v1909
  %v1967 = vpack.c.bf16 %v1912, %v1911
  %2014 = vrot.lane.b32.xlu0 %v1914, 32
  %v2015 = vpop.permute.xlu0 %2014
  %2016 = vrot.lane.b32.xlu0 %v1915, 32
  %v2017 = vpop.permute.xlu0 %2016
  %2018 = vrot.lane.b32.xlu0 %v1916, 32
  %v2019 = vpop.permute.xlu0 %2018
  %2020 = vrot.lane.b32.xlu0 %v1917, 32
  %v2021 = vpop.permute.xlu0 %2020
  %2022 = vrot.lane.b32.xlu0 %v1918, 32
  %v2023 = vpop.permute.xlu0 %2022
  %2024 = vrot.lane.b32.xlu0 %v1919, 32
  %v2025 = vpop.permute.xlu0 %2024
  %2026 = vrot.lane.b32.xlu0 %v1920, 32
  %v2027 = vpop.permute.xlu0 %2026
  %2028 = vrot.lane.b32.xlu0 %v1921, 32
  %v2029 = vpop.permute.xlu0 %2028
  %2030 = vrot.lane.b32.xlu0 %v1922, 32
  %v2031 = vpop.permute.xlu0 %2030
  %2032 = vrot.lane.b32.xlu0 %v1923, 32
  %v2033 = vpop.permute.xlu0 %2032
  %2034 = vrot.lane.b32.xlu0 %v1924, 32
  %v2035 = vpop.permute.xlu0 %2034
  %2036 = vrot.lane.b32.xlu0 %v1925, 32
  %v2037 = vpop.permute.xlu0 %2036
  %2038 = vrot.lane.b32.xlu0 %v1926, 32
  %v2039 = vpop.permute.xlu0 %2038
  %2040 = vrot.lane.b32.xlu0 %v1927, 32
  %v2041 = vpop.permute.xlu0 %2040
  %2042 = vrot.lane.b32.xlu0 %v1928, 32
  %v2043 = vpop.permute.xlu0 %2042
  %2044 = vrot.lane.b32.xlu0 %v1929, 32
  %v2045 = vpop.permute.xlu0 %2044
  %2046 = vrot.lane.b32.xlu0 %v1930, 32
  %v2047 = vpop.permute.xlu0 %2046
  %2048 = vrot.lane.b32.xlu0 %v1931, 32
  %v2049 = vpop.permute.xlu0 %2048
  %2050 = vrot.lane.b32.xlu0 %v1932, 32
  %v2051 = vpop.permute.xlu0 %2050
  %2052 = vrot.lane.b32.xlu0 %v1933, 32
  %v2053 = vpop.permute.xlu0 %2052
  %2054 = vrot.lane.b32.xlu0 %v1934, 32
  %v2055 = vpop.permute.xlu0 %2054
  %2056 = vrot.lane.b32.xlu0 %v1935, 32
  %v2057 = vpop.permute.xlu0 %2056
  %2058 = vrot.lane.b32.xlu0 %v1936, 32
  %v2059 = vpop.permute.xlu0 %2058
  %2060 = vrot.lane.b32.xlu0 %v1937, 32
  %v2061 = vpop.permute.xlu0 %2060
  %2062 = vrot.lane.b32.xlu0 %v1938, 32
  %v2063 = vpop.permute.xlu0 %2062
  %2064 = vrot.lane.b32.xlu0 %v1939, 32
  %v2065 = vpop.permute.xlu0 %2064
  %2066 = vrot.lane.b32.xlu0 %v1940, 32
  %v2067 = vpop.permute.xlu0 %2066
  %2068 = vrot.lane.b32.xlu0 %v1941, 32
  %v2069 = vpop.permute.xlu0 %2068
  %2070 = vrot.lane.b32.xlu0 %v1942, 32
  %v2071 = vpop.permute.xlu0 %2070
  %2072 = vrot.lane.b32.xlu0 %v1943, 32
  %v2073 = vpop.permute.xlu0 %2072
  %2074 = vrot.lane.b32.xlu0 %v1944, 32
  %v2075 = vpop.permute.xlu0 %2074
  %2076 = vrot.lane.b32.xlu0 %v1945, 32
  %v2077 = vpop.permute.xlu0 %2076
  %2078 = vrot.lane.b32.xlu0 %v1946, 32
  %v2079 = vpop.permute.xlu0 %2078
  %2080 = vrot.lane.b32.xlu0 %v1947, 32
  %v2081 = vpop.permute.xlu0 %2080
  %2082 = vrot.lane.b32.xlu0 %v1948, 32
  %v2083 = vpop.permute.xlu0 %2082
  %2084 = vrot.lane.b32.xlu0 %v1949, 32
  %v2085 = vpop.permute.xlu0 %2084
  %2086 = vrot.lane.b32.xlu0 %v1950, 32
  %v2087 = vpop.permute.xlu0 %2086
  %2088 = vrot.lane.b32.xlu0 %v1951, 32
  %v2089 = vpop.permute.xlu0 %2088
  %2090 = vrot.lane.b32.xlu0 %v1952, 32
  %v2091 = vpop.permute.xlu0 %2090
  %2092 = vrot.lane.b32.xlu0 %v1953, 32
  %v2093 = vpop.permute.xlu0 %2092
  %2094 = vrot.lane.b32.xlu0 %v1954, 32
  %v2095 = vpop.permute.xlu0 %2094
  %2096 = vrot.lane.b32.xlu0 %v1955, 32
  %v2097 = vpop.permute.xlu0 %2096
  %2098 = vrot.lane.b32.xlu0 %v1956, 32
  %v2099 = vpop.permute.xlu0 %2098
  %2100 = vrot.lane.b32.xlu0 %v1957, 32
  %v2101 = vpop.permute.xlu0 %2100
  %2102 = vrot.lane.b32.xlu0 %v1958, 32
  %v2103 = vpop.permute.xlu0 %2102
  %2104 = vrot.lane.b32.xlu0 %v1959, 32
  %v2105 = vpop.permute.xlu0 %2104
  %2113 = vrot.lane.b32.xlu0 %v1921, 64
  %v2114 = vpop.permute.xlu0 %2113
  %2115 = vrot.lane.b32.xlu0 %v1922, 64
  %v2116 = vpop.permute.xlu0 %2115
  %2117 = vrot.lane.b32.xlu0 %v1923, 64
  %v2118 = vpop.permute.xlu0 %2117
  %2119 = vrot.lane.b32.xlu0 %v1924, 64
  %v2120 = vpop.permute.xlu0 %2119
  %2121 = vrot.lane.b32.xlu0 %v1925, 64
  %v2122 = vpop.permute.xlu0 %2121
  %2123 = vrot.lane.b32.xlu0 %v1926, 64
  %v2124 = vpop.permute.xlu0 %2123
  %2125 = vrot.lane.b32.xlu0 %v1927, 64
  %v2126 = vpop.permute.xlu0 %2125
  %2127 = vrot.lane.b32.xlu0 %v1928, 64
  %v2128 = vpop.permute.xlu0 %2127
  %2129 = vrot.lane.b32.xlu0 %v1929, 64
  %v2130 = vpop.permute.xlu0 %2129
  %2131 = vrot.lane.b32.xlu0 %v1930, 64
  %v2132 = vpop.permute.xlu0 %2131
  %2133 = vrot.lane.b32.xlu0 %v1931, 64
  %v2134 = vpop.permute.xlu0 %2133
  %2135 = vrot.lane.b32.xlu0 %v1932, 64
  %v2136 = vpop.permute.xlu0 %2135
  %2137 = vrot.lane.b32.xlu0 %v1933, 64
  %v2138 = vpop.permute.xlu0 %2137
  %2139 = vrot.lane.b32.xlu0 %v1934, 64
  %v2140 = vpop.permute.xlu0 %2139
  %2141 = vrot.lane.b32.xlu0 %v1935, 64
  %v2142 = vpop.permute.xlu0 %2141
  %2143 = vrot.lane.b32.xlu0 %v1936, 64
  %v2144 = vpop.permute.xlu0 %2143
  %2145 = vrot.lane.b32.xlu0 %v1937, 64
  %v2146 = vpop.permute.xlu0 %2145
  %2147 = vrot.lane.b32.xlu0 %v1938, 64
  %v2148 = vpop.permute.xlu0 %2147
  %2149 = vrot.lane.b32.xlu0 %v1939, 64
  %v2150 = vpop.permute.xlu0 %2149
  %2151 = vrot.lane.b32.xlu0 %v1940, 64
  %v2152 = vpop.permute.xlu0 %2151
  %2153 = vrot.lane.b32.xlu0 %v1941, 64
  %v2154 = vpop.permute.xlu0 %2153
  %2155 = vrot.lane.b32.xlu0 %v1942, 64
  %v2156 = vpop.permute.xlu0 %2155
  %2157 = vrot.lane.b32.xlu0 %v1943, 64
  %v2158 = vpop.permute.xlu0 %2157
  %2159 = vrot.lane.b32.xlu0 %v1944, 64
  %v2160 = vpop.permute.xlu0 %2159
  %2161 = vrot.lane.b32.xlu0 %v1945, 64
  %v2162 = vpop.permute.xlu0 %2161
  %2163 = vrot.lane.b32.xlu0 %v1946, 64
  %v2164 = vpop.permute.xlu0 %2163
  %2165 = vrot.lane.b32.xlu0 %v1947, 64
  %v2166 = vpop.permute.xlu0 %2165
  %2167 = vrot.lane.b32.xlu0 %v1948, 64
  %v2168 = vpop.permute.xlu0 %2167
  %2169 = vrot.lane.b32.xlu0 %v1949, 64
  %v2170 = vpop.permute.xlu0 %2169
  %2171 = vrot.lane.b32.xlu0 %v1950, 64
  %v2172 = vpop.permute.xlu0 %2171
  %2173 = vrot.lane.b32.xlu0 %v1951, 64
  %v2174 = vpop.permute.xlu0 %2173
  %2175 = vrot.lane.b32.xlu0 %v1952, 64
  %v2176 = vpop.permute.xlu0 %2175
  %2177 = vrot.lane.b32.xlu0 %v1953, 64
  %v2178 = vpop.permute.xlu0 %2177
  %2179 = vrot.lane.b32.xlu0 %v1954, 64
  %v2180 = vpop.permute.xlu0 %2179
  %2181 = vrot.lane.b32.xlu0 %v1955, 64
  %v2182 = vpop.permute.xlu0 %2181
  %2183 = vrot.lane.b32.xlu0 %v1956, 64
  %v2184 = vpop.permute.xlu0 %2183
  %2185 = vrot.lane.b32.xlu0 %v1957, 64
  %v2186 = vpop.permute.xlu0 %2185
  %2187 = vrot.lane.b32.xlu0 %v1958, 64
  %v2188 = vpop.permute.xlu0 %2187
  %2189 = vrot.lane.b32.xlu0 %v1959, 64
  %v2190 = vpop.permute.xlu0 %2189
  %2191 = vrot.lane.b32.xlu0 %v1960, 64
  %v2192 = vpop.permute.xlu0 %2191
  %2193 = vrot.lane.b32.xlu0 %v1961, 64
  %v2194 = vpop.permute.xlu0 %2193
  %2195 = vrot.lane.b32.xlu0 %v1962, 64
  %v2196 = vpop.permute.xlu0 %2195
  %2197 = vrot.lane.b32.xlu0 %v1963, 64
  %v2198 = vpop.permute.xlu0 %2197
  %2199 = vrot.lane.b32.xlu0 %v1964, 64
  %v2200 = vpop.permute.xlu0 %2199
  %2201 = vrot.lane.b32.xlu0 %v1965, 64
  %v2202 = vpop.permute.xlu0 %2201
  %2203 = vrot.lane.b32.xlu0 %v1966, 64
  %v2204 = vpop.permute.xlu0 %2203
  %2206 = vrot.lane.b32.xlu0 %v1922, 96
  %v2207 = vpop.permute.xlu0 %2206
  %2208 = vrot.lane.b32.xlu0 %v1923, 96
  %v2209 = vpop.permute.xlu0 %2208
  %2210 = vrot.lane.b32.xlu0 %v1924, 96
  %v2211 = vpop.permute.xlu0 %2210
  %2212 = vrot.lane.b32.xlu0 %v1925, 96
  %v2213 = vpop.permute.xlu0 %2212
  %2214 = vrot.lane.b32.xlu0 %v1926, 96
  %v2215 = vpop.permute.xlu0 %2214
  %2216 = vrot.lane.b32.xlu0 %v1927, 96
  %v2217 = vpop.permute.xlu0 %2216
  %2218 = vrot.lane.b32.xlu0 %v1928, 96
  %v2219 = vpop.permute.xlu0 %2218
  %2220 = vrot.lane.b32.xlu0 %v1929, 96
  %v2221 = vpop.permute.xlu0 %2220
  %2222 = vrot.lane.b32.xlu0 %v1930, 96
  %v2223 = vpop.permute.xlu0 %2222
  %2224 = vrot.lane.b32.xlu0 %v1931, 96
  %v2225 = vpop.permute.xlu0 %2224
  %2226 = vrot.lane.b32.xlu0 %v1932, 96
  %v2227 = vpop.permute.xlu0 %2226
  %2228 = vrot.lane.b32.xlu0 %v1933, 96
  %v2229 = vpop.permute.xlu0 %2228
  %2230 = vrot.lane.b32.xlu0 %v1934, 96
  %v2231 = vpop.permute.xlu0 %2230
  %2232 = vrot.lane.b32.xlu0 %v1935, 96
  %v2233 = vpop.permute.xlu0 %2232
  %2234 = vrot.lane.b32.xlu0 %v1936, 96
  %v2235 = vpop.permute.xlu0 %2234
  %2236 = vrot.lane.b32.xlu0 %v1937, 96
  %v2237 = vpop.permute.xlu0 %2236
  %2238 = vrot.lane.b32.xlu0 %v1938, 96
  %v2239 = vpop.permute.xlu0 %2238
  %2240 = vrot.lane.b32.xlu0 %v1939, 96
  %v2241 = vpop.permute.xlu0 %2240
  %2242 = vrot.lane.b32.xlu0 %v1940, 96
  %v2243 = vpop.permute.xlu0 %2242
  %2244 = vrot.lane.b32.xlu0 %v1941, 96
  %v2245 = vpop.permute.xlu0 %2244
  %2246 = vrot.lane.b32.xlu0 %v1942, 96
  %v2247 = vpop.permute.xlu0 %2246
  %2248 = vrot.lane.b32.xlu0 %v1943, 96
  %v2249 = vpop.permute.xlu0 %2248
  %2250 = vrot.lane.b32.xlu0 %v1944, 96
  %v2251 = vpop.permute.xlu0 %2250
  %2252 = vrot.lane.b32.xlu0 %v1945, 96
  %v2253 = vpop.permute.xlu0 %2252
  %2254 = vrot.lane.b32.xlu0 %v1946, 96
  %v2255 = vpop.permute.xlu0 %2254
  %2256 = vrot.lane.b32.xlu0 %v1947, 96
  %v2257 = vpop.permute.xlu0 %2256
  %2258 = vrot.lane.b32.xlu0 %v1948, 96
  %v2259 = vpop.permute.xlu0 %2258
  %2260 = vrot.lane.b32.xlu0 %v1949, 96
  %v2261 = vpop.permute.xlu0 %2260
  %2262 = vrot.lane.b32.xlu0 %v1950, 96
  %v2263 = vpop.permute.xlu0 %2262
  %2264 = vrot.lane.b32.xlu0 %v1951, 96
  %v2265 = vpop.permute.xlu0 %2264
  %2266 = vrot.lane.b32.xlu0 %v1952, 96
  %v2267 = vpop.permute.xlu0 %2266
  %2268 = vrot.lane.b32.xlu0 %v1953, 96
  %v2269 = vpop.permute.xlu0 %2268
  %2270 = vrot.lane.b32.xlu0 %v1954, 96
  %v2271 = vpop.permute.xlu0 %2270
  %2272 = vrot.lane.b32.xlu0 %v1955, 96
  %v2273 = vpop.permute.xlu0 %2272
  %2274 = vrot.lane.b32.xlu0 %v1956, 96
  %v2275 = vpop.permute.xlu0 %2274
  %2276 = vrot.lane.b32.xlu0 %v1957, 96
  %v2277 = vpop.permute.xlu0 %2276
  %2278 = vrot.lane.b32.xlu0 %v1958, 96
  %v2279 = vpop.permute.xlu0 %2278
  %2280 = vrot.lane.b32.xlu0 %v1959, 96
  %v2281 = vpop.permute.xlu0 %2280
  %2282 = vrot.lane.b32.xlu0 %v1960, 96
  %v2283 = vpop.permute.xlu0 %2282
  %2284 = vrot.lane.b32.xlu0 %v1961, 96
  %v2285 = vpop.permute.xlu0 %2284
  %2286 = vrot.lane.b32.xlu0 %v1962, 96
  %v2287 = vpop.permute.xlu0 %2286
  %2288 = vrot.lane.b32.xlu0 %v1963, 96
  %v2289 = vpop.permute.xlu0 %2288
  %2290 = vrot.lane.b32.xlu0 %v1964, 96
  %v2291 = vpop.permute.xlu0 %2290
  %2292 = vrot.lane.b32.xlu0 %v1965, 96
  %v2293 = vpop.permute.xlu0 %2292
  %2294 = vrot.lane.b32.xlu0 %v1966, 96
  %v2295 = vpop.permute.xlu0 %2294
  %2296 = vrot.lane.b32.xlu0 %v1967, 96
  %v2297 = vpop.permute.xlu0 %2296
  %vm2298 = vcmask 261120
  %v2301 = vsel %vm2298, %v1913, %v2015
  %v2304 = vsel %vm2298, %v1914, %v2017
  %v2307 = vsel %vm2298, %v1915, %v2019
  %v2310 = vsel %vm2298, %v1916, %v2021
  %v2313 = vsel %vm2298, %v1917, %v2023
  %v2316 = vsel %vm2298, %v1918, %v2025
  %v2319 = vsel %vm2298, %v1919, %v2027
  %v2322 = vsel %vm2298, %v1920, %v2029
  %v2325 = vsel %vm2298, %v1921, %v2031
  %v2328 = vsel %vm2298, %v1922, %v2033
  %v2331 = vsel %vm2298, %v1923, %v2035
  %v2334 = vsel %vm2298, %v1924, %v2037
  %v2337 = vsel %vm2298, %v1925, %v2039
  %v2340 = vsel %vm2298, %v1926, %v2041
  %v2343 = vsel %vm2298, %v1927, %v2043
  %v2346 = vsel %vm2298, %v1928, %v2045
  %v2349 = vsel %vm2298, %v1929, %v2047
  %v2352 = vsel %vm2298, %v1930, %v2049
  %v2355 = vsel %vm2298, %v1931, %v2051
  %v2358 = vsel %vm2298, %v1932, %v2053
  %v2361 = vsel %vm2298, %v1933, %v2055
  %v2364 = vsel %vm2298, %v1934, %v2057
  %v2367 = vsel %vm2298, %v1935, %v2059
  %v2370 = vsel %vm2298, %v1936, %v2061
  %v2373 = vsel %vm2298, %v1937, %v2063
  %v2376 = vsel %vm2298, %v1938, %v2065
  %v2379 = vsel %vm2298, %v1939, %v2067
  %v2382 = vsel %vm2298, %v1940, %v2069
  %v2385 = vsel %vm2298, %v1941, %v2071
  %v2388 = vsel %vm2298, %v1942, %v2073
  %v2391 = vsel %vm2298, %v1943, %v2075
  %v2394 = vsel %vm2298, %v1944, %v2077
  %v2397 = vsel %vm2298, %v1945, %v2079
  %v2400 = vsel %vm2298, %v1946, %v2081
  %v2403 = vsel %vm2298, %v1947, %v2083
  %v2406 = vsel %vm2298, %v1948, %v2085
  %v2409 = vsel %vm2298, %v1949, %v2087
  %v2412 = vsel %vm2298, %v1950, %v2089
  %v2415 = vsel %vm2298, %v1951, %v2091
  %v2418 = vsel %vm2298, %v1952, %v2093
  %v2421 = vsel %vm2298, %v1953, %v2095
  %v2424 = vsel %vm2298, %v1954, %v2097
  %v2427 = vsel %vm2298, %v1955, %v2099
  %v2430 = vsel %vm2298, %v1956, %v2101
  %v2433 = vsel %vm2298, %v1957, %v2103
  %v2436 = vsel %vm2298, %v1958, %v2105
  %vm2437 = vcmask 523264
  %v2439 = vsel %vm2437, %v2301, %v2114
  %v2441 = vsel %vm2437, %v2304, %v2116
  %v2443 = vsel %vm2437, %v2307, %v2118
  %v2445 = vsel %vm2437, %v2310, %v2120
  %v2447 = vsel %vm2437, %v2313, %v2122
  %v2449 = vsel %vm2437, %v2316, %v2124
  %v2451 = vsel %vm2437, %v2319, %v2126
  %v2453 = vsel %vm2437, %v2322, %v2128
  %v2455 = vsel %vm2437, %v2325, %v2130
  %v2457 = vsel %vm2437, %v2328, %v2132
  %v2459 = vsel %vm2437, %v2331, %v2134
  %v2461 = vsel %vm2437, %v2334, %v2136
  %v2463 = vsel %vm2437, %v2337, %v2138
  %v2465 = vsel %vm2437, %v2340, %v2140
  %v2467 = vsel %vm2437, %v2343, %v2142
  %v2469 = vsel %vm2437, %v2346, %v2144
  %v2471 = vsel %vm2437, %v2349, %v2146
  %v2473 = vsel %vm2437, %v2352, %v2148
  %v2475 = vsel %vm2437, %v2355, %v2150
  %v2477 = vsel %vm2437, %v2358, %v2152
  %v2479 = vsel %vm2437, %v2361, %v2154
  %v2481 = vsel %vm2437, %v2364, %v2156
  %v2483 = vsel %vm2437, %v2367, %v2158
  %v2485 = vsel %vm2437, %v2370, %v2160
  %v2487 = vsel %vm2437, %v2373, %v2162
  %v2489 = vsel %vm2437, %v2376, %v2164
  %v2491 = vsel %vm2437, %v2379, %v2166
  %v2493 = vsel %vm2437, %v2382, %v2168
  %v2495 = vsel %vm2437, %v2385, %v2170
  %v2497 = vsel %vm2437, %v2388, %v2172
  %v2499 = vsel %vm2437, %v2391, %v2174
  %v2501 = vsel %vm2437, %v2394, %v2176
  %v2503 = vsel %vm2437, %v2397, %v2178
  %v2505 = vsel %vm2437, %v2400, %v2180
  %v2507 = vsel %vm2437, %v2403, %v2182
  %v2509 = vsel %vm2437, %v2406, %v2184
  %v2511 = vsel %vm2437, %v2409, %v2186
  %v2513 = vsel %vm2437, %v2412, %v2188
  %v2515 = vsel %vm2437, %v2415, %v2190
  %v2517 = vsel %vm2437, %v2418, %v2192
  %v2519 = vsel %vm2437, %v2421, %v2194
  %v2521 = vsel %vm2437, %v2424, %v2196
  %v2523 = vsel %vm2437, %v2427, %v2198
  %v2525 = vsel %vm2437, %v2430, %v2200
  %v2527 = vsel %vm2437, %v2433, %v2202
  %v2529 = vsel %vm2437, %v2436, %v2204
  %vm2530 = vcmask 785408
  %v2532 = vsel %vm2530, %v2439, %v2207
  %v2535 = vsel %vm2530, %v2441, %v2209
  %v2538 = vsel %vm2530, %v2443, %v2211
  %v2541 = vsel %vm2530, %v2445, %v2213
  %v2544 = vsel %vm2530, %v2447, %v2215
  %v2547 = vsel %vm2530, %v2449, %v2217
  %v2550 = vsel %vm2530, %v2451, %v2219
  %v2553 = vsel %vm2530, %v2453, %v2221
  %v2556 = vsel %vm2530, %v2455, %v2223
  %v2559 = vsel %vm2530, %v2457, %v2225
  %v2562 = vsel %vm2530, %v2459, %v2227
  %v2565 = vsel %vm2530, %v2461, %v2229
  %v2568 = vsel %vm2530, %v2463, %v2231
  %v2571 = vsel %vm2530, %v2465, %v2233
  %v2574 = vsel %vm2530, %v2467, %v2235
  %v2577 = vsel %vm2530, %v2469, %v2237
  %v2580 = vsel %vm2530, %v2471, %v2239
  %v2583 = vsel %vm2530, %v2473, %v2241
  %v2586 = vsel %vm2530, %v2475, %v2243
  %v2589 = vsel %vm2530, %v2477, %v2245
  %v2592 = vsel %vm2530, %v2479, %v2247
  %v2595 = vsel %vm2530, %v2481, %v2249
  %v2598 = vsel %vm2530, %v2483, %v2251
  %v2601 = vsel %vm2530, %v2485, %v2253
  %v2604 = vsel %vm2530, %v2487, %v2255
  %v2607 = vsel %vm2530, %v2489, %v2257
  %v2610 = vsel %vm2530, %v2491, %v2259
  %v2613 = vsel %vm2530, %v2493, %v2261
  %v2616 = vsel %vm2530, %v2495, %v2263
  %v2619 = vsel %vm2530, %v2497, %v2265
  %v2622 = vsel %vm2530, %v2499, %v2267
  %v2625 = vsel %vm2530, %v2501, %v2269
  %v2628 = vsel %vm2530, %v2503, %v2271
  %v2631 = vsel %vm2530, %v2505, %v2273
  %v2634 = vsel %vm2530, %v2507, %v2275
  %v2637 = vsel %vm2530, %v2509, %v2277
  %v2640 = vsel %vm2530, %v2511, %v2279
  %v2643 = vsel %vm2530, %v2513, %v2281
  %v2646 = vsel %vm2530, %v2515, %v2283
  %v2649 = vsel %vm2530, %v2517, %v2285
  %v2652 = vsel %vm2530, %v2519, %v2287
  %v2655 = vsel %vm2530, %v2521, %v2289
  %v2658 = vsel %vm2530, %v2523, %v2291
  %v2661 = vsel %vm2530, %v2525, %v2293
  %v2664 = vsel %vm2530, %v2527, %v2295
  %v2667 = vsel %vm2530, %v2529, %v2297
  %v2669 = vld [vmem:[%s3] sm:$0xf]
  %v2670 = vld [vmem:[%s3 + $0x4] sm:$0xf]
  %v2671 = vld [vmem:[%s3 + $0x8] sm:$0xf]
  %v2672 = vld [vmem:[%s3 + $0xc] sm:$0xf]
  %v2673 = vld [vmem:[%s3 + $0x10] sm:$0xf]
  %v2674 = vld [vmem:[%s3 + $0x14] sm:$0xf]
  %v2675 = vld [vmem:[%s3 + $0x18] sm:$0xf]
  %v2676 = vld [vmem:[%s3 + $0x1c] sm:$0xf]
  %v2677 = vld [vmem:[%s3 + $0x20] sm:$0xf]
  %v2678 = vld [vmem:[%s3 + $0x24] sm:$0xf]
  %v2679 = vld [vmem:[%s3 + $0x28] sm:$0xf]
  %v2680 = vld [vmem:[%s3 + $0x2c] sm:$0xf]
  %v2681 = vld [vmem:[%s3 + $0x30] sm:$0xf]
  %v2682 = vld [vmem:[%s3 + $0x34] sm:$0xf]
  %v2683 = vld [vmem:[%s3 + $0x38] sm:$0xf]
  %v2684 = vld [vmem:[%s3 + $0x3c] sm:$0xf]
  %v2685 = vld [vmem:[%s4] sm:$0x1]
  %v2687 = vlaneseq
  %v2688 = vshrl.u32 %v2687, 7
  %v2689 = vsub.s32 0, %v2688
  %v2690 = vrot.slane %v2685, %v2689
  %v2708 = vunpack.c.l.b16 %v2669
  %v2709 = vunpack.c.l.b16 %v2670
  %v2710 = vunpack.c.l.b16 %v2671
  %v2711 = vunpack.c.l.b16 %v2672
  %v2712 = vunpack.c.l.b16 %v2673
  %v2713 = vunpack.c.l.b16 %v2674
  %v2714 = vunpack.c.l.b16 %v2675
  %v2715 = vunpack.c.l.b16 %v2676
  %v2716 = vunpack.c.l.b16 %v2677
  %v2717 = vunpack.c.l.b16 %v2678
  %v2718 = vunpack.c.l.b16 %v2679
  %v2719 = vunpack.c.l.b16 %v2680
  %v2720 = vunpack.c.l.b16 %v2681
  %v2721 = vunpack.c.l.b16 %v2682
  %v2722 = vunpack.c.l.b16 %v2683
  %v2723 = vunpack.c.l.b16 %v2684
  %v2724 = vpack.c.b16 %v2709, %v2708
  %v2725 = vpack.c.b16 %v2711, %v2710
  %v2726 = vpack.c.b16 %v2713, %v2712
  %v2727 = vpack.c.b16 %v2715, %v2714
  %v2728 = vpack.c.b16 %v2717, %v2716
  %v2729 = vpack.c.b16 %v2719, %v2718
  %v2730 = vpack.c.b16 %v2721, %v2720
  %v2731 = vpack.c.b16 %v2723, %v2722
  %2740 = vmatprep.subr.bf16.mxu0 0
  %2741 = vmatpush1.bf16.msra.mxu0 %v2724
  %2742 = vmatprep.subr.bf16.mxu0 0
  %2743 = vmatpush1.bf16.msra.mxu0 %v2725
  %2744 = vmatprep.subr.bf16.mxu0 0
  %2745 = vmatpush1.bf16.msra.mxu0 %v2726
  %2746 = vmatprep.subr.bf16.mxu0 0
  %2747 = vmatpush1.bf16.msra.mxu0 %v2727
  %2748 = vmatprep.subr.bf16.mxu0 0
  %2749 = vmatpush1.bf16.msra.mxu0 %v2728
  %2750 = vmatprep.subr.bf16.mxu0 0
  %2751 = vmatpush1.bf16.msra.mxu0 %v2729
  %2752 = vmatprep.subr.bf16.mxu0 0
  %2753 = vmatpush1.bf16.msra.mxu0 %v2730
  %2754 = vmatprep.subr.bf16.mxu0 0
  %2755 = vmatpush1.bf16.msra.mxu0 %v2731
  %2756 = vmatprep.subr.bf16.mxu0 0
  %2757 = vmatpush1.bf16.msra.mxu0 0
  %2758 = vmatprep.subr.bf16.mxu0 0
  %2759 = vmatpush1.bf16.msra.mxu0 0
  %2760 = vmatprep.subr.bf16.mxu0 0
  %2761 = vmatpush1.bf16.msra.mxu0 0
  %2762 = vmatprep.subr.bf16.mxu0 0
  %2763 = vmatpush1.bf16.msra.mxu0 0
  %2764 = vmatprep.subr.bf16.mxu0 0
  %2765 = vmatpush1.bf16.msra.mxu0 0
  %2766 = vmatprep.subr.bf16.mxu0 0
  %2767 = vmatpush1.bf16.msra.mxu0 0
  %2768 = vmatprep.subr.bf16.mxu0 0
  %2769 = vmatpush1.bf16.msra.mxu0 0
  %2770 = vmatprep.subr.bf16.mxu0 0
  %2771 = vmatpush1.bf16.msra.mxu0 0
  %2772 = vmatprep.mubr.bf16.mxu0 0
  %2773 = vmatmul.mubr.bf16.gmra.mrb[0].mxu0 %v2532
  %v2774 = vpop.f32.mrb[0].mxu0
  %v2775 = vadd.f32 %v2690, %v2774
  %v2776 = vpop.f32.mrb[0].mxu0
  %v2777 = vpop.f32.mrb[0].mxu0
  %v2778 = vadd.f32 %v2690, %v2777
  %v2779 = vpop.f32.mrb[0].mxu0
  %2780 = vmatprep.mubr.bf16.mxu0 0
  %2781 = vmatmul.mubr.bf16.gmra.mrb[0].mxu0 %v2535
  %v2782 = vpop.f32.mrb[0].mxu0
  %v2783 = vadd.f32 %v2690, %v2782
  %v2784 = vpop.f32.mrb[0].mxu0
  %v2785 = vpop.f32.mrb[0].mxu0
  %v2786 = vadd.f32 %v2690, %v2785
  %v2787 = vpop.f32.mrb[0].mxu0
  %2788 = vmatprep.mubr.bf16.mxu0 0
  %2789 = vmatmul.mubr.bf16.gmra.mrb[0].mxu0 %v2538
  %v2790 = vpop.f32.mrb[0].mxu0
  %v2791 = vadd.f32 %v2690, %v2790
  %v2792 = vpop.f32.mrb[0].mxu0
  %v2793 = vpop.f32.mrb[0].mxu0
  %v2794 = vadd.f32 %v2690, %v2793
  %v2795 = vpop.f32.mrb[0].mxu0
  %2796 = vmatprep.mubr.bf16.mxu0 0
  %2797 = vmatmul.mubr.bf16.gmra.mrb[0].mxu0 %v2541
  %v2798 = vpop.f32.mrb[0].mxu0
  %v2799 = vadd.f32 %v2690, %v2798
  %v2800 = vpop.f32.mrb[0].mxu0
  %v2801 = vpop.f32.mrb[0].mxu0
  %v2802 = vadd.f32 %v2690, %v2801
  %v2803 = vpop.f32.mrb[0].mxu0
  %2804 = vmatprep.mubr.bf16.mxu0 0
  %2805 = vmatmul.mubr.bf16.gmra.mrb[0].mxu0 %v2544
  %v2806 = vpop.f32.mrb[0].mxu0
  %v2807 = vadd.f32 %v2690, %v2806
  %v2808 = vpop.f32.mrb[0].mxu0
  %v2809 = vpop.f32.mrb[0].mxu0
  %v2810 = vadd.f32 %v2690, %v2809
  %v2811 = vpop.f32.mrb[0].mxu0
  %2812 = vmatprep.mubr.bf16.mxu0 0
  %2813 = vmatmul.mubr.bf16.gmra.mrb[0].mxu0 %v2547
  %v2814 = vpop.f32.mrb[0].mxu0
  %v2815 = vadd.f32 %v2690, %v2814
  %v2816 = vpop.f32.mrb[0].mxu0
  %v2817 = vpop.f32.mrb[0].mxu0
  %v2818 = vadd.f32 %v2690, %v2817
  %v2819 = vpop.f32.mrb[0].mxu0
  %2820 = vmatprep.mubr.bf16.mxu0 0
  %2821 = vmatmul.mubr.bf16.gmra.mrb[0].mxu0 %v2550
  %v2822 = vpop.f32.mrb[0].mxu0
  %v2823 = vpop.f32.mrb[0].mxu0
  %v2824 = vpop.f32.mrb[0].mxu0
  %v2825 = vpop.f32.mrb[0].mxu0
  %2826 = vmatprep.mubr.bf16.mxu0 0
  %2827 = vmatmul.mubr.bf16.gmra.mrb[0].mxu0 %v2553
  %v2828 = vpop.f32.mrb[0].mxu0
  %v2829 = vpop.f32.mrb[0].mxu0
  %v2830 = vpop.f32.mrb[0].mxu0
  %v2831 = vpop.f32.mrb[0].mxu0
  %2832 = vmatprep.mubr.bf16.mxu0 0
  %2833 = vmatmul.mubr.bf16.gmra.mrb[0].mxu0 %v2556
  %v2834 = vpop.f32.mrb[0].mxu0
  %v2835 = vadd.f32 %v2690, %v2834
  %v2836 = vpop.f32.mrb[0].mxu0
  %v2837 = vpop.f32.mrb[0].mxu0
  %v2838 = vadd.f32 %v2690, %v2837
  %v2839 = vpop.f32.mrb[0].mxu0
  %2840 = vmatprep.mubr.bf16.mxu0 0
  %2841 = vmatmul.mubr.bf16.gmra.mrb[0].mxu0 %v2559
  %v2842 = vpop.f32.mrb[0].mxu0
  %v2843 = vadd.f32 %v2690, %v2842
  %v2844 = vpop.f32.mrb[0].mxu0
  %v2845 = vpop.f32.mrb[0].mxu0
  %v2846 = vadd.f32 %v2690, %v2845
  %v2847 = vpop.f32.mrb[0].mxu0
  %2848 = vmatprep.mubr.bf16.mxu0 0
  %2849 = vmatmul.mubr.bf16.gmra.mrb[0].mxu0 %v2562
  %v2850 = vpop.f32.mrb[0].mxu0
  %v2851 = vadd.f32 %v2690, %v2850
  %v2852 = vpop.f32.mrb[0].mxu0
  %v2853 = vpop.f32.mrb[0].mxu0
  %v2854 = vadd.f32 %v2690, %v2853
  %v2855 = vpop.f32.mrb[0].mxu0
  %2856 = vmatprep.mubr.bf16.mxu0 0
  %2857 = vmatmul.mubr.bf16.gmra.mrb[0].mxu0 %v2565
  %v2858 = vpop.f32.mrb[0].mxu0
  %v2859 = vadd.f32 %v2690, %v2858
  %v2860 = vpop.f32.mrb[0].mxu0
  %v2861 = vpop.f32.mrb[0].mxu0
  %v2862 = vadd.f32 %v2690, %v2861
  %v2863 = vpop.f32.mrb[0].mxu0
  %2864 = vmatprep.mubr.bf16.mxu0 0
  %2865 = vmatmul.mubr.bf16.gmra.mrb[0].mxu0 %v2568
  %v2866 = vpop.f32.mrb[0].mxu0
  %v2867 = vadd.f32 %v2690, %v2866
  %v2868 = vpop.f32.mrb[0].mxu0
  %v2869 = vpop.f32.mrb[0].mxu0
  %v2870 = vadd.f32 %v2690, %v2869
  %v2871 = vpop.f32.mrb[0].mxu0
  %2872 = vmatprep.mubr.bf16.mxu0 0
  %2873 = vmatmul.mubr.bf16.gmra.mrb[0].mxu0 %v2571
  %v2874 = vpop.f32.mrb[0].mxu0
  %v2875 = vadd.f32 %v2690, %v2874
  %v2876 = vpop.f32.mrb[0].mxu0
  %v2877 = vpop.f32.mrb[0].mxu0
  %v2878 = vadd.f32 %v2690, %v2877
  %v2879 = vpop.f32.mrb[0].mxu0
  %2880 = vmatprep.mubr.bf16.mxu0 0
  %2881 = vmatmul.mubr.bf16.gmra.mrb[0].mxu0 %v2574
  %v2882 = vpop.f32.mrb[0].mxu0
  %v2883 = vpop.f32.mrb[0].mxu0
  %v2884 = vpop.f32.mrb[0].mxu0
  %v2885 = vpop.f32.mrb[0].mxu0
  %2886 = vmatprep.mubr.bf16.mxu0 0
  %2887 = vmatmul.mubr.bf16.gmra.mrb[0].mxu0 %v2577
  %v2888 = vpop.f32.mrb[0].mxu0
  %v2889 = vpop.f32.mrb[0].mxu0
  %v2890 = vpop.f32.mrb[0].mxu0
  %v2891 = vpop.f32.mrb[0].mxu0
  %2892 = vmatprep.mubr.bf16.mxu0 0
  %2893 = vmatmul.mubr.bf16.gmra.mrb[0].mxu0 %v2580
  %v2894 = vpop.f32.mrb[0].mxu0
  %v2895 = vadd.f32 %v2690, %v2894
  %v2896 = vpop.f32.mrb[0].mxu0
  %v2897 = vpop.f32.mrb[0].mxu0
  %v2898 = vadd.f32 %v2690, %v2897
  %v2899 = vpop.f32.mrb[0].mxu0
  %2900 = vmatprep.mubr.bf16.mxu0 0
  %2901 = vmatmul.mubr.bf16.gmra.mrb[0].mxu0 %v2583
  %v2902 = vpop.f32.mrb[0].mxu0
  %v2903 = vadd.f32 %v2690, %v2902
  %v2904 = vpop.f32.mrb[0].mxu0
  %v2905 = vpop.f32.mrb[0].mxu0
  %v2906 = vadd.f32 %v2690, %v2905
  %v2907 = vpop.f32.mrb[0].mxu0
  %2908 = vmatprep.mubr.bf16.mxu0 0
  %2909 = vmatmul.mubr.bf16.gmra.mrb[0].mxu0 %v2586
  %v2910 = vpop.f32.mrb[0].mxu0
  %v2911 = vadd.f32 %v2690, %v2910
  %v2912 = vpop.f32.mrb[0].mxu0
  %v2913 = vpop.f32.mrb[0].mxu0
  %v2914 = vadd.f32 %v2690, %v2913
  %v2915 = vpop.f32.mrb[0].mxu0
  %2916 = vmatprep.mubr.bf16.mxu0 0
  %2917 = vmatmul.mubr.bf16.gmra.mrb[0].mxu0 %v2589
  %v2918 = vpop.f32.mrb[0].mxu0
  %v2919 = vadd.f32 %v2690, %v2918
  %v2920 = vpop.f32.mrb[0].mxu0
  %v2921 = vpop.f32.mrb[0].mxu0
  %v2922 = vadd.f32 %v2690, %v2921
  %v2923 = vpop.f32.mrb[0].mxu0
  %2924 = vmatprep.mubr.bf16.mxu0 0
  %2925 = vmatmul.mubr.bf16.gmra.mrb[0].mxu0 %v2592
  %v2926 = vpop.f32.mrb[0].mxu0
  %v2927 = vadd.f32 %v2690, %v2926
  %v2928 = vpop.f32.mrb[0].mxu0
  %v2929 = vpop.f32.mrb[0].mxu0
  %v2930 = vadd.f32 %v2690, %v2929
  %v2931 = vpop.f32.mrb[0].mxu0
  %2932 = vmatprep.mubr.bf16.mxu0 0
  %2933 = vmatmul.mubr.bf16.gmra.mrb[0].mxu0 %v2595
  %v2934 = vpop.f32.mrb[0].mxu0
  %v2935 = vadd.f32 %v2690, %v2934
  %v2936 = vpop.f32.mrb[0].mxu0
  %v2937 = vpop.f32.mrb[0].mxu0
  %v2938 = vadd.f32 %v2690, %v2937
  %v2939 = vpop.f32.mrb[0].mxu0
  %2940 = vmatprep.mubr.bf16.mxu0 0
  %2941 = vmatmul.mubr.bf16.gmra.mrb[0].mxu0 %v2598
  %v2942 = vpop.f32.mrb[0].mxu0
  %v2943 = vpop.f32.mrb[0].mxu0
  %v2944 = vpop.f32.mrb[0].mxu0
  %v2945 = vpop.f32.mrb[0].mxu0
  %2946 = vmatprep.mubr.bf16.mxu0 0
  %2947 = vmatmul.mubr.bf16.gmra.mrb[0].mxu0 %v2601
  %v2948 = vpop.f32.mrb[0].mxu0
  %v2949 = vpop.f32.mrb[0].mxu0
  %v2950 = vpop.f32.mrb[0].mxu0
  %v2951 = vpop.f32.mrb[0].mxu0
  %2952 = vmatprep.mubr.bf16.mxu0 0
  %2953 = vmatmul.mubr.bf16.gmra.mrb[0].mxu0 %v2604
  %v2954 = vpop.f32.mrb[0].mxu0
  %v2955 = vadd.f32 %v2690, %v2954
  %v2956 = vpop.f32.mrb[0].mxu0
  %v2957 = vpop.f32.mrb[0].mxu0
  %v2958 = vadd.f32 %v2690, %v2957
  %v2959 = vpop.f32.mrb[0].mxu0
  %2960 = vmatprep.mubr.bf16.mxu0 0
  %2961 = vmatmul.mubr.bf16.gmra.mrb[0].mxu0 %v2607
  %v2962 = vpop.f32.mrb[0].mxu0
  %v2963 = vadd.f32 %v2690, %v2962
  %v2964 = vpop.f32.mrb[0].mxu0
  %v2965 = vpop.f32.mrb[0].mxu0
  %v2966 = vadd.f32 %v2690, %v2965
  %v2967 = vpop.f32.mrb[0].mxu0
  %2968 = vmatprep.mubr.bf16.mxu0 0
  %2969 = vmatmul.mubr.bf16.gmra.mrb[0].mxu0 %v2610
  %v2970 = vpop.f32.mrb[0].mxu0
  %v2971 = vadd.f32 %v2690, %v2970
  %v2972 = vpop.f32.mrb[0].mxu0
  %v2973 = vpop.f32.mrb[0].mxu0
  %v2974 = vadd.f32 %v2690, %v2973
  %v2975 = vpop.f32.mrb[0].mxu0
  %2976 = vmatprep.mubr.bf16.mxu0 0
  %2977 = vmatmul.mubr.bf16.gmra.mrb[0].mxu0 %v2613
  %v2978 = vpop.f32.mrb[0].mxu0
  %v2979 = vadd.f32 %v2690, %v2978
  %v2980 = vpop.f32.mrb[0].mxu0
  %v2981 = vpop.f32.mrb[0].mxu0
  %v2982 = vadd.f32 %v2690, %v2981
  %v2983 = vpop.f32.mrb[0].mxu0
  %2984 = vmatprep.mubr.bf16.mxu0 0
  %2985 = vmatmul.mubr.bf16.gmra.mrb[0].mxu0 %v2616
  %v2986 = vpop.f32.mrb[0].mxu0
  %v2987 = vadd.f32 %v2690, %v2986
  %v2988 = vpop.f32.mrb[0].mxu0
  %v2989 = vpop.f32.mrb[0].mxu0
  %v2990 = vadd.f32 %v2690, %v2989
  %v2991 = vpop.f32.mrb[0].mxu0
  %2992 = vmatprep.mubr.bf16.mxu0 0
  %2993 = vmatmul.mubr.bf16.gmra.mrb[0].mxu0 %v2619
  %v2994 = vpop.f32.mrb[0].mxu0
  %v2995 = vadd.f32 %v2690, %v2994
  %v2996 = vpop.f32.mrb[0].mxu0
  %v2997 = vpop.f32.mrb[0].mxu0
  %v2998 = vadd.f32 %v2690, %v2997
  %v2999 = vpop.f32.mrb[0].mxu0
  %3000 = vmatprep.mubr.bf16.mxu0 0
  %3001 = vmatmul.mubr.bf16.gmra.mrb[0].mxu0 %v2622
  %v3002 = vpop.f32.mrb[0].mxu0
  %v3003 = vpop.f32.mrb[0].mxu0
  %v3004 = vpop.f32.mrb[0].mxu0
  %v3005 = vpop.f32.mrb[0].mxu0
  %3006 = vmatprep.mubr.bf16.mxu0 0
  %3007 = vmatmul.mubr.bf16.gmra.mrb[0].mxu0 %v2625
  %v3008 = vpop.f32.mrb[0].mxu0
  %v3009 = vpop.f32.mrb[0].mxu0
  %v3010 = vpop.f32.mrb[0].mxu0
  %v3011 = vpop.f32.mrb[0].mxu0
  %3012 = vmatprep.mubr.bf16.mxu0 0
  %3013 = vmatmul.mubr.bf16.gmra.mrb[0].mxu0 %v2628
  %v3014 = vpop.f32.mrb[0].mxu0
  %v3015 = vadd.f32 %v2690, %v3014
  %v3016 = vpop.f32.mrb[0].mxu0
  %v3017 = vpop.f32.mrb[0].mxu0
  %v3018 = vadd.f32 %v2690, %v3017
  %v3019 = vpop.f32.mrb[0].mxu0
  %3020 = vmatprep.mubr.bf16.mxu0 0
  %3021 = vmatmul.mubr.bf16.gmra.mrb[0].mxu0 %v2631
  %v3022 = vpop.f32.mrb[0].mxu0
  %v3023 = vadd.f32 %v2690, %v3022
  %v3024 = vpop.f32.mrb[0].mxu0
  %v3025 = vpop.f32.mrb[0].mxu0
  %v3026 = vadd.f32 %v2690, %v3025
  %v3027 = vpop.f32.mrb[0].mxu0
  %3028 = vmatprep.mubr.bf16.mxu0 0
  %3029 = vmatmul.mubr.bf16.gmra.mrb[0].mxu0 %v2634
  %v3030 = vpop.f32.mrb[0].mxu0
  %v3031 = vadd.f32 %v2690, %v3030
  %v3032 = vpop.f32.mrb[0].mxu0
  %v3033 = vpop.f32.mrb[0].mxu0
  %v3034 = vadd.f32 %v2690, %v3033
  %v3035 = vpop.f32.mrb[0].mxu0
  %3036 = vmatprep.mubr.bf16.mxu0 0
  %3037 = vmatmul.mubr.bf16.gmra.mrb[0].mxu0 %v2637
  %v3038 = vpop.f32.mrb[0].mxu0
  %v3039 = vadd.f32 %v2690, %v3038
  %v3040 = vpop.f32.mrb[0].mxu0
  %v3041 = vpop.f32.mrb[0].mxu0
  %v3042 = vadd.f32 %v2690, %v3041
  %v3043 = vpop.f32.mrb[0].mxu0
  %3044 = vmatprep.mubr.bf16.mxu0 0
  %3045 = vmatmul.mubr.bf16.gmra.mrb[0].mxu0 %v2640
  %v3046 = vpop.f32.mrb[0].mxu0
  %v3047 = vadd.f32 %v2690, %v3046
  %v3048 = vpop.f32.mrb[0].mxu0
  %v3049 = vpop.f32.mrb[0].mxu0
  %v3050 = vadd.f32 %v2690, %v3049
  %v3051 = vpop.f32.mrb[0].mxu0
  %3052 = vmatprep.mubr.bf16.mxu0 0
  %3053 = vmatmul.mubr.bf16.gmra.mrb[0].mxu0 %v2643
  %v3054 = vpop.f32.mrb[0].mxu0
  %v3055 = vadd.f32 %v2690, %v3054
  %v3056 = vpop.f32.mrb[0].mxu0
  %v3057 = vpop.f32.mrb[0].mxu0
  %v3058 = vadd.f32 %v2690, %v3057
  %v3059 = vpop.f32.mrb[0].mxu0
  %3060 = vmatprep.mubr.bf16.mxu0 0
  %3061 = vmatmul.mubr.bf16.gmra.mrb[0].mxu0 %v2646
  %v3062 = vpop.f32.mrb[0].mxu0
  %v3063 = vpop.f32.mrb[0].mxu0
  %v3064 = vpop.f32.mrb[0].mxu0
  %v3065 = vpop.f32.mrb[0].mxu0
  %3066 = vmatprep.mubr.bf16.mxu0 0
  %3067 = vmatmul.mubr.bf16.gmra.mrb[0].mxu0 %v2649
  %v3068 = vpop.f32.mrb[0].mxu0
  %v3069 = vpop.f32.mrb[0].mxu0
  %v3070 = vpop.f32.mrb[0].mxu0
  %v3071 = vpop.f32.mrb[0].mxu0
  %3072 = vmatprep.mubr.bf16.mxu0 0
  %3073 = vmatmul.mubr.bf16.gmra.mrb[0].mxu0 %v2652
  %v3074 = vpop.f32.mrb[0].mxu0
  %v3075 = vadd.f32 %v2690, %v3074
  %v3076 = vpop.f32.mrb[0].mxu0
  %v3077 = vpop.f32.mrb[0].mxu0
  %v3078 = vadd.f32 %v2690, %v3077
  %v3079 = vpop.f32.mrb[0].mxu0
  %3080 = vmatprep.mubr.bf16.mxu0 0
  %3081 = vmatmul.mubr.bf16.gmra.mrb[0].mxu0 %v2655
  %v3082 = vpop.f32.mrb[0].mxu0
  %v3083 = vadd.f32 %v2690, %v3082
  %v3084 = vpop.f32.mrb[0].mxu0
  %v3085 = vpop.f32.mrb[0].mxu0
  %v3086 = vadd.f32 %v2690, %v3085
  %v3087 = vpop.f32.mrb[0].mxu0
  %3088 = vmatprep.mubr.bf16.mxu0 0
  %3089 = vmatmul.mubr.bf16.gmra.mrb[0].mxu0 %v2658
  %v3090 = vpop.f32.mrb[0].mxu0
  %v3091 = vadd.f32 %v2690, %v3090
  %v3092 = vpop.f32.mrb[0].mxu0
  %v3093 = vpop.f32.mrb[0].mxu0
  %v3094 = vadd.f32 %v2690, %v3093
  %v3095 = vpop.f32.mrb[0].mxu0
  %3096 = vmatprep.mubr.bf16.mxu0 0
  %3097 = vmatmul.mubr.bf16.gmra.mrb[0].mxu0 %v2661
  %v3098 = vpop.f32.mrb[0].mxu0
  %v3099 = vadd.f32 %v2690, %v3098
  %v3100 = vpop.f32.mrb[0].mxu0
  %v3101 = vpop.f32.mrb[0].mxu0
  %v3102 = vadd.f32 %v2690, %v3101
  %v3103 = vpop.f32.mrb[0].mxu0
  %3104 = vmatprep.mubr.bf16.mxu0 0
  %3105 = vmatmul.mubr.bf16.gmra.mrb[0].mxu0 %v2664
  %v3106 = vpop.f32.mrb[0].mxu0
  %v3107 = vadd.f32 %v2690, %v3106
  %v3108 = vpop.f32.mrb[0].mxu0
  %v3109 = vpop.f32.mrb[0].mxu0
  %v3110 = vadd.f32 %v2690, %v3109
  %v3111 = vpop.f32.mrb[0].mxu0
  %3112 = vmatprep.mubr.bf16.mxu0 0
  %3113 = vmatmul.mubr.bf16.gmra.mrb[0].mxu0 %v2667
  %v3114 = vpop.f32.mrb[0].mxu0
  %v3115 = vadd.f32 %v2690, %v3114
  %v3116 = vpop.f32.mrb[0].mxu0
  %v3117 = vpop.f32.mrb[0].mxu0
  %v3118 = vadd.f32 %v2690, %v3117
  %v3119 = vpop.f32.mrb[0].mxu0
  %3120 = vdwg.mxu0
  %v3121 = vmax.f32 %v2775, 0.0
  %v3122 = vmax.f32 %v2778, 0.0
  %v3123 = vmax.f32 %v2783, 0.0
  %v3124 = vmax.f32 %v2786, 0.0
  %v3125 = vmax.f32 %v2791, 0.0
  %v3126 = vmax.f32 %v2794, 0.0
  %v3127 = vmax.f32 %v2799, 0.0
  %v3128 = vmax.f32 %v2802, 0.0
  %v3129 = vmax.f32 %v2807, 0.0
  %v3130 = vmax.f32 %v2810, 0.0
  %v3131 = vmax.f32 %v2815, 0.0
  %v3132 = vmax.f32 %v2818, 0.0
  %v3133 = vmax.f32 %v2835, 0.0
  %v3134 = vmax.f32 %v2838, 0.0
  %v3135 = vmax.f32 %v2843, 0.0
  %v3136 = vmax.f32 %v2846, 0.0
  %v3137 = vmax.f32 %v2851, 0.0
  %v3138 = vmax.f32 %v2854, 0.0
  %v3139 = vmax.f32 %v2859, 0.0
  %v3140 = vmax.f32 %v2862, 0.0
  %v3141 = vmax.f32 %v2867, 0.0
  %v3142 = vmax.f32 %v2870, 0.0
  %v3143 = vmax.f32 %v2875, 0.0
  %v3144 = vmax.f32 %v2878, 0.0
  %v3145 = vmax.f32 %v2895, 0.0
  %v3146 = vmax.f32 %v2898, 0.0
  %v3147 = vmax.f32 %v2903, 0.0
  %v3148 = vmax.f32 %v2906, 0.0
  %v3149 = vmax.f32 %v2911, 0.0
  %v3150 = vmax.f32 %v2914, 0.0
  %v3151 = vmax.f32 %v2919, 0.0
  %v3152 = vmax.f32 %v2922, 0.0
  %v3153 = vmax.f32 %v2927, 0.0
  %v3154 = vmax.f32 %v2930, 0.0
  %v3155 = vmax.f32 %v2935, 0.0
  %v3156 = vmax.f32 %v2938, 0.0
  %v3157 = vmax.f32 %v2955, 0.0
  %v3158 = vmax.f32 %v2958, 0.0
  %v3159 = vmax.f32 %v2963, 0.0
  %v3160 = vmax.f32 %v2966, 0.0
  %v3161 = vmax.f32 %v2971, 0.0
  %v3162 = vmax.f32 %v2974, 0.0
  %v3163 = vmax.f32 %v2979, 0.0
  %v3164 = vmax.f32 %v2982, 0.0
  %v3165 = vmax.f32 %v2987, 0.0
  %v3166 = vmax.f32 %v2990, 0.0
  %v3167 = vmax.f32 %v2995, 0.0
  %v3168 = vmax.f32 %v2998, 0.0
  %v3169 = vmax.f32 %v3015, 0.0
  %v3170 = vmax.f32 %v3018, 0.0
  %v3171 = vmax.f32 %v3023, 0.0
  %v3172 = vmax.f32 %v3026, 0.0
  %v3173 = vmax.f32 %v3031, 0.0
  %v3174 = vmax.f32 %v3034, 0.0
  %v3175 = vmax.f32 %v3039, 0.0
  %v3176 = vmax.f32 %v3042, 0.0
  %v3177 = vmax.f32 %v3047, 0.0
  %v3178 = vmax.f32 %v3050, 0.0
  %v3179 = vmax.f32 %v3055, 0.0
  %v3180 = vmax.f32 %v3058, 0.0
  %v3181 = vmax.f32 %v3075, 0.0
  %v3182 = vmax.f32 %v3078, 0.0
  %v3183 = vmax.f32 %v3083, 0.0
  %v3184 = vmax.f32 %v3086, 0.0
  %v3185 = vmax.f32 %v3091, 0.0
  %v3186 = vmax.f32 %v3094, 0.0
  %v3187 = vmax.f32 %v3099, 0.0
  %v3188 = vmax.f32 %v3102, 0.0
  %v3189 = vmax.f32 %v3107, 0.0
  %v3190 = vmax.f32 %v3110, 0.0
  %v3191 = vmax.f32 %v3115, 0.0
  %v3192 = vmax.f32 %v3118, 0.0
  %v3193 = vpack.c.bf16 %v3122, %v3121
  %v3194 = vpack.c.bf16 %v3124, %v3123
  %v3195 = vpack.c.bf16 %v3126, %v3125
  %v3196 = vpack.c.bf16 %v3128, %v3127
  %v3197 = vpack.c.bf16 %v3130, %v3129
  %v3198 = vpack.c.bf16 %v3132, %v3131
  %v3199 = vpack.c.bf16 %v3134, %v3133
  %v3200 = vpack.c.bf16 %v3136, %v3135
  %v3201 = vpack.c.bf16 %v3138, %v3137
  %v3202 = vpack.c.bf16 %v3140, %v3139
  %v3203 = vpack.c.bf16 %v3142, %v3141
  %v3204 = vpack.c.bf16 %v3144, %v3143
  %v3205 = vpack.c.bf16 %v3146, %v3145
  %v3206 = vpack.c.bf16 %v3148, %v3147
  %v3207 = vpack.c.bf16 %v3150, %v3149
  %v3208 = vpack.c.bf16 %v3152, %v3151
  %v3209 = vpack.c.bf16 %v3154, %v3153
  %v3210 = vpack.c.bf16 %v3156, %v3155
  %v3211 = vpack.c.bf16 %v3158, %v3157
  %v3212 = vpack.c.bf16 %v3160, %v3159
  %v3213 = vpack.c.bf16 %v3162, %v3161
  %v3214 = vpack.c.bf16 %v3164, %v3163
  %v3215 = vpack.c.bf16 %v3166, %v3165
  %v3216 = vpack.c.bf16 %v3168, %v3167
  %v3217 = vpack.c.bf16 %v3170, %v3169
  %v3218 = vpack.c.bf16 %v3172, %v3171
  %v3219 = vpack.c.bf16 %v3174, %v3173
  %v3220 = vpack.c.bf16 %v3176, %v3175
  %v3221 = vpack.c.bf16 %v3178, %v3177
  %v3222 = vpack.c.bf16 %v3180, %v3179
  %v3223 = vpack.c.bf16 %v3182, %v3181
  %v3224 = vpack.c.bf16 %v3184, %v3183
  %v3225 = vpack.c.bf16 %v3186, %v3185
  %v3226 = vpack.c.bf16 %v3188, %v3187
  %v3227 = vpack.c.bf16 %v3190, %v3189
  %v3228 = vpack.c.bf16 %v3192, %v3191
  %v3229 = vmax.bf16 %v3193, %v3194
  %v3230 = vmax.bf16 %v3199, %v3200
  %v3231 = vmax.bf16 %v3229, %v3230
  %v3232 = vld [vmem:[%s5] sm:$0xff]
  %v3233 = vld [vmem:[%s5 + $0x8] sm:$0xff]
  %v3234 = vld [vmem:[%s5 + $0x10] sm:$0xff]
  %v3235 = vld [vmem:[%s5 + $0x18] sm:$0xff]
  %v3236 = vld [vmem:[%s5 + $0x20] sm:$0xff]
  %v3237 = vld [vmem:[%s5 + $0x28] sm:$0xff]
  %v3238 = vld [vmem:[%s5 + $0x30] sm:$0xff]
  %v3239 = vld [vmem:[%s5 + $0x38] sm:$0xff]
  %v3240 = vmax.bf16 %v3195, %v3196
  %v3241 = vmax.bf16 %v3201, %v3202
  %v3242 = vmax.bf16 %v3240, %v3241
  %s3243 = scalar_lea.vmem %s5, 64
  %v3244 = vld [vmem:[%s3243] sm:$0xff]
  %v3245 = vld [vmem:[%s3243 + $0x8] sm:$0xff]
  %v3246 = vld [vmem:[%s3243 + $0x10] sm:$0xff]
  %v3247 = vld [vmem:[%s3243 + $0x18] sm:$0xff]
  %v3248 = vld [vmem:[%s3243 + $0x20] sm:$0xff]
  %v3249 = vld [vmem:[%s3243 + $0x28] sm:$0xff]
  %v3250 = vld [vmem:[%s3243 + $0x30] sm:$0xff]
  %v3251 = vld [vmem:[%s3243 + $0x38] sm:$0xff]
  %v3260 = vunpack.c.l.b16 %v3244
  %v3261 = vunpack.c.h.b16 %v3244
  %v3262 = vunpack.c.l.b16 %v3245
  %v3263 = vunpack.c.h.b16 %v3245
  %v3264 = vunpack.c.l.b16 %v3246
  %v3265 = vunpack.c.h.b16 %v3246
  %v3266 = vunpack.c.l.b16 %v3247
  %v3267 = vunpack.c.h.b16 %v3247
  %v3268 = vunpack.c.l.b16 %v3248
  %v3269 = vunpack.c.h.b16 %v3248
  %v3270 = vunpack.c.l.b16 %v3249
  %v3271 = vunpack.c.h.b16 %v3249
  %v3272 = vunpack.c.l.b16 %v3250
  %v3273 = vunpack.c.h.b16 %v3250
  %v3274 = vunpack.c.l.b16 %v3251
  %v3275 = vunpack.c.h.b16 %v3251
  %v3276 = vpack.c.b16 %v3262, %v3260
  %v3277 = vpack.c.b16 %v3263, %v3261
  %v3278 = vpack.c.b16 %v3266, %v3264
  %v3279 = vpack.c.b16 %v3267, %v3265
  %v3280 = vpack.c.b16 %v3270, %v3268
  %v3281 = vpack.c.b16 %v3271, %v3269
  %v3282 = vpack.c.b16 %v3274, %v3272
  %v3283 = vpack.c.b16 %v3275, %v3273
  %v3293 = vsel %vm2437, %v3242, 0
  %3295 = vmatprep.subr.bf16.mxu0 %v3277
  %3296 = vmatpush1.bf16.msra.mxu0 %v3276
  %3297 = vmatprep.subr.bf16.mxu0 %v3279
  %3298 = vmatpush1.bf16.msra.mxu0 %v3278
  %3299 = vmatprep.subr.bf16.mxu0 %v3281
  %3300 = vmatpush1.bf16.msra.mxu0 %v3280
  %3301 = vmatprep.subr.bf16.mxu0 %v3283
  %3302 = vmatpush1.bf16.msra.mxu0 %v3282
  %3303 = vmatprep.subr.bf16.mxu0 0
  %3304 = vmatpush1.bf16.msra.mxu0 0
  %3305 = vmatprep.subr.bf16.mxu0 0
  %3306 = vmatpush1.bf16.msra.mxu0 0
  %3307 = vmatprep.subr.bf16.mxu0 0
  %3308 = vmatpush1.bf16.msra.mxu0 0
  %3309 = vmatprep.subr.bf16.mxu0 0
  %3310 = vmatpush1.bf16.msra.mxu0 0
  %3311 = vmatprep.subr.bf16.mxu0 0
  %3312 = vmatpush1.bf16.msra.mxu0 0
  %3313 = vmatprep.subr.bf16.mxu0 0
  %3314 = vmatpush1.bf16.msra.mxu0 0
  %3315 = vmatprep.subr.bf16.mxu0 0
  %3316 = vmatpush1.bf16.msra.mxu0 0
  %3317 = vmatprep.subr.bf16.mxu0 0
  %3318 = vmatpush1.bf16.msra.mxu0 0
  %3319 = vmatprep.subr.bf16.mxu0 0
  %3320 = vmatpush1.bf16.msra.mxu0 0
  %3321 = vmatprep.subr.bf16.mxu0 0
  %3322 = vmatpush1.bf16.msra.mxu0 0
  %3323 = vmatprep.subr.bf16.mxu0 0
  %3324 = vmatpush1.bf16.msra.mxu0 0
  %3325 = vmatprep.subr.bf16.mxu0 0
  %3326 = vmatpush1.bf16.msra.mxu0 0
  %3327 = vmatprep.mubr.bf16.mxu0 0
  %3328 = vmatmul.mubr.bf16.gmra.mrb[0].mxu0 %v3293
  %v3329 = vpop.f32.mrb[0].mxu0
  %v3330 = vadd.f32 0.0, %v3329
  %v3331 = vpop.f32.mrb[0].mxu0
  %v3332 = vadd.f32 0.0, %v3331
  %v3333 = vpop.f32.mrb[0].mxu0
  %v3334 = vadd.f32 0.0, %v3333
  %v3335 = vpop.f32.mrb[0].mxu0
  %v3336 = vadd.f32 0.0, %v3335
  %3337 = vdwg.mxu0
  %v3346 = vunpack.c.l.b16 %v3232
  %v3347 = vunpack.c.h.b16 %v3232
  %v3348 = vunpack.c.l.b16 %v3233
  %v3349 = vunpack.c.h.b16 %v3233
  %v3350 = vunpack.c.l.b16 %v3234
  %v3351 = vunpack.c.h.b16 %v3234
  %v3352 = vunpack.c.l.b16 %v3235
  %v3353 = vunpack.c.h.b16 %v3235
  %v3354 = vunpack.c.l.b16 %v3236
  %v3355 = vunpack.c.h.b16 %v3236
  %v3356 = vunpack.c.l.b16 %v3237
  %v3357 = vunpack.c.h.b16 %v3237
  %v3358 = vunpack.c.l.b16 %v3238
  %v3359 = vunpack.c.h.b16 %v3238
  %v3360 = vunpack.c.l.b16 %v3239
  %v3361 = vunpack.c.h.b16 %v3239
  %v3362 = vpack.c.b16 %v3348, %v3346
  %v3363 = vpack.c.b16 %v3349, %v3347
  %v3364 = vpack.c.b16 %v3352, %v3350
  %v3365 = vpack.c.b16 %v3353, %v3351
  %v3366 = vpack.c.b16 %v3356, %v3354
  %v3367 = vpack.c.b16 %v3357, %v3355
  %v3368 = vpack.c.b16 %v3360, %v3358
  %v3369 = vpack.c.b16 %v3361, %v3359
  %v3379 = vsel %vm2437, %v3231, 0
  %3381 = vmatprep.subr.bf16.mxu0 %v3363
  %3382 = vmatpush1.bf16.msra.mxu0 %v3362
  %3383 = vmatprep.subr.bf16.mxu0 %v3365
  %3384 = vmatpush1.bf16.msra.mxu0 %v3364
  %3385 = vmatprep.subr.bf16.mxu0 %v3367
  %3386 = vmatpush1.bf16.msra.mxu0 %v3366
  %3387 = vmatprep.subr.bf16.mxu0 %v3369
  %3388 = vmatpush1.bf16.msra.mxu0 %v3368
  %3389 = vmatprep.subr.bf16.mxu0 0
  %3390 = vmatpush1.bf16.msra.mxu0 0
  %3391 = vmatprep.subr.bf16.mxu0 0
  %3392 = vmatpush1.bf16.msra.mxu0 0
  %3393 = vmatprep.subr.bf16.mxu0 0
  %3394 = vmatpush1.bf16.msra.mxu0 0
  %3395 = vmatprep.subr.bf16.mxu0 0
  %3396 = vmatpush1.bf16.msra.mxu0 0
  %3397 = vmatprep.subr.bf16.mxu0 0
  %3398 = vmatpush1.bf16.msra.mxu0 0
  %3399 = vmatprep.subr.bf16.mxu0 0
  %3400 = vmatpush1.bf16.msra.mxu0 0
  %3401 = vmatprep.subr.bf16.mxu0 0
  %3402 = vmatpush1.bf16.msra.mxu0 0
  %3403 = vmatprep.subr.bf16.mxu0 0
  %3404 = vmatpush1.bf16.msra.mxu0 0
  %3405 = vmatprep.subr.bf16.mxu0 0
  %3406 = vmatpush1.bf16.msra.mxu0 0
  %3407 = vmatprep.subr.bf16.mxu0 0
  %3408 = vmatpush1.bf16.msra.mxu0 0
  %3409 = vmatprep.subr.bf16.mxu0 0
  %3410 = vmatpush1.bf16.msra.mxu0 0
  %3411 = vmatprep.subr.bf16.mxu0 0
  %3412 = vmatpush1.bf16.msra.mxu0 0
  %3413 = vmatprep.mubr.bf16.mxu0 0
  %3414 = vmatmul.mubr.bf16.gmra.mrb[0].mxu0 %v3379
  %v3415 = vpop.f32.mrb[0].mxu0
  %v3416 = vadd.f32 %v3330, %v3415
  %v3417 = vpop.f32.mrb[0].mxu0
  %v3418 = vadd.f32 %v3332, %v3417
  %v3419 = vpop.f32.mrb[0].mxu0
  %v3420 = vadd.f32 %v3334, %v3419
  %v3421 = vpop.f32.mrb[0].mxu0
  %v3422 = vadd.f32 %v3336, %v3421
  %3423 = vdwg.mxu0
  %v3424 = vmax.bf16 %v3197, %v3198
  %v3425 = vmax.bf16 %v3203, %v3204
  %v3426 = vmax.bf16 %v3424, %v3425
  %s3427 = scalar_lea.vmem %s5, 128
  %v3428 = vld [vmem:[%s3427] sm:$0xff]
  %v3429 = vld [vmem:[%s3427 + $0x8] sm:$0xff]
  %v3430 = vld [vmem:[%s3427 + $0x10] sm:$0xff]
  %v3431 = vld [vmem:[%s3427 + $0x18] sm:$0xff]
  %v3432 = vld [vmem:[%s3427 + $0x20] sm:$0xff]
  %v3433 = vld [vmem:[%s3427 + $0x28] sm:$0xff]
  %v3434 = vld [vmem:[%s3427 + $0x30] sm:$0xff]
  %v3435 = vld [vmem:[%s3427 + $0x38] sm:$0xff]
  %v3444 = vunpack.c.l.b16 %v3428
  %v3445 = vunpack.c.h.b16 %v3428
  %v3446 = vunpack.c.l.b16 %v3429
  %v3447 = vunpack.c.h.b16 %v3429
  %v3448 = vunpack.c.l.b16 %v3430
  %v3449 = vunpack.c.h.b16 %v3430
  %v3450 = vunpack.c.l.b16 %v3431
  %v3451 = vunpack.c.h.b16 %v3431
  %v3452 = vunpack.c.l.b16 %v3432
  %v3453 = vunpack.c.h.b16 %v3432
  %v3454 = vunpack.c.l.b16 %v3433
  %v3455 = vunpack.c.h.b16 %v3433
  %v3456 = vunpack.c.l.b16 %v3434
  %v3457 = vunpack.c.h.b16 %v3434
  %v3458 = vunpack.c.l.b16 %v3435
  %v3459 = vunpack.c.h.b16 %v3435
  %v3460 = vpack.c.b16 %v3446, %v3444
  %v3461 = vpack.c.b16 %v3447, %v3445
  %v3462 = vpack.c.b16 %v3450, %v3448
  %v3463 = vpack.c.b16 %v3451, %v3449
  %v3464 = vpack.c.b16 %v3454, %v3452
  %v3465 = vpack.c.b16 %v3455, %v3453
  %v3466 = vpack.c.b16 %v3458, %v3456
  %v3467 = vpack.c.b16 %v3459, %v3457
  %v3477 = vsel %vm2437, %v3426, 0
  %3479 = vmatprep.subr.bf16.mxu0 %v3461
  %3480 = vmatpush1.bf16.msra.mxu0 %v3460
  %3481 = vmatprep.subr.bf16.mxu0 %v3463
  %3482 = vmatpush1.bf16.msra.mxu0 %v3462
  %3483 = vmatprep.subr.bf16.mxu0 %v3465
  %3484 = vmatpush1.bf16.msra.mxu0 %v3464
  %3485 = vmatprep.subr.bf16.mxu0 %v3467
  %3486 = vmatpush1.bf16.msra.mxu0 %v3466
  %3487 = vmatprep.subr.bf16.mxu0 0
  %3488 = vmatpush1.bf16.msra.mxu0 0
  %3489 = vmatprep.subr.bf16.mxu0 0
  %3490 = vmatpush1.bf16.msra.mxu0 0
  %3491 = vmatprep.subr.bf16.mxu0 0
  %3492 = vmatpush1.bf16.msra.mxu0 0
  %3493 = vmatprep.subr.bf16.mxu0 0
  %3494 = vmatpush1.bf16.msra.mxu0 0
  %3495 = vmatprep.subr.bf16.mxu0 0
  %3496 = vmatpush1.bf16.msra.mxu0 0
  %3497 = vmatprep.subr.bf16.mxu0 0
  %3498 = vmatpush1.bf16.msra.mxu0 0
  %3499 = vmatprep.subr.bf16.mxu0 0
  %3500 = vmatpush1.bf16.msra.mxu0 0
  %3501 = vmatprep.subr.bf16.mxu0 0
  %3502 = vmatpush1.bf16.msra.mxu0 0
  %3503 = vmatprep.subr.bf16.mxu0 0
  %3504 = vmatpush1.bf16.msra.mxu0 0
  %3505 = vmatprep.subr.bf16.mxu0 0
  %3506 = vmatpush1.bf16.msra.mxu0 0
  %3507 = vmatprep.subr.bf16.mxu0 0
  %3508 = vmatpush1.bf16.msra.mxu0 0
  %3509 = vmatprep.subr.bf16.mxu0 0
  %3510 = vmatpush1.bf16.msra.mxu0 0
  %3511 = vmatprep.mubr.bf16.mxu0 0
  %3512 = vmatmul.mubr.bf16.gmra.mrb[0].mxu0 %v3477
  %v3513 = vpop.f32.mrb[0].mxu0
  %v3514 = vadd.f32 0.0, %v3513
  %v3515 = vpop.f32.mrb[0].mxu0
  %v3516 = vadd.f32 0.0, %v3515
  %v3517 = vpop.f32.mrb[0].mxu0
  %v3518 = vadd.f32 0.0, %v3517
  %v3519 = vpop.f32.mrb[0].mxu0
  %v3520 = vadd.f32 0.0, %v3519
  %3521 = vdwg.mxu0
  %v3522 = vadd.f32 %v3416, %v3514
  %v3523 = vadd.f32 %v3418, %v3516
  %v3524 = vadd.f32 %v3420, %v3518
  %v3525 = vadd.f32 %v3422, %v3520
  %v3526 = vmax.bf16 %v3205, %v3206
  %v3527 = vmax.bf16 %v3211, %v3212
  %v3528 = vmax.bf16 %v3526, %v3527
  %s3529 = scalar_lea.vmem %s5, 192
  %v3530 = vld [vmem:[%s3529] sm:$0xff]
  %v3531 = vld [vmem:[%s3529 + $0x8] sm:$0xff]
  %v3532 = vld [vmem:[%s3529 + $0x10] sm:$0xff]
  %v3533 = vld [vmem:[%s3529 + $0x18] sm:$0xff]
  %v3534 = vld [vmem:[%s3529 + $0x20] sm:$0xff]
  %v3535 = vld [vmem:[%s3529 + $0x28] sm:$0xff]
  %v3536 = vld [vmem:[%s3529 + $0x30] sm:$0xff]
  %v3537 = vld [vmem:[%s3529 + $0x38] sm:$0xff]
  %v3546 = vunpack.c.l.b16 %v3530
  %v3547 = vunpack.c.h.b16 %v3530
  %v3548 = vunpack.c.l.b16 %v3531
  %v3549 = vunpack.c.h.b16 %v3531
  %v3550 = vunpack.c.l.b16 %v3532
  %v3551 = vunpack.c.h.b16 %v3532
  %v3552 = vunpack.c.l.b16 %v3533
  %v3553 = vunpack.c.h.b16 %v3533
  %v3554 = vunpack.c.l.b16 %v3534
  %v3555 = vunpack.c.h.b16 %v3534
  %v3556 = vunpack.c.l.b16 %v3535
  %v3557 = vunpack.c.h.b16 %v3535
  %v3558 = vunpack.c.l.b16 %v3536
  %v3559 = vunpack.c.h.b16 %v3536
  %v3560 = vunpack.c.l.b16 %v3537
  %v3561 = vunpack.c.h.b16 %v3537
  %v3562 = vpack.c.b16 %v3548, %v3546
  %v3563 = vpack.c.b16 %v3549, %v3547
  %v3564 = vpack.c.b16 %v3552, %v3550
  %v3565 = vpack.c.b16 %v3553, %v3551
  %v3566 = vpack.c.b16 %v3556, %v3554
  %v3567 = vpack.c.b16 %v3557, %v3555
  %v3568 = vpack.c.b16 %v3560, %v3558
  %v3569 = vpack.c.b16 %v3561, %v3559
  %v3579 = vsel %vm2437, %v3528, 0
  %3581 = vmatprep.subr.bf16.mxu0 %v3563
  %3582 = vmatpush1.bf16.msra.mxu0 %v3562
  %3583 = vmatprep.subr.bf16.mxu0 %v3565
  %3584 = vmatpush1.bf16.msra.mxu0 %v3564
  %3585 = vmatprep.subr.bf16.mxu0 %v3567
  %3586 = vmatpush1.bf16.msra.mxu0 %v3566
  %3587 = vmatprep.subr.bf16.mxu0 %v3569
  %3588 = vmatpush1.bf16.msra.mxu0 %v3568
  %3589 = vmatprep.subr.bf16.mxu0 0
  %3590 = vmatpush1.bf16.msra.mxu0 0
  %3591 = vmatprep.subr.bf16.mxu0 0
  %3592 = vmatpush1.bf16.msra.mxu0 0
  %3593 = vmatprep.subr.bf16.mxu0 0
  %3594 = vmatpush1.bf16.msra.mxu0 0
  %3595 = vmatprep.subr.bf16.mxu0 0
  %3596 = vmatpush1.bf16.msra.mxu0 0
  %3597 = vmatprep.subr.bf16.mxu0 0
  %3598 = vmatpush1.bf16.msra.mxu0 0
  %3599 = vmatprep.subr.bf16.mxu0 0
  %3600 = vmatpush1.bf16.msra.mxu0 0
  %3601 = vmatprep.subr.bf16.mxu0 0
  %3602 = vmatpush1.bf16.msra.mxu0 0
  %3603 = vmatprep.subr.bf16.mxu0 0
  %3604 = vmatpush1.bf16.msra.mxu0 0
  %3605 = vmatprep.subr.bf16.mxu0 0
  %3606 = vmatpush1.bf16.msra.mxu0 0
  %3607 = vmatprep.subr.bf16.mxu0 0
  %3608 = vmatpush1.bf16.msra.mxu0 0
  %3609 = vmatprep.subr.bf16.mxu0 0
  %3610 = vmatpush1.bf16.msra.mxu0 0
  %3611 = vmatprep.subr.bf16.mxu0 0
  %3612 = vmatpush1.bf16.msra.mxu0 0
  %3613 = vmatprep.mubr.bf16.mxu0 0
  %3614 = vmatmul.mubr.bf16.gmra.mrb[0].mxu0 %v3579
  %v3615 = vpop.f32.mrb[0].mxu0
  %v3616 = vadd.f32 0.0, %v3615
  %v3617 = vpop.f32.mrb[0].mxu0
  %v3618 = vadd.f32 0.0, %v3617
  %v3619 = vpop.f32.mrb[0].mxu0
  %v3620 = vadd.f32 0.0, %v3619
  %v3621 = vpop.f32.mrb[0].mxu0
  %v3622 = vadd.f32 0.0, %v3621
  %3623 = vdwg.mxu0
  %v3624 = vadd.f32 %v3522, %v3616
  %v3625 = vadd.f32 %v3523, %v3618
  %v3626 = vadd.f32 %v3524, %v3620
  %v3627 = vadd.f32 %v3525, %v3622
  %v3628 = vmax.bf16 %v3207, %v3208
  %v3629 = vmax.bf16 %v3213, %v3214
  %v3630 = vmax.bf16 %v3628, %v3629
  %s3631 = scalar_lea.vmem %s5, 256
  %v3632 = vld [vmem:[%s3631] sm:$0xff]
  %v3633 = vld [vmem:[%s3631 + $0x8] sm:$0xff]
  %v3634 = vld [vmem:[%s3631 + $0x10] sm:$0xff]
  %v3635 = vld [vmem:[%s3631 + $0x18] sm:$0xff]
  %v3636 = vld [vmem:[%s3631 + $0x20] sm:$0xff]
  %v3637 = vld [vmem:[%s3631 + $0x28] sm:$0xff]
  %v3638 = vld [vmem:[%s3631 + $0x30] sm:$0xff]
  %v3639 = vld [vmem:[%s3631 + $0x38] sm:$0xff]
  %v3648 = vunpack.c.l.b16 %v3632
  %v3649 = vunpack.c.h.b16 %v3632
  %v3650 = vunpack.c.l.b16 %v3633
  %v3651 = vunpack.c.h.b16 %v3633
  %v3652 = vunpack.c.l.b16 %v3634
  %v3653 = vunpack.c.h.b16 %v3634
  %v3654 = vunpack.c.l.b16 %v3635
  %v3655 = vunpack.c.h.b16 %v3635
  %v3656 = vunpack.c.l.b16 %v3636
  %v3657 = vunpack.c.h.b16 %v3636
  %v3658 = vunpack.c.l.b16 %v3637
  %v3659 = vunpack.c.h.b16 %v3637
  %v3660 = vunpack.c.l.b16 %v3638
  %v3661 = vunpack.c.h.b16 %v3638
  %v3662 = vunpack.c.l.b16 %v3639
  %v3663 = vunpack.c.h.b16 %v3639
  %v3664 = vpack.c.b16 %v3650, %v3648
  %v3665 = vpack.c.b16 %v3651, %v3649
  %v3666 = vpack.c.b16 %v3654, %v3652
  %v3667 = vpack.c.b16 %v3655, %v3653
  %v3668 = vpack.c.b16 %v3658, %v3656
  %v3669 = vpack.c.b16 %v3659, %v3657
  %v3670 = vpack.c.b16 %v3662, %v3660
  %v3671 = vpack.c.b16 %v3663, %v3661
  %v3681 = vsel %vm2437, %v3630, 0
  %3683 = vmatprep.subr.bf16.mxu0 %v3665
  %3684 = vmatpush1.bf16.msra.mxu0 %v3664
  %3685 = vmatprep.subr.bf16.mxu0 %v3667
  %3686 = vmatpush1.bf16.msra.mxu0 %v3666
  %3687 = vmatprep.subr.bf16.mxu0 %v3669
  %3688 = vmatpush1.bf16.msra.mxu0 %v3668
  %3689 = vmatprep.subr.bf16.mxu0 %v3671
  %3690 = vmatpush1.bf16.msra.mxu0 %v3670
  %3691 = vmatprep.subr.bf16.mxu0 0
  %3692 = vmatpush1.bf16.msra.mxu0 0
  %3693 = vmatprep.subr.bf16.mxu0 0
  %3694 = vmatpush1.bf16.msra.mxu0 0
  %3695 = vmatprep.subr.bf16.mxu0 0
  %3696 = vmatpush1.bf16.msra.mxu0 0
  %3697 = vmatprep.subr.bf16.mxu0 0
  %3698 = vmatpush1.bf16.msra.mxu0 0
  %3699 = vmatprep.subr.bf16.mxu0 0
  %3700 = vmatpush1.bf16.msra.mxu0 0
  %3701 = vmatprep.subr.bf16.mxu0 0
  %3702 = vmatpush1.bf16.msra.mxu0 0
  %3703 = vmatprep.subr.bf16.mxu0 0
  %3704 = vmatpush1.bf16.msra.mxu0 0
  %3705 = vmatprep.subr.bf16.mxu0 0
  %3706 = vmatpush1.bf16.msra.mxu0 0
  %3707 = vmatprep.subr.bf16.mxu0 0
  %3708 = vmatpush1.bf16.msra.mxu0 0
  %3709 = vmatprep.subr.bf16.mxu0 0
  %3710 = vmatpush1.bf16.msra.mxu0 0
  %3711 = vmatprep.subr.bf16.mxu0 0
  %3712 = vmatpush1.bf16.msra.mxu0 0
  %3713 = vmatprep.subr.bf16.mxu0 0
  %3714 = vmatpush1.bf16.msra.mxu0 0
  %3715 = vmatprep.mubr.bf16.mxu0 0
  %3716 = vmatmul.mubr.bf16.gmra.mrb[0].mxu0 %v3681
  %v3717 = vpop.f32.mrb[0].mxu0
  %v3718 = vadd.f32 0.0, %v3717
  %v3719 = vpop.f32.mrb[0].mxu0
  %v3720 = vadd.f32 0.0, %v3719
  %v3721 = vpop.f32.mrb[0].mxu0
  %v3722 = vadd.f32 0.0, %v3721
  %v3723 = vpop.f32.mrb[0].mxu0
  %v3724 = vadd.f32 0.0, %v3723
  %3725 = vdwg.mxu0
  %v3726 = vadd.f32 %v3624, %v3718
  %v3727 = vadd.f32 %v3625, %v3720
  %v3728 = vadd.f32 %v3626, %v3722
  %v3729 = vadd.f32 %v3627, %v3724
  %v3730 = vmax.bf16 %v3209, %v3210
  %v3731 = vmax.bf16 %v3215, %v3216
  %v3732 = vmax.bf16 %v3730, %v3731
  %s3733 = scalar_lea.vmem %s5, 320
  %v3734 = vld [vmem:[%s3733] sm:$0xff]
  %v3735 = vld [vmem:[%s3733 + $0x8] sm:$0xff]
  %v3736 = vld [vmem:[%s3733 + $0x10] sm:$0xff]
  %v3737 = vld [vmem:[%s3733 + $0x18] sm:$0xff]
  %v3738 = vld [vmem:[%s3733 + $0x20] sm:$0xff]
  %v3739 = vld [vmem:[%s3733 + $0x28] sm:$0xff]
  %v3740 = vld [vmem:[%s3733 + $0x30] sm:$0xff]
  %v3741 = vld [vmem:[%s3733 + $0x38] sm:$0xff]
  %v3750 = vunpack.c.l.b16 %v3734
  %v3751 = vunpack.c.h.b16 %v3734
  %v3752 = vunpack.c.l.b16 %v3735
  %v3753 = vunpack.c.h.b16 %v3735
  %v3754 = vunpack.c.l.b16 %v3736
  %v3755 = vunpack.c.h.b16 %v3736
  %v3756 = vunpack.c.l.b16 %v3737
  %v3757 = vunpack.c.h.b16 %v3737
  %v3758 = vunpack.c.l.b16 %v3738
  %v3759 = vunpack.c.h.b16 %v3738
  %v3760 = vunpack.c.l.b16 %v3739
  %v3761 = vunpack.c.h.b16 %v3739
  %v3762 = vunpack.c.l.b16 %v3740
  %v3763 = vunpack.c.h.b16 %v3740
  %v3764 = vunpack.c.l.b16 %v3741
  %v3765 = vunpack.c.h.b16 %v3741
  %v3766 = vpack.c.b16 %v3752, %v3750
  %v3767 = vpack.c.b16 %v3753, %v3751
  %v3768 = vpack.c.b16 %v3756, %v3754
  %v3769 = vpack.c.b16 %v3757, %v3755
  %v3770 = vpack.c.b16 %v3760, %v3758
  %v3771 = vpack.c.b16 %v3761, %v3759
  %v3772 = vpack.c.b16 %v3764, %v3762
  %v3773 = vpack.c.b16 %v3765, %v3763
  %v3783 = vsel %vm2437, %v3732, 0
  %3785 = vmatprep.subr.bf16.mxu0 %v3767
  %3786 = vmatpush1.bf16.msra.mxu0 %v3766
  %3787 = vmatprep.subr.bf16.mxu0 %v3769
  %3788 = vmatpush1.bf16.msra.mxu0 %v3768
  %3789 = vmatprep.subr.bf16.mxu0 %v3771
  %3790 = vmatpush1.bf16.msra.mxu0 %v3770
  %3791 = vmatprep.subr.bf16.mxu0 %v3773
  %3792 = vmatpush1.bf16.msra.mxu0 %v3772
  %3793 = vmatprep.subr.bf16.mxu0 0
  %3794 = vmatpush1.bf16.msra.mxu0 0
  %3795 = vmatprep.subr.bf16.mxu0 0
  %3796 = vmatpush1.bf16.msra.mxu0 0
  %3797 = vmatprep.subr.bf16.mxu0 0
  %3798 = vmatpush1.bf16.msra.mxu0 0
  %3799 = vmatprep.subr.bf16.mxu0 0
  %3800 = vmatpush1.bf16.msra.mxu0 0
  %3801 = vmatprep.subr.bf16.mxu0 0
  %3802 = vmatpush1.bf16.msra.mxu0 0
  %3803 = vmatprep.subr.bf16.mxu0 0
  %3804 = vmatpush1.bf16.msra.mxu0 0
  %3805 = vmatprep.subr.bf16.mxu0 0
  %3806 = vmatpush1.bf16.msra.mxu0 0
  %3807 = vmatprep.subr.bf16.mxu0 0
  %3808 = vmatpush1.bf16.msra.mxu0 0
  %3809 = vmatprep.subr.bf16.mxu0 0
  %3810 = vmatpush1.bf16.msra.mxu0 0
  %3811 = vmatprep.subr.bf16.mxu0 0
  %3812 = vmatpush1.bf16.msra.mxu0 0
  %3813 = vmatprep.subr.bf16.mxu0 0
  %3814 = vmatpush1.bf16.msra.mxu0 0
  %3815 = vmatprep.subr.bf16.mxu0 0
  %3816 = vmatpush1.bf16.msra.mxu0 0
  %3817 = vmatprep.mubr.bf16.mxu0 0
  %3818 = vmatmul.mubr.bf16.gmra.mrb[0].mxu0 %v3783
  %v3819 = vpop.f32.mrb[0].mxu0
  %v3820 = vadd.f32 0.0, %v3819
  %v3821 = vpop.f32.mrb[0].mxu0
  %v3822 = vadd.f32 0.0, %v3821
  %v3823 = vpop.f32.mrb[0].mxu0
  %v3824 = vadd.f32 0.0, %v3823
  %v3825 = vpop.f32.mrb[0].mxu0
  %v3826 = vadd.f32 0.0, %v3825
  %3827 = vdwg.mxu0
  %v3828 = vadd.f32 %v3726, %v3820
  %v3829 = vadd.f32 %v3727, %v3822
  %v3830 = vadd.f32 %v3728, %v3824
  %v3831 = vadd.f32 %v3729, %v3826
  %v3832 = vmax.bf16 %v3217, %v3218
  %v3833 = vmax.bf16 %v3223, %v3224
  %v3834 = vmax.bf16 %v3832, %v3833
  %s3835 = scalar_lea.vmem %s5, 384
  %v3836 = vld [vmem:[%s3835] sm:$0xff]
  %v3837 = vld [vmem:[%s3835 + $0x8] sm:$0xff]
  %v3838 = vld [vmem:[%s3835 + $0x10] sm:$0xff]
  %v3839 = vld [vmem:[%s3835 + $0x18] sm:$0xff]
  %v3840 = vld [vmem:[%s3835 + $0x20] sm:$0xff]
  %v3841 = vld [vmem:[%s3835 + $0x28] sm:$0xff]
  %v3842 = vld [vmem:[%s3835 + $0x30] sm:$0xff]
  %v3843 = vld [vmem:[%s3835 + $0x38] sm:$0xff]
  %v3852 = vunpack.c.l.b16 %v3836
  %v3853 = vunpack.c.h.b16 %v3836
  %v3854 = vunpack.c.l.b16 %v3837
  %v3855 = vunpack.c.h.b16 %v3837
  %v3856 = vunpack.c.l.b16 %v3838
  %v3857 = vunpack.c.h.b16 %v3838
  %v3858 = vunpack.c.l.b16 %v3839
  %v3859 = vunpack.c.h.b16 %v3839
  %v3860 = vunpack.c.l.b16 %v3840
  %v3861 = vunpack.c.h.b16 %v3840
  %v3862 = vunpack.c.l.b16 %v3841
  %v3863 = vunpack.c.h.b16 %v3841
  %v3864 = vunpack.c.l.b16 %v3842
  %v3865 = vunpack.c.h.b16 %v3842
  %v3866 = vunpack.c.l.b16 %v3843
  %v3867 = vunpack.c.h.b16 %v3843
  %v3868 = vpack.c.b16 %v3854, %v3852
  %v3869 = vpack.c.b16 %v3855, %v3853
  %v3870 = vpack.c.b16 %v3858, %v3856
  %v3871 = vpack.c.b16 %v3859, %v3857
  %v3872 = vpack.c.b16 %v3862, %v3860
  %v3873 = vpack.c.b16 %v3863, %v3861
  %v3874 = vpack.c.b16 %v3866, %v3864
  %v3875 = vpack.c.b16 %v3867, %v3865
  %v3885 = vsel %vm2437, %v3834, 0
  %3887 = vmatprep.subr.bf16.mxu0 %v3869
  %3888 = vmatpush1.bf16.msra.mxu0 %v3868
  %3889 = vmatprep.subr.bf16.mxu0 %v3871
  %3890 = vmatpush1.bf16.msra.mxu0 %v3870
  %3891 = vmatprep.subr.bf16.mxu0 %v3873
  %3892 = vmatpush1.bf16.msra.mxu0 %v3872
  %3893 = vmatprep.subr.bf16.mxu0 %v3875
  %3894 = vmatpush1.bf16.msra.mxu0 %v3874
  %3895 = vmatprep.subr.bf16.mxu0 0
  %3896 = vmatpush1.bf16.msra.mxu0 0
  %3897 = vmatprep.subr.bf16.mxu0 0
  %3898 = vmatpush1.bf16.msra.mxu0 0
  %3899 = vmatprep.subr.bf16.mxu0 0
  %3900 = vmatpush1.bf16.msra.mxu0 0
  %3901 = vmatprep.subr.bf16.mxu0 0
  %3902 = vmatpush1.bf16.msra.mxu0 0
  %3903 = vmatprep.subr.bf16.mxu0 0
  %3904 = vmatpush1.bf16.msra.mxu0 0
  %3905 = vmatprep.subr.bf16.mxu0 0
  %3906 = vmatpush1.bf16.msra.mxu0 0
  %3907 = vmatprep.subr.bf16.mxu0 0
  %3908 = vmatpush1.bf16.msra.mxu0 0
  %3909 = vmatprep.subr.bf16.mxu0 0
  %3910 = vmatpush1.bf16.msra.mxu0 0
  %3911 = vmatprep.subr.bf16.mxu0 0
  %3912 = vmatpush1.bf16.msra.mxu0 0
  %3913 = vmatprep.subr.bf16.mxu0 0
  %3914 = vmatpush1.bf16.msra.mxu0 0
  %3915 = vmatprep.subr.bf16.mxu0 0
  %3916 = vmatpush1.bf16.msra.mxu0 0
  %3917 = vmatprep.subr.bf16.mxu0 0
  %3918 = vmatpush1.bf16.msra.mxu0 0
  %3919 = vmatprep.mubr.bf16.mxu0 0
  %3920 = vmatmul.mubr.bf16.gmra.mrb[0].mxu0 %v3885
  %v3921 = vpop.f32.mrb[0].mxu0
  %v3922 = vadd.f32 0.0, %v3921
  %v3923 = vpop.f32.mrb[0].mxu0
  %v3924 = vadd.f32 0.0, %v3923
  %v3925 = vpop.f32.mrb[0].mxu0
  %v3926 = vadd.f32 0.0, %v3925
  %v3927 = vpop.f32.mrb[0].mxu0
  %v3928 = vadd.f32 0.0, %v3927
  %3929 = vdwg.mxu0
  %v3930 = vadd.f32 %v3828, %v3922
  %v3931 = vadd.f32 %v3829, %v3924
  %v3932 = vadd.f32 %v3830, %v3926
  %v3933 = vadd.f32 %v3831, %v3928
  %v3934 = vmax.bf16 %v3219, %v3220
  %v3935 = vmax.bf16 %v3225, %v3226
  %v3936 = vmax.bf16 %v3934, %v3935
  %s3937 = scalar_lea.vmem %s5, 448
  %v3938 = vld [vmem:[%s3937] sm:$0xff]
  %v3939 = vld [vmem:[%s3937 + $0x8] sm:$0xff]
  %v3940 = vld [vmem:[%s3937 + $0x10] sm:$0xff]
  %v3941 = vld [vmem:[%s3937 + $0x18] sm:$0xff]
  %v3942 = vld [vmem:[%s3937 + $0x20] sm:$0xff]
  %v3943 = vld [vmem:[%s3937 + $0x28] sm:$0xff]
  %v3944 = vld [vmem:[%s3937 + $0x30] sm:$0xff]
  %v3945 = vld [vmem:[%s3937 + $0x38] sm:$0xff]
  %v3954 = vunpack.c.l.b16 %v3938
  %v3955 = vunpack.c.h.b16 %v3938
  %v3956 = vunpack.c.l.b16 %v3939
  %v3957 = vunpack.c.h.b16 %v3939
  %v3958 = vunpack.c.l.b16 %v3940
  %v3959 = vunpack.c.h.b16 %v3940
  %v3960 = vunpack.c.l.b16 %v3941
  %v3961 = vunpack.c.h.b16 %v3941
  %v3962 = vunpack.c.l.b16 %v3942
  %v3963 = vunpack.c.h.b16 %v3942
  %v3964 = vunpack.c.l.b16 %v3943
  %v3965 = vunpack.c.h.b16 %v3943
  %v3966 = vunpack.c.l.b16 %v3944
  %v3967 = vunpack.c.h.b16 %v3944
  %v3968 = vunpack.c.l.b16 %v3945
  %v3969 = vunpack.c.h.b16 %v3945
  %v3970 = vpack.c.b16 %v3956, %v3954
  %v3971 = vpack.c.b16 %v3957, %v3955
  %v3972 = vpack.c.b16 %v3960, %v3958
  %v3973 = vpack.c.b16 %v3961, %v3959
  %v3974 = vpack.c.b16 %v3964, %v3962
  %v3975 = vpack.c.b16 %v3965, %v3963
  %v3976 = vpack.c.b16 %v3968, %v3966
  %v3977 = vpack.c.b16 %v3969, %v3967
  %v3987 = vsel %vm2437, %v3936, 0
  %3989 = vmatprep.subr.bf16.mxu0 %v3971
  %3990 = vmatpush1.bf16.msra.mxu0 %v3970
  %3991 = vmatprep.subr.bf16.mxu0 %v3973
  %3992 = vmatpush1.bf16.msra.mxu0 %v3972
  %3993 = vmatprep.subr.bf16.mxu0 %v3975
  %3994 = vmatpush1.bf16.msra.mxu0 %v3974
  %3995 = vmatprep.subr.bf16.mxu0 %v3977
  %3996 = vmatpush1.bf16.msra.mxu0 %v3976
  %3997 = vmatprep.subr.bf16.mxu0 0
  %3998 = vmatpush1.bf16.msra.mxu0 0
  %3999 = vmatprep.subr.bf16.mxu0 0
  %4000 = vmatpush1.bf16.msra.mxu0 0
  %4001 = vmatprep.subr.bf16.mxu0 0
  %4002 = vmatpush1.bf16.msra.mxu0 0
  %4003 = vmatprep.subr.bf16.mxu0 0
  %4004 = vmatpush1.bf16.msra.mxu0 0
  %4005 = vmatprep.subr.bf16.mxu0 0
  %4006 = vmatpush1.bf16.msra.mxu0 0
  %4007 = vmatprep.subr.bf16.mxu0 0
  %4008 = vmatpush1.bf16.msra.mxu0 0
  %4009 = vmatprep.subr.bf16.mxu0 0
  %4010 = vmatpush1.bf16.msra.mxu0 0
  %4011 = vmatprep.subr.bf16.mxu0 0
  %4012 = vmatpush1.bf16.msra.mxu0 0
  %4013 = vmatprep.subr.bf16.mxu0 0
  %4014 = vmatpush1.bf16.msra.mxu0 0
  %4015 = vmatprep.subr.bf16.mxu0 0
  %4016 = vmatpush1.bf16.msra.mxu0 0
  %4017 = vmatprep.subr.bf16.mxu0 0
  %4018 = vmatpush1.bf16.msra.mxu0 0
  %4019 = vmatprep.subr.bf16.mxu0 0
  %4020 = vmatpush1.bf16.msra.mxu0 0
  %4021 = vmatprep.mubr.bf16.mxu0 0
  %4022 = vmatmul.mubr.bf16.gmra.mrb[0].mxu0 %v3987
  %v4023 = vpop.f32.mrb[0].mxu0
  %v4024 = vadd.f32 0.0, %v4023
  %v4025 = vpop.f32.mrb[0].mxu0
  %v4026 = vadd.f32 0.0, %v4025
  %v4027 = vpop.f32.mrb[0].mxu0
  %v4028 = vadd.f32 0.0, %v4027
  %v4029 = vpop.f32.mrb[0].mxu0
  %v4030 = vadd.f32 0.0, %v4029
  %4031 = vdwg.mxu0
  %v4032 = vadd.f32 %v3930, %v4024
  %v4033 = vadd.f32 %v3931, %v4026
  %v4034 = vadd.f32 %v3932, %v4028
  %v4035 = vadd.f32 %v3933, %v4030
  %v4036 = vmax.bf16 %v3221, %v3222
  %v4037 = vmax.bf16 %v3227, %v3228
  %v4038 = vmax.bf16 %v4036, %v4037
  %s4039 = scalar_lea.vmem %s5, 512
  %v4040 = vld [vmem:[%s4039] sm:$0xff]
  %v4041 = vld [vmem:[%s4039 + $0x8] sm:$0xff]
  %v4042 = vld [vmem:[%s4039 + $0x10] sm:$0xff]
  %v4043 = vld [vmem:[%s4039 + $0x18] sm:$0xff]
  %v4044 = vld [vmem:[%s4039 + $0x20] sm:$0xff]
  %v4045 = vld [vmem:[%s4039 + $0x28] sm:$0xff]
  %v4046 = vld [vmem:[%s4039 + $0x30] sm:$0xff]
  %v4047 = vld [vmem:[%s4039 + $0x38] sm:$0xff]
  %v4056 = vunpack.c.l.b16 %v4040
  %v4057 = vunpack.c.h.b16 %v4040
  %v4058 = vunpack.c.l.b16 %v4041
  %v4059 = vunpack.c.h.b16 %v4041
  %v4060 = vunpack.c.l.b16 %v4042
  %v4061 = vunpack.c.h.b16 %v4042
  %v4062 = vunpack.c.l.b16 %v4043
  %v4063 = vunpack.c.h.b16 %v4043
  %v4064 = vunpack.c.l.b16 %v4044
  %v4065 = vunpack.c.h.b16 %v4044
  %v4066 = vunpack.c.l.b16 %v4045
  %v4067 = vunpack.c.h.b16 %v4045
  %v4068 = vunpack.c.l.b16 %v4046
  %v4069 = vunpack.c.h.b16 %v4046
  %v4070 = vunpack.c.l.b16 %v4047
  %v4071 = vunpack.c.h.b16 %v4047
  %v4072 = vpack.c.b16 %v4058, %v4056
  %v4073 = vpack.c.b16 %v4059, %v4057
  %v4074 = vpack.c.b16 %v4062, %v4060
  %v4075 = vpack.c.b16 %v4063, %v4061
  %v4076 = vpack.c.b16 %v4066, %v4064
  %v4077 = vpack.c.b16 %v4067, %v4065
  %v4078 = vpack.c.b16 %v4070, %v4068
  %v4079 = vpack.c.b16 %v4071, %v4069
  %v4089 = vsel %vm2437, %v4038, 0
  %4091 = vmatprep.subr.bf16.mxu0 %v4073
  %4092 = vmatpush1.bf16.msra.mxu0 %v4072
  %4093 = vmatprep.subr.bf16.mxu0 %v4075
  %4094 = vmatpush1.bf16.msra.mxu0 %v4074
  %4095 = vmatprep.subr.bf16.mxu0 %v4077
  %4096 = vmatpush1.bf16.msra.mxu0 %v4076
  %4097 = vmatprep.subr.bf16.mxu0 %v4079
  %4098 = vmatpush1.bf16.msra.mxu0 %v4078
  %4099 = vmatprep.subr.bf16.mxu0 0
  %4100 = vmatpush1.bf16.msra.mxu0 0
  %4101 = vmatprep.subr.bf16.mxu0 0
  %4102 = vmatpush1.bf16.msra.mxu0 0
  %4103 = vmatprep.subr.bf16.mxu0 0
  %4104 = vmatpush1.bf16.msra.mxu0 0
  %4105 = vmatprep.subr.bf16.mxu0 0
  %4106 = vmatpush1.bf16.msra.mxu0 0
  %4107 = vmatprep.subr.bf16.mxu0 0
  %4108 = vmatpush1.bf16.msra.mxu0 0
  %4109 = vmatprep.subr.bf16.mxu0 0
  %4110 = vmatpush1.bf16.msra.mxu0 0
  %4111 = vmatprep.subr.bf16.mxu0 0
  %4112 = vmatpush1.bf16.msra.mxu0 0
  %4113 = vmatprep.subr.bf16.mxu0 0
  %4114 = vmatpush1.bf16.msra.mxu0 0
  %4115 = vmatprep.subr.bf16.mxu0 0
  %4116 = vmatpush1.bf16.msra.mxu0 0
  %4117 = vmatprep.subr.bf16.mxu0 0
  %4118 = vmatpush1.bf16.msra.mxu0 0
  %4119 = vmatprep.subr.bf16.mxu0 0
  %4120 = vmatpush1.bf16.msra.mxu0 0
  %4121 = vmatprep.subr.bf16.mxu0 0
  %4122 = vmatpush1.bf16.msra.mxu0 0
  %4123 = vmatprep.mubr.bf16.mxu0 0
  %4124 = vmatmul.mubr.bf16.gmra.mrb[0].mxu0 %v4089
  %v4125 = vpop.f32.mrb[0].mxu0
  %v4126 = vadd.f32 0.0, %v4125
  %v4127 = vpop.f32.mrb[0].mxu0
  %v4128 = vadd.f32 0.0, %v4127
  %v4129 = vpop.f32.mrb[0].mxu0
  %v4130 = vadd.f32 0.0, %v4129
  %v4131 = vpop.f32.mrb[0].mxu0
  %v4132 = vadd.f32 0.0, %v4131
  %4133 = vdwg.mxu0
  %v4134 = vadd.f32 %v4032, %v4126
  %v4135 = vadd.f32 %v4033, %v4128
  %v4136 = vadd.f32 %v4034, %v4130
  %v4137 = vadd.f32 %v4035, %v4132
  %v4138 = vld [vmem:[%s6] sm:$0x3]
  %v4140 = vlaneseq
  %v4141 = vshrl.u32 %v4140, 7
  %v4142 = vsub.s32 0, %v4141
  %v4143 = vrot.slane %v4138, %v4142
  %v4144 = vlaneseq
  %v4145 = vshrl.u32 %v4144, 7
  %v4146 = vsub.s32 1, %v4145
  %v4147 = vrot.slane %v4138, %v4146
  %v4150 = vadd.f32 %v4134, %v4143
  %v4151 = vadd.f32 %v4135, %v4147
  %v4152 = vadd.f32 %v4136, %v4143
  %v4153 = vadd.f32 %v4137, %v4147
  %v4154 = vmax.f32 %v4150, 0.0
  %v4155 = vmax.f32 %v4151, 0.0
  %v4156 = vmax.f32 %v4152, 0.0
  %v4157 = vmax.f32 %v4153, 0.0
  %4158 = vst [vmem:[%s7] sm:$0xff] %v4154
  %4159 = vst [vmem:[%s7 + $0x8] sm:$0xff] %v4155
  %4160 = vst [vmem:[%s7 + $0x10] sm:$0xff] %v4156
  %4161 = vst [vmem:[%s7 + $0x18] sm:$0xff] %v4157
  // Predicated region
  $region30: #{encoding_forward.1} parent=0 // pred_check
    _
  $region31: #{encoding_forward.1} parent=0 // pred_check_branch
    %4163 = sbr.rel (0) target = $region33
  $region32: #{encoding_forward.1} parent=0 // pred_region
    _
  $region33: #{encoding_forward.1} parent=0 // pred_fallthru
    _
  // Predicated region
  $region34: #{encoding_forward.1} parent=0 // pred_check
    _
  $region35: #{encoding_forward.1} parent=0 // pred_check_branch
    %4165 = sbr.rel (0) target = $region37
  $region36: #{encoding_forward.1} parent=0 // pred_region
    _
  $region37: #{encoding_forward.1} parent=0 // pred_fallthru
    _

</llo_original>
